<compile_context>
chip_gen: v5e
topology: v5e:2x2
jax: 0.10.0
libtpu: 0.0.40
codegen_flags: <defaults>
</compile_context>

<pallas_src>
import math
from functools import partial

import jax
import jax.numpy as jnp
from jax.experimental import pallas as pl
from jax.experimental.pallas import tpu as pltpu


# ----------------------------------------------------------------------------
# In-kernel helpers
# ----------------------------------------------------------------------------

def _layernorm(x, g, b, eps=1e-5):
    mu = jnp.mean(x, axis=-1, keepdims=True)
    xc = x - mu
    var = jnp.mean(xc * xc, axis=-1, keepdims=True)
    return xc * jax.lax.rsqrt(var + eps) * g + b


# ----------------------------------------------------------------------------
# Kernel 1: fused CNN encoder (3 conv+relu+pool stages) + positional-encoding add
# ----------------------------------------------------------------------------

_OFF = 8  # aligned sublane offset where the activation is staged in the padded scratch


def _encoder_kernel(x_ref, w1_ref, b1_ref, w2_ref, b2_ref, w3_ref, b3_ref,
                    pe_ref, o_ref, p1_ref, p2_ref, p3_ref, *, K):
    """One batch element per grid step: conv1->pool->conv2->pool->conv3->pool (+PE)."""
    pad = K // 2

    def conv_relu_pool(act, p_ref, w_ref, b_ref):
        Lc = act.shape[0]
        C = p_ref.shape[1]
        C_out = w_ref.shape[2]
        # Zero only the halo rows (two aligned 8-row blocks); the interior is fully
        # overwritten every grid step, so no full-buffer fill is needed.
        p_ref[0:_OFF, :] = jnp.zeros((_OFF, C), jnp.float32)
        p_ref[_OFF + Lc:_OFF + Lc + _OFF, :] = jnp.zeros((_OFF, C), jnp.float32)
        p_ref[_OFF:_OFF + Lc, :] = act
        # TODO(synk): fold the K taps into one (Lc, K*C_in) x (K*C_in, C_out) matmul
        # (im2col) for higher MXU contraction utilization on larger configs.
        acc = jnp.zeros((Lc, C_out), jnp.float32)
        for kk in range(K):                       # K is tiny & static -> unrolled taps
            start = _OFF - pad + kk
            acc = acc + jnp.dot(p_ref[start:start + Lc, :], w_ref[kk],
                                preferred_element_type=jnp.float32)
        acc = jnp.maximum(acc + b_ref[...], 0.0)
        # MaxPool1d(kernel=2, stride=2) along the length axis (Lc is even).
        return jnp.max(acc.reshape(Lc // 2, 2, C_out), axis=1)

    h = conv_relu_pool(x_ref[0], p1_ref, w1_ref, b1_ref)      # (L/2, 128)
    h = conv_relu_pool(h, p2_ref, w2_ref, b2_ref)             # (L/4, 96)
    h = conv_relu_pool(h, p3_ref, w3_ref, b3_ref)             # (L/8, d_model)
    # PositionalEncoding quirk of the reference: pe is indexed by the *batch* index
    # and broadcast over the (downsampled) length axis.
    o_ref[0] = h + pe_ref[0]


def cnn_encoder_pe(x, params):
    """x: (B, L, C_in) -> (B, L//8, d_model), with PE already added."""
    B, L, C_in = x.shape
    w1, w2, w3 = params['conv1_w'], params['conv2_w'], params['conv3_w']
    b1, b2, b3 = params['conv1_b'], params['conv2_b'], params['conv3_b']
    K = w1.shape[0]
    D = w3.shape[2]
    S = L // 8
    return pl.pallas_call(
        partial(_encoder_kernel, K=K),
        out_shape=jax.ShapeDtypeStruct((B, S, D), jnp.float32),
        grid=(B,),
        in_specs=[
            pl.BlockSpec((1, L, C_in), lambda b: (b, 0, 0)),
            pl.BlockSpec(w1.shape, lambda b: (0, 0, 0)),
            pl.BlockSpec(b1.shape, lambda b: (0, 0)),
            pl.BlockSpec(w2.shape, lambda b: (0, 0, 0)),
            pl.BlockSpec(b2.shape, lambda b: (0, 0)),
            pl.BlockSpec(w3.shape, lambda b: (0, 0, 0)),
            pl.BlockSpec(b3.shape, lambda b: (0, 0)),
            pl.BlockSpec((1, 1, D), lambda b: (b, 0, 0)),
        ],
        out_specs=pl.BlockSpec((1, S, D), lambda b: (b, 0, 0)),
        scratch_shapes=[
            pltpu.VMEM((L + 2 * _OFF, C_in), jnp.float32),
            pltpu.VMEM((L // 2 + 2 * _OFF, w1.shape[2]), jnp.float32),
            pltpu.VMEM((L // 4 + 2 * _OFF, w2.shape[2]), jnp.float32),
        ],
        compiler_params=pltpu.CompilerParams(dimension_semantics=("parallel",)),
    )(x, w1, b1, w2, b2, w3, b3, params['pe'])


# ----------------------------------------------------------------------------
# Kernel 2: the whole TransformerEncoder stack + self.out + GlobalMaxPooling1D
# ----------------------------------------------------------------------------

def _stack_kernel(x_ref, wq_ref, bq_ref, wk_ref, bk_ref, wv_ref, bv_ref,
                  wo_ref, bo_ref, g1_ref, be1_ref, w1_ref, b1_ref,
                  w2_ref, b2_ref, g2_ref, be2_ref, wout_ref, bout_ref,
                  o_ref, act_ref, *, Sq, nhead):
    """grid=(num_layers,). Activation (M, D) = (Sq*Nb, D) is carried across layers in
    act_ref (VMEM scratch). Sq = attention sequence (= original batch B), Nb = attention
    batch (= downsampled length S). Post-norm, ReLU, no dropout (inference)."""
    layer = pl.program_id(0)

    @pl.when(layer == 0)
    def _():
        act_ref[...] = x_ref[...]

    x = act_ref[...]                               # (M, D) f32 carry
    M, D = x.shape
    Nb = M // Sq
    H = nhead
    dh = D // H
    scale = 1.0 / math.sqrt(dh)

    # 0/1 head-segment matrices built in-kernel from 2-D iotas (no extra operands/DMA).
    d_idx = jax.lax.broadcasted_iota(jnp.int32, (D, H), 0)
    h_idx = jax.lax.broadcasted_iota(jnp.int32, (D, H), 1)
    seg = ((d_idx >= h_idx * dh) & (d_idx < (h_idx + 1) * dh)).astype(jnp.float32)
    d_idx_t = jax.lax.broadcasted_iota(jnp.int32, (H, D), 1)
    h_idx_t = jax.lax.broadcasted_iota(jnp.int32, (H, D), 0)
    segt = ((d_idx_t >= h_idx_t * dh) & (d_idx_t < (h_idx_t + 1) * dh)).astype(jnp.float32)

    # Q/K/V projections over all M rows at once; bf16 weights, f32 accumulation.
    xb = x.astype(jnp.bfloat16)
    qf = (jnp.dot(xb, wq_ref[0], preferred_element_type=jnp.float32) + bq_ref[0]) * scale
    kf = jnp.dot(xb, wk_ref[0], preferred_element_type=jnp.float32) + bk_ref[0]
    vf = jnp.dot(xb, wv_ref[0], preferred_element_type=jnp.float32) + bv_ref[0]

    # Row blocks per attention-sequence position i (aligned sublane slices, Nb = 8k).
    q = [qf[i * Nb:(i + 1) * Nb, :] for i in range(Sq)]
    k = [kf[i * Nb:(i + 1) * Nb, :] for i in range(Sq)]
    v = [vf[i * Nb:(i + 1) * Nb, :] for i in range(Sq)]

    attn_blocks = []
    for i in range(Sq):
        # Per-head scores: VPU elementwise product + (D,H) segmented lane reduction.
        s = [jnp.dot(q[i] * k[j], seg, preferred_element_type=jnp.float32)
             for j in range(Sq)]                               # each (Nb, H)
        m = s[0]
        for j in range(1, Sq):
            m = jnp.maximum(m, s[j])
        e = [jnp.exp(s[j] - m) for j in range(Sq)]
        den = e[0]
        for j in range(1, Sq):
            den = den + e[j]
        inv = pl.reciprocal(den, approx=True)                  # softmax denom on the EUP
        attn_i = jnp.zeros((Nb, D), jnp.float32)
        for j in range(Sq):
            pw = jnp.dot(e[j] * inv, segt, preferred_element_type=jnp.float32)  # (Nb, D)
            attn_i = attn_i + pw * v[j]
        attn_blocks.append(attn_i)
    attn = jnp.concatenate(attn_blocks, axis=0)                # (M, D)

    # out_proj -> +residual -> LN1 -> FFN(ReLU) -> +residual -> LN2, batched over all M
    # rows so the FLOP-dominant matmuls hit the MXU once instead of Sq times.
    a = jnp.dot(attn.astype(jnp.bfloat16), wo_ref[0],
                preferred_element_type=jnp.float32) + bo_ref[0]
    h1 = _layernorm(x + a, g1_ref[0], be1_ref[0])
    f = jnp.dot(h1.astype(jnp.bfloat16), w1_ref[0],
                preferred_element_type=jnp.float32) + b1_ref[0]
    f = jnp.maximum(f, 0.0)
    f = jnp.dot(f.astype(jnp.bfloat16), w2_ref[0],
                preferred_element_type=jnp.float32) + b2_ref[0]
    y = _layernorm(h1 + f, g2_ref[0], be2_ref[0])
    act_ref[...] = y                                           # carry to next layer

    @pl.when(layer == pl.num_programs(0) - 1)
    def _():
        # self.out (Linear D->O) + GlobalMaxPooling1D over the Nb (= length) axis;
        # assembled in-register and written with a single store.
        yv = act_ref[...]
        z = jnp.dot(yv.astype(jnp.bfloat16), wout_ref[...],
                    preferred_element_type=jnp.float32) + bout_ref[...]   # (M, O)
        parts = [jnp.max(z[i * Nb:(i + 1) * Nb, :], axis=0, keepdims=True)
                 for i in range(Sq)]
        o_ref[...] = jnp.concatenate(parts, axis=0)            # (Sq, O)


def transformer_stack(x2d, params, *, Sq, nhead):
    M, D = x2d.shape
    lw = params['layers']
    NL = lw['wq'].shape[0]
    O = params['out_b'].shape[-1]

    stacked_names = ['wq', 'bq', 'wk', 'bk', 'wv', 'bv', 'wo', 'bo',
                     'g1', 'be1', 'w1', 'b1', 'w2', 'b2', 'g2', 'be2']
    stacked_ops = [lw[n] for n in stacked_names]

    def stacked_spec(a):      # (num_layers, r, c) -> one layer slab per grid step
        return pl.BlockSpec((1,) + a.shape[1:], lambda l: (l, 0, 0))

    def const2d_spec(a):      # resident across all layers
        return pl.BlockSpec(a.shape, lambda l: (0, 0))

    in_specs = ([const2d_spec(x2d)]
                + [stacked_spec(a) for a in stacked_ops]
                + [const2d_spec(params['out_w_t']), const2d_spec(params['out_b'])])

    return pl.pallas_call(
        partial(_stack_kernel, Sq=Sq, nhead=nhead),
        out_shape=jax.ShapeDtypeStruct((Sq, O), jnp.float32),
        grid=(NL,),
        in_specs=in_specs,
        out_specs=pl.BlockSpec((Sq, O), lambda l: (0, 0)),
        scratch_shapes=[pltpu.VMEM((M, D), jnp.float32)],       # layer-to-layer carry
        compiler_params=pltpu.CompilerParams(
            dimension_semantics=("arbitrary",),                  # layers are sequential
            vmem_limit_bytes=32 * 1024 * 1024),
    )(x2d, *stacked_ops, params['out_w_t'], params['out_b'])


# ----------------------------------------------------------------------------
# Full forward pass
# ----------------------------------------------------------------------------

def transformer_model_forward(params, x, *, nhead):
    """x: (B, L, input_dim) channels-last -> (B, output_dim)."""
    h = cnn_encoder_pe(x, params)              # (B, S, d_model), PE already added
    B, S, D = h.shape
    h2 = h.reshape(B * S, D)                   # contiguous reshape, rows grouped by B
    # TODO(synk): for large configs, add a 'parallel' grid axis over the attention-batch
    # (length) dimension so the stack shards across v7x's 2 TensorCores, and tile the
    # FFN over dim_ff with an f32 accumulator to respect v7x's 64 MiB VMEM.
    return transformer_stack(h2, params, Sq=B, nhead=nhead)


# ----------------------------------------------------------------------------
# Deterministic parameter construction
# ----------------------------------------------------------------------------

def init_params(key, *, input_dim, d_model, nhead, num_layers, output_dim,
                kernel_size, dim_ff, max_len=32):
    keys = jax.random.split(key, 8 + 12 * num_layers)
    ki = iter(keys)

    def dense(k, shape, fan_in):
        bound = 1.0 / math.sqrt(fan_in)
        return jax.random.uniform(k, shape, jnp.float32, -bound, bound)

    params = {}
    # CNN encoder conv weights stored as (K, C_in, C_out), kept in f32 (tiny).
    chans = [input_dim, 128, 96, d_model]
    for idx in range(3):
        cin, cout = chans[idx], chans[idx + 1]
        params[f'conv{idx + 1}_w'] = dense(next(ki), (kernel_size, cin, cout),
                                           cin * kernel_size)
        params[f'conv{idx + 1}_b'] = dense(next(ki), (1, cout), cin * kernel_size)

    # PositionalEncoding buffer, exactly as the reference (d_model even branch).
    pos = jnp.arange(max_len, dtype=jnp.float32)[:, None]
    div = jnp.exp(jnp.arange(0, d_model, 2, dtype=jnp.float32)
                  * (-math.log(10000.0) / d_model))
    pe = jnp.zeros((max_len, d_model), jnp.float32)
    pe = pe.at[:, 0::2].set(jnp.sin(pos * div))
    pe = pe.at[:, 1::2].set(jnp.cos(pos * div))
    params['pe'] = pe[:, None, :]                       # (max_len, 1, d_model)

    # Transformer layer weights: stacked along a leading num_layers axis; matmul
    # weights in bf16 (f32 accumulation in-kernel), biases / LN params in f32.
    acc = {n: [] for n in ['wq', 'bq', 'wk', 'bk', 'wv', 'bv', 'wo', 'bo',
                           'g1', 'be1', 'w1', 'b1', 'w2', 'b2', 'g2', 'be2']}
    bf16 = jnp.bfloat16
    for _ in range(num_layers):
        acc['wq'].append(dense(next(ki), (d_model, d_model), d_model).astype(bf16))
        acc['bq'].append(dense(next(ki), (1, d_model), d_model))
        acc['wk'].append(dense(next(ki), (d_model, d_model), d_model).astype(bf16))
        acc['bk'].append(dense(next(ki), (1, d_model), d_model))
        acc['wv'].append(dense(next(ki), (d_model, d_model), d_model).astype(bf16))
        acc['bv'].append(dense(next(ki), (1, d_model), d_model))
        acc['wo'].append(dense(next(ki), (d_model, d_model), d_model).astype(bf16))
        acc['bo'].append(dense(next(ki), (1, d_model), d_model))
        acc['g1'].append(jnp.ones((1, d_model), jnp.float32))
        acc['be1'].append(jnp.zeros((1, d_model), jnp.float32))
        acc['w1'].append(dense(next(ki), (d_model, dim_ff), d_model).astype(bf16))
        acc['b1'].append(dense(next(ki), (1, dim_ff), d_model))
        acc['w2'].append(dense(next(ki), (dim_ff, d_model), dim_ff).astype(bf16))
        acc['b2'].append(dense(next(ki), (1, d_model), dim_ff))
        acc['g2'].append(jnp.ones((1, d_model), jnp.float32))
        acc['be2'].append(jnp.zeros((1, d_model), jnp.float32))
    params['layers'] = {n: jnp.stack(vs, axis=0) for n, vs in acc.items()}

    params['out_w_t'] = dense(next(ki), (d_model, output_dim), d_model).astype(bf16)
    params['out_b'] = dense(next(ki), (1, output_dim), d_model)
    return params


# ----------------------------------------------------------------------------
# Main
# ----------------------------------------------------------------------------

if __name__ == "__main__":
    # Small config consistent with the module: encoder out_channels == d_model,
    # seq length L divisible by 8 (three MaxPool1d(2,2) stages), B <= max_len.
    B, L, input_dim = 2, 64, 4
    d_model, nhead, num_layers = 32, 4, 2
    output_dim = 8
    kernel_size = 3
    dim_ff = 2048  # nn.TransformerEncoderLayer default dim_feedforward

    key = jax.random.PRNGKey(0)
    kp, kx = jax.random.split(key)
    params = init_params(kp, input_dim=input_dim, d_model=d_model, nhead=nhead,
                         num_layers=num_layers, output_dim=output_dim,
                         kernel_size=kernel_size, dim_ff=dim_ff, max_len=32)

    x = jax.random.normal(kx, (B, L, input_dim), jnp.float32)

    fwd = jax.jit(partial(transformer_model_forward, nhead=nhead))
    y = jax.block_until_ready(fwd(params, x))

    assert y.shape == (B, output_dim), y.shape
    assert bool(jnp.all(jnp.isfinite(y)))
    print("KERNEL_OK")
</pallas_src>

<mosaic_0001>
module attributes {stable_mosaic.version = 11 : i64} {
  func.func @_encoder_kernel(%arg0: i32, %arg1: memref<1x64x4xf32, #tpu.memory_space<vmem>>, %arg2: memref<3x4x128xf32, #tpu.memory_space<vmem>>, %arg3: memref<1x128xf32, #tpu.memory_space<vmem>>, %arg4: memref<3x128x96xf32, #tpu.memory_space<vmem>>, %arg5: memref<1x96xf32, #tpu.memory_space<vmem>>, %arg6: memref<3x96x32xf32, #tpu.memory_space<vmem>>, %arg7: memref<1x32xf32, #tpu.memory_space<vmem>>, %arg8: memref<1x1x32xf32, #tpu.memory_space<vmem>>, %arg9: memref<1x8x32xf32, #tpu.memory_space<vmem>>, %arg10: memref<80x4xf32, #tpu.memory_space<vmem>>, %arg11: memref<48x128xf32, #tpu.memory_space<vmem>>, %arg12: memref<32x96xf32, #tpu.memory_space<vmem>>) attributes {dimension_semantics = [#tpu.dimension_semantics<parallel>], iteration_bounds = array<i64: 2>, scalar_prefetch = 0 : i64, scratch_operands = 3 : i64, tpu.core_type = #tpu.core_type<tc>, window_params = [{transform_indices = @transform_0, window_bounds = array<i64: 1, 64, 4>}, {pipeline_mode = #tpu.pipeline_mode<synchronous>, transform_indices = @transform_1, window_bounds = array<i64: 3, 4, 128>}, {pipeline_mode = #tpu.pipeline_mode<synchronous>, transform_indices = @transform_2, window_bounds = array<i64: 1, 128>}, {pipeline_mode = #tpu.pipeline_mode<synchronous>, transform_indices = @transform_3, window_bounds = array<i64: 3, 128, 96>}, {pipeline_mode = #tpu.pipeline_mode<synchronous>, transform_indices = @transform_4, window_bounds = array<i64: 1, 96>}, {pipeline_mode = #tpu.pipeline_mode<synchronous>, transform_indices = @transform_5, window_bounds = array<i64: 3, 96, 32>}, {pipeline_mode = #tpu.pipeline_mode<synchronous>, transform_indices = @transform_6, window_bounds = array<i64: 1, 32>}, {transform_indices = @transform_7, window_bounds = array<i64: 1, 1, 32>}, {transform_indices = @transform_8, window_bounds = array<i64: 1, 8, 32>}]} {
    %c0 = arith.constant 0 : index
    %c0_0 = arith.constant 0 : index
    %c0_1 = arith.constant 0 : index
    %0 = vector.load %arg1[%c0, %c0_0, %c0_1] : memref<1x64x4xf32, #tpu.memory_space<vmem>>, vector<1x64x4xf32>
    %1 = vector.shape_cast %0 : vector<1x64x4xf32> to vector<64x4xf32>
    %cst = arith.constant 0.000000e+00 : f32
    %2 = vector.broadcast %cst : f32 to vector<8x4xf32>
    %c0_2 = arith.constant 0 : index
    %c0_3 = arith.constant 0 : index
    %3 = vector.load %arg10[%c0_2, %c0_3] : memref<80x4xf32, #tpu.memory_space<vmem>>, vector<8x4xf32>
    tpu.vector_store %arg10[%c0_2, %c0_3], %2 {strides = array<i32>} : memref<80x4xf32, #tpu.memory_space<vmem>>, vector<8x4xf32>,
    %cst_4 = arith.constant 0.000000e+00 : f32
    %4 = vector.broadcast %cst_4 : f32 to vector<8x4xf32>
    %c72 = arith.constant 72 : index
    %c0_5 = arith.constant 0 : index
    %5 = vector.load %arg10[%c72, %c0_5] : memref<80x4xf32, #tpu.memory_space<vmem>>, vector<8x4xf32>
    tpu.vector_store %arg10[%c72, %c0_5], %4 {strides = array<i32>} : memref<80x4xf32, #tpu.memory_space<vmem>>, vector<8x4xf32>,
    %c8 = arith.constant 8 : index
    %c0_6 = arith.constant 0 : index
    %6 = vector.load %arg10[%c8, %c0_6] : memref<80x4xf32, #tpu.memory_space<vmem>>, vector<64x4xf32>
    tpu.vector_store %arg10[%c8, %c0_6], %1 {strides = array<i32>} : memref<80x4xf32, #tpu.memory_space<vmem>>, vector<64x4xf32>,
    %cst_7 = arith.constant 0.000000e+00 : f32
    %7 = vector.broadcast %cst_7 : f32 to vector<64x128xf32>
    %c7 = arith.constant 7 : index
    %c0_8 = arith.constant 0 : index
    %8 = vector.load %arg10[%c7, %c0_8] : memref<80x4xf32, #tpu.memory_space<vmem>>, vector<64x4xf32>
    %c0_9 = arith.constant 0 : index
    %c0_10 = arith.constant 0 : index
    %c0_11 = arith.constant 0 : index
    %9 = vector.load %arg2[%c0_9, %c0_10, %c0_11] : memref<3x4x128xf32, #tpu.memory_space<vmem>>, vector<1x4x128xf32>
    %10 = vector.shape_cast %9 : vector<1x4x128xf32> to vector<4x128xf32>
    %cst_12 = arith.constant dense<0.000000e+00> : vector<64x128xf32>
    %11 = tpu.matmul %8, %10, %cst_12 {dimension_numbers = #tpu.dot_dimension_numbers<[1], [0], [0], [1], [0, 0, 1, 1], [], []>} : vector<64x4xf32>, vector<4x128xf32>, vector<64x128xf32> -> vector<64x128xf32>
    %12 = arith.addf %7, %11 : vector<64x128xf32>
    %c8_13 = arith.constant 8 : index
    %c0_14 = arith.constant 0 : index
    %13 = vector.load %arg10[%c8_13, %c0_14] : memref<80x4xf32, #tpu.memory_space<vmem>>, vector<64x4xf32>
    %c1 = arith.constant 1 : index
    %c0_15 = arith.constant 0 : index
    %c0_16 = arith.constant 0 : index
    %14 = vector.load %arg2[%c1, %c0_15, %c0_16] : memref<3x4x128xf32, #tpu.memory_space<vmem>>, vector<1x4x128xf32>
    %15 = vector.shape_cast %14 : vector<1x4x128xf32> to vector<4x128xf32>
    %cst_17 = arith.constant dense<0.000000e+00> : vector<64x128xf32>
    %16 = tpu.matmul %13, %15, %cst_17 {dimension_numbers = #tpu.dot_dimension_numbers<[1], [0], [0], [1], [0, 0, 1, 1], [], []>} : vector<64x4xf32>, vector<4x128xf32>, vector<64x128xf32> -> vector<64x128xf32>
    %17 = arith.addf %12, %16 : vector<64x128xf32>
    %c9 = arith.constant 9 : index
    %c0_18 = arith.constant 0 : index
    %18 = vector.load %arg10[%c9, %c0_18] : memref<80x4xf32, #tpu.memory_space<vmem>>, vector<64x4xf32>
    %c2 = arith.constant 2 : index
    %c0_19 = arith.constant 0 : index
    %c0_20 = arith.constant 0 : index
    %19 = vector.load %arg2[%c2, %c0_19, %c0_20] : memref<3x4x128xf32, #tpu.memory_space<vmem>>, vector<1x4x128xf32>
    %20 = vector.shape_cast %19 : vector<1x4x128xf32> to vector<4x128xf32>
    %cst_21 = arith.constant dense<0.000000e+00> : vector<64x128xf32>
    %21 = tpu.matmul %18, %20, %cst_21 {dimension_numbers = #tpu.dot_dimension_numbers<[1], [0], [0], [1], [0, 0, 1, 1], [], []>} : vector<64x4xf32>, vector<4x128xf32>, vector<64x128xf32> -> vector<64x128xf32>
    %22 = arith.addf %17, %21 : vector<64x128xf32>
    %c0_22 = arith.constant 0 : index
    %c0_23 = arith.constant 0 : index
    %23 = vector.load %arg3[%c0_22, %c0_23] : memref<1x128xf32, #tpu.memory_space<vmem>>, vector<1x128xf32>
    %24 = vector.broadcast %23 : vector<1x128xf32> to vector<64x128xf32>
    %25 = arith.addf %22, %24 : vector<64x128xf32>
    %cst_24 = arith.constant 0.000000e+00 : f32
    %26 = vector.broadcast %cst_24 : f32 to vector<64x128xf32>
    %27 = arith.maximumf %25, %26 : vector<64x128xf32>
    %28 = vector.shape_cast %27 : vector<64x128xf32> to vector<32x2x128xf32>
    %cst_25 = arith.constant dense<0xFF800000> : vector<32x128xf32>
    %29 = vector.multi_reduction <maximumf>, %28, %cst_25 [1] : vector<32x2x128xf32> to vector<32x128xf32>
    %cst_26 = arith.constant 0.000000e+00 : f32
    %30 = vector.broadcast %cst_26 : f32 to vector<8x128xf32>
    %c0_27 = arith.constant 0 : index
    %c0_28 = arith.constant 0 : index
    %31 = vector.load %arg11[%c0_27, %c0_28] : memref<48x128xf32, #tpu.memory_space<vmem>>, vector<8x128xf32>
    tpu.vector_store %arg11[%c0_27, %c0_28], %30 {strides = array<i32>} : memref<48x128xf32, #tpu.memory_space<vmem>>, vector<8x128xf32>,
    %cst_29 = arith.constant 0.000000e+00 : f32
    %32 = vector.broadcast %cst_29 : f32 to vector<8x128xf32>
    %c40 = arith.constant 40 : index
    %c0_30 = arith.constant 0 : index
    %33 = vector.load %arg11[%c40, %c0_30] : memref<48x128xf32, #tpu.memory_space<vmem>>, vector<8x128xf32>
    tpu.vector_store %arg11[%c40, %c0_30], %32 {strides = array<i32>} : memref<48x128xf32, #tpu.memory_space<vmem>>, vector<8x128xf32>,
    %c8_31 = arith.constant 8 : index
    %c0_32 = arith.constant 0 : index
    %34 = vector.load %arg11[%c8_31, %c0_32] : memref<48x128xf32, #tpu.memory_space<vmem>>, vector<32x128xf32>
    tpu.vector_store %arg11[%c8_31, %c0_32], %29 {strides = array<i32>} : memref<48x128xf32, #tpu.memory_space<vmem>>, vector<32x128xf32>,
    %cst_33 = arith.constant 0.000000e+00 : f32
    %35 = vector.broadcast %cst_33 : f32 to vector<32x96xf32>
    %c7_34 = arith.constant 7 : index
    %c0_35 = arith.constant 0 : index
    %36 = vector.load %arg11[%c7_34, %c0_35] : memref<48x128xf32, #tpu.memory_space<vmem>>, vector<32x128xf32>
    %c0_36 = arith.constant 0 : index
    %c0_37 = arith.constant 0 : index
    %c0_38 = arith.constant 0 : index
    %37 = vector.load %arg4[%c0_36, %c0_37, %c0_38] : memref<3x128x96xf32, #tpu.memory_space<vmem>>, vector<1x128x96xf32>
    %38 = vector.shape_cast %37 : vector<1x128x96xf32> to vector<128x96xf32>
    %cst_39 = arith.constant dense<0.000000e+00> : vector<32x96xf32>
    %39 = tpu.matmul %36, %38, %cst_39 {dimension_numbers = #tpu.dot_dimension_numbers<[1], [0], [0], [1], [0, 0, 1, 1], [], []>} : vector<32x128xf32>, vector<128x96xf32>, vector<32x96xf32> -> vector<32x96xf32>
    %40 = arith.addf %35, %39 : vector<32x96xf32>
    %c8_40 = arith.constant 8 : index
    %c0_41 = arith.constant 0 : index
    %41 = vector.load %arg11[%c8_40, %c0_41] : memref<48x128xf32, #tpu.memory_space<vmem>>, vector<32x128xf32>
    %c1_42 = arith.constant 1 : index
    %c0_43 = arith.constant 0 : index
    %c0_44 = arith.constant 0 : index
    %42 = vector.load %arg4[%c1_42, %c0_43, %c0_44] : memref<3x128x96xf32, #tpu.memory_space<vmem>>, vector<1x128x96xf32>
    %43 = vector.shape_cast %42 : vector<1x128x96xf32> to vector<128x96xf32>
    %cst_45 = arith.constant dense<0.000000e+00> : vector<32x96xf32>
    %44 = tpu.matmul %41, %43, %cst_45 {dimension_numbers = #tpu.dot_dimension_numbers<[1], [0], [0], [1], [0, 0, 1, 1], [], []>} : vector<32x128xf32>, vector<128x96xf32>, vector<32x96xf32> -> vector<32x96xf32>
    %45 = arith.addf %40, %44 : vector<32x96xf32>
    %c9_46 = arith.constant 9 : index
    %c0_47 = arith.constant 0 : index
    %46 = vector.load %arg11[%c9_46, %c0_47] : memref<48x128xf32, #tpu.memory_space<vmem>>, vector<32x128xf32>
    %c2_48 = arith.constant 2 : index
    %c0_49 = arith.constant 0 : index
    %c0_50 = arith.constant 0 : index
    %47 = vector.load %arg4[%c2_48, %c0_49, %c0_50] : memref<3x128x96xf32, #tpu.memory_space<vmem>>, vector<1x128x96xf32>
    %48 = vector.shape_cast %47 : vector<1x128x96xf32> to vector<128x96xf32>
    %cst_51 = arith.constant dense<0.000000e+00> : vector<32x96xf32>
    %49 = tpu.matmul %46, %48, %cst_51 {dimension_numbers = #tpu.dot_dimension_numbers<[1], [0], [0], [1], [0, 0, 1, 1], [], []>} : vector<32x128xf32>, vector<128x96xf32>, vector<32x96xf32> -> vector<32x96xf32>
    %50 = arith.addf %45, %49 : vector<32x96xf32>
    %c0_52 = arith.constant 0 : index
    %c0_53 = arith.constant 0 : index
    %51 = vector.load %arg5[%c0_52, %c0_53] : memref<1x96xf32, #tpu.memory_space<vmem>>, vector<1x96xf32>
    %52 = vector.broadcast %51 : vector<1x96xf32> to vector<32x96xf32>
    %53 = arith.addf %50, %52 : vector<32x96xf32>
    %cst_54 = arith.constant 0.000000e+00 : f32
    %54 = vector.broadcast %cst_54 : f32 to vector<32x96xf32>
    %55 = arith.maximumf %53, %54 : vector<32x96xf32>
    %56 = vector.shape_cast %55 : vector<32x96xf32> to vector<16x2x96xf32>
    %cst_55 = arith.constant dense<0xFF800000> : vector<16x96xf32>
    %57 = vector.multi_reduction <maximumf>, %56, %cst_55 [1] : vector<16x2x96xf32> to vector<16x96xf32>
    %cst_56 = arith.constant 0.000000e+00 : f32
    %58 = vector.broadcast %cst_56 : f32 to vector<8x96xf32>
    %c0_57 = arith.constant 0 : index
    %c0_58 = arith.constant 0 : index
    %59 = vector.load %arg12[%c0_57, %c0_58] : memref<32x96xf32, #tpu.memory_space<vmem>>, vector<8x96xf32>
    tpu.vector_store %arg12[%c0_57, %c0_58], %58 {strides = array<i32>} : memref<32x96xf32, #tpu.memory_space<vmem>>, vector<8x96xf32>,
    %cst_59 = arith.constant 0.000000e+00 : f32
    %60 = vector.broadcast %cst_59 : f32 to vector<8x96xf32>
    %c24 = arith.constant 24 : index
    %c0_60 = arith.constant 0 : index
    %61 = vector.load %arg12[%c24, %c0_60] : memref<32x96xf32, #tpu.memory_space<vmem>>, vector<8x96xf32>
    tpu.vector_store %arg12[%c24, %c0_60], %60 {strides = array<i32>} : memref<32x96xf32, #tpu.memory_space<vmem>>, vector<8x96xf32>,
    %c8_61 = arith.constant 8 : index
    %c0_62 = arith.constant 0 : index
    %62 = vector.load %arg12[%c8_61, %c0_62] : memref<32x96xf32, #tpu.memory_space<vmem>>, vector<16x96xf32>
    tpu.vector_store %arg12[%c8_61, %c0_62], %57 {strides = array<i32>} : memref<32x96xf32, #tpu.memory_space<vmem>>, vector<16x96xf32>,
    %cst_63 = arith.constant 0.000000e+00 : f32
    %63 = vector.broadcast %cst_63 : f32 to vector<16x32xf32>
    %c7_64 = arith.constant 7 : index
    %c0_65 = arith.constant 0 : index
    %64 = vector.load %arg12[%c7_64, %c0_65] : memref<32x96xf32, #tpu.memory_space<vmem>>, vector<16x96xf32>
    %c0_66 = arith.constant 0 : index
    %c0_67 = arith.constant 0 : index
    %c0_68 = arith.constant 0 : index
    %65 = vector.load %arg6[%c0_66, %c0_67, %c0_68] : memref<3x96x32xf32, #tpu.memory_space<vmem>>, vector<1x96x32xf32>
    %66 = vector.shape_cast %65 : vector<1x96x32xf32> to vector<96x32xf32>
    %cst_69 = arith.constant dense<0.000000e+00> : vector<16x32xf32>
    %67 = tpu.matmul %64, %66, %cst_69 {dimension_numbers = #tpu.dot_dimension_numbers<[1], [0], [0], [1], [0, 0, 1, 1], [], []>} : vector<16x96xf32>, vector<96x32xf32>, vector<16x32xf32> -> vector<16x32xf32>
    %68 = arith.addf %63, %67 : vector<16x32xf32>
    %c8_70 = arith.constant 8 : index
    %c0_71 = arith.constant 0 : index
    %69 = vector.load %arg12[%c8_70, %c0_71] : memref<32x96xf32, #tpu.memory_space<vmem>>, vector<16x96xf32>
    %c1_72 = arith.constant 1 : index
    %c0_73 = arith.constant 0 : index
    %c0_74 = arith.constant 0 : index
    %70 = vector.load %arg6[%c1_72, %c0_73, %c0_74] : memref<3x96x32xf32, #tpu.memory_space<vmem>>, vector<1x96x32xf32>
    %71 = vector.shape_cast %70 : vector<1x96x32xf32> to vector<96x32xf32>
    %cst_75 = arith.constant dense<0.000000e+00> : vector<16x32xf32>
    %72 = tpu.matmul %69, %71, %cst_75 {dimension_numbers = #tpu.dot_dimension_numbers<[1], [0], [0], [1], [0, 0, 1, 1], [], []>} : vector<16x96xf32>, vector<96x32xf32>, vector<16x32xf32> -> vector<16x32xf32>
    %73 = arith.addf %68, %72 : vector<16x32xf32>
    %c9_76 = arith.constant 9 : index
    %c0_77 = arith.constant 0 : index
    %74 = vector.load %arg12[%c9_76, %c0_77] : memref<32x96xf32, #tpu.memory_space<vmem>>, vector<16x96xf32>
    %c2_78 = arith.constant 2 : index
    %c0_79 = arith.constant 0 : index
    %c0_80 = arith.constant 0 : index
    %75 = vector.load %arg6[%c2_78, %c0_79, %c0_80] : memref<3x96x32xf32, #tpu.memory_space<vmem>>, vector<1x96x32xf32>
    %76 = vector.shape_cast %75 : vector<1x96x32xf32> to vector<96x32xf32>
    %cst_81 = arith.constant dense<0.000000e+00> : vector<16x32xf32>
    %77 = tpu.matmul %74, %76, %cst_81 {dimension_numbers = #tpu.dot_dimension_numbers<[1], [0], [0], [1], [0, 0, 1, 1], [], []>} : vector<16x96xf32>, vector<96x32xf32>, vector<16x32xf32> -> vector<16x32xf32>
    %78 = arith.addf %73, %77 : vector<16x32xf32>
    %c0_82 = arith.constant 0 : index
    %c0_83 = arith.constant 0 : index
    %79 = vector.load %arg7[%c0_82, %c0_83] : memref<1x32xf32, #tpu.memory_space<vmem>>, vector<1x32xf32>
    %80 = vector.broadcast %79 : vector<1x32xf32> to vector<16x32xf32>
    %81 = arith.addf %78, %80 : vector<16x32xf32>
    %cst_84 = arith.constant 0.000000e+00 : f32
    %82 = vector.broadcast %cst_84 : f32 to vector<16x32xf32>
    %83 = arith.maximumf %81, %82 : vector<16x32xf32>
    %84 = vector.shape_cast %83 : vector<16x32xf32> to vector<8x2x32xf32>
    %cst_85 = arith.constant dense<0xFF800000> : vector<8x32xf32>
    %85 = vector.multi_reduction <maximumf>, %84, %cst_85 [1] : vector<8x2x32xf32> to vector<8x32xf32>
    %c0_86 = arith.constant 0 : index
    %c0_87 = arith.constant 0 : index
    %c0_88 = arith.constant 0 : index
    %86 = vector.load %arg8[%c0_86, %c0_87, %c0_88] : memref<1x1x32xf32, #tpu.memory_space<vmem>>, vector<1x1x32xf32>
    %87 = vector.shape_cast %86 : vector<1x1x32xf32> to vector<1x32xf32>
    %88 = vector.broadcast %87 : vector<1x32xf32> to vector<8x32xf32>
    %89 = arith.addf %85, %88 : vector<8x32xf32>
    %c0_89 = arith.constant 0 : index
    %c0_90 = arith.constant 0 : index
    %c0_91 = arith.constant 0 : index
    %90 = vector.load %arg9[%c0_89, %c0_90, %c0_91] : memref<1x8x32xf32, #tpu.memory_space<vmem>>, vector<1x8x32xf32>
    %91 = vector.shape_cast %90 : vector<1x8x32xf32> to vector<8x32xf32>
    %92 = vector.shape_cast %89 : vector<8x32xf32> to vector<1x8x32xf32>
    tpu.vector_store %arg9[%c0_89, %c0_90, %c0_91], %92 {strides = array<i32>} : memref<1x8x32xf32, #tpu.memory_space<vmem>>, vector<1x8x32xf32>,
    return
  }
  func.func @transform_0(%arg0: i32) -> (i32, i32, i32) {
    %c0_i32 = arith.constant 0 : i32
    %c0_i32_0 = arith.constant 0 : i32
    %c0_i32_1 = arith.constant 0 : i32
    return %arg0, %c0_i32, %c0_i32_0 : i32, i32, i32
  }
  func.func @transform_1(%arg0: i32) -> (i32, i32, i32) {
    %c0_i32 = arith.constant 0 : i32
    %c0_i32_0 = arith.constant 0 : i32
    %c0_i32_1 = arith.constant 0 : i32
    %c0_i32_2 = arith.constant 0 : i32
    return %c0_i32, %c0_i32_0, %c0_i32_1 : i32, i32, i32
  }
  func.func @transform_2(%arg0: i32) -> (i32, i32) {
    %c0_i32 = arith.constant 0 : i32
    %c0_i32_0 = arith.constant 0 : i32
    %c0_i32_1 = arith.constant 0 : i32
    return %c0_i32, %c0_i32_0 : i32, i32
  }
  func.func @transform_3(%arg0: i32) -> (i32, i32, i32) {
    %c0_i32 = arith.constant 0 : i32
    %c0_i32_0 = arith.constant 0 : i32
    %c0_i32_1 = arith.constant 0 : i32
    %c0_i32_2 = arith.constant 0 : i32
    return %c0_i32, %c0_i32_0, %c0_i32_1 : i32, i32, i32
  }
  func.func @transform_4(%arg0: i32) -> (i32, i32) {
    %c0_i32 = arith.constant 0 : i32
    %c0_i32_0 = arith.constant 0 : i32
    %c0_i32_1 = arith.constant 0 : i32
    return %c0_i32, %c0_i32_0 : i32, i32
  }
  func.func @transform_5(%arg0: i32) -> (i32, i32, i32) {
    %c0_i32 = arith.constant 0 : i32
    %c0_i32_0 = arith.constant 0 : i32
    %c0_i32_1 = arith.constant 0 : i32
    %c0_i32_2 = arith.constant 0 : i32
    return %c0_i32, %c0_i32_0, %c0_i32_1 : i32, i32, i32
  }
  func.func @transform_6(%arg0: i32) -> (i32, i32) {
    %c0_i32 = arith.constant 0 : i32
    %c0_i32_0 = arith.constant 0 : i32
    %c0_i32_1 = arith.constant 0 : i32
    return %c0_i32, %c0_i32_0 : i32, i32
  }
  func.func @transform_7(%arg0: i32) -> (i32, i32, i32) {
    %c0_i32 = arith.constant 0 : i32
    %c0_i32_0 = arith.constant 0 : i32
    %c0_i32_1 = arith.constant 0 : i32
    return %arg0, %c0_i32, %c0_i32_0 : i32, i32, i32
  }
  func.func @transform_8(%arg0: i32) -> (i32, i32, i32) {
    %c0_i32 = arith.constant 0 : i32
    %c0_i32_0 = arith.constant 0 : i32
    %c0_i32_1 = arith.constant 0 : i32
    return %arg0, %c0_i32, %c0_i32_0 : i32, i32, i32
  }
}

module attributes {stable_mosaic.version = 11 : i64} {
  func.func @_stack_kernel(%arg0: i32, %arg1: memref<16x32xf32, #tpu.memory_space<vmem>>, %arg2: memref<1x32x32xbf16, #tpu.memory_space<vmem>>, %arg3: memref<1x1x32xf32, #tpu.memory_space<vmem>>, %arg4: memref<1x32x32xbf16, #tpu.memory_space<vmem>>, %arg5: memref<1x1x32xf32, #tpu.memory_space<vmem>>, %arg6: memref<1x32x32xbf16, #tpu.memory_space<vmem>>, %arg7: memref<1x1x32xf32, #tpu.memory_space<vmem>>, %arg8: memref<1x32x32xbf16, #tpu.memory_space<vmem>>, %arg9: memref<1x1x32xf32, #tpu.memory_space<vmem>>, %arg10: memref<1x1x32xf32, #tpu.memory_space<vmem>>, %arg11: memref<1x1x32xf32, #tpu.memory_space<vmem>>, %arg12: memref<1x32x2048xbf16, #tpu.memory_space<vmem>>, %arg13: memref<1x1x2048xf32, #tpu.memory_space<vmem>>, %arg14: memref<1x2048x32xbf16, #tpu.memory_space<vmem>>, %arg15: memref<1x1x32xf32, #tpu.memory_space<vmem>>, %arg16: memref<1x1x32xf32, #tpu.memory_space<vmem>>, %arg17: memref<1x1x32xf32, #tpu.memory_space<vmem>>, %arg18: memref<32x8xbf16, #tpu.memory_space<vmem>>, %arg19: memref<1x8xf32, #tpu.memory_space<vmem>>, %arg20: memref<2x8xf32, #tpu.memory_space<vmem>>, %arg21: memref<16x32xf32, #tpu.memory_space<vmem>>) attributes {dimension_semantics = [#tpu.dimension_semantics<arbitrary>], iteration_bounds = array<i64: 2>, scalar_prefetch = 0 : i64, scratch_operands = 1 : i64, tpu.core_type = #tpu.core_type<tc>, window_params = [{pipeline_mode = #tpu.pipeline_mode<synchronous>, transform_indices = @transform_0, window_bounds = array<i64: 16, 32>}, {transform_indices = @transform_1, window_bounds = array<i64: 1, 32, 32>}, {transform_indices = @transform_2, window_bounds = array<i64: 1, 1, 32>}, {transform_indices = @transform_3, window_bounds = array<i64: 1, 32, 32>}, {transform_indices = @transform_4, window_bounds = array<i64: 1, 1, 32>}, {transform_indices = @transform_5, window_bounds = array<i64: 1, 32, 32>}, {transform_indices = @transform_6, window_bounds = array<i64: 1, 1, 32>}, {transform_indices = @transform_7, window_bounds = array<i64: 1, 32, 32>}, {transform_indices = @transform_8, window_bounds = array<i64: 1, 1, 32>}, {transform_indices = @transform_9, window_bounds = array<i64: 1, 1, 32>}, {transform_indices = @transform_10, window_bounds = array<i64: 1, 1, 32>}, {transform_indices = @transform_11, window_bounds = array<i64: 1, 32, 2048>}, {transform_indices = @transform_12, window_bounds = array<i64: 1, 1, 2048>}, {transform_indices = @transform_13, window_bounds = array<i64: 1, 2048, 32>}, {transform_indices = @transform_14, window_bounds = array<i64: 1, 1, 32>}, {transform_indices = @transform_15, window_bounds = array<i64: 1, 1, 32>}, {transform_indices = @transform_16, window_bounds = array<i64: 1, 1, 32>}, {pipeline_mode = #tpu.pipeline_mode<synchronous>, transform_indices = @transform_17, window_bounds = array<i64: 32, 8>}, {pipeline_mode = #tpu.pipeline_mode<synchronous>, transform_indices = @transform_18, window_bounds = array<i64: 1, 8>}, {pipeline_mode = #tpu.pipeline_mode<synchronous>, transform_indices = @transform_19, window_bounds = array<i64: 2, 8>}]} {
    %c0_i32 = arith.constant 0 : i32
    %0 = arith.cmpi eq, %arg0, %c0_i32 : i32
    %1 = arith.extui %0 : i1 to i32
    %c0_i32_0 = arith.constant 0 : i32
    %2 = arith.cmpi ne, %1, %c0_i32_0 : i32
    scf.if %2 {
      %c0_85 = arith.constant 0 : index
      %c0_86 = arith.constant 0 : index
      %181 = vector.load %arg1[%c0_85, %c0_86] : memref<16x32xf32, #tpu.memory_space<vmem>>, vector<16x32xf32>
      %c0_87 = arith.constant 0 : index
      %c0_88 = arith.constant 0 : index
      %182 = vector.load %arg21[%c0_87, %c0_88] : memref<16x32xf32, #tpu.memory_space<vmem>>, vector<16x32xf32>
      tpu.vector_store %arg21[%c0_87, %c0_88], %181 {strides = array<i32>} : memref<16x32xf32, #tpu.memory_space<vmem>>, vector<16x32xf32>,
    } else {
    }
    %c0 = arith.constant 0 : index
    %c0_1 = arith.constant 0 : index
    %3 = vector.load %arg21[%c0, %c0_1] : memref<16x32xf32, #tpu.memory_space<vmem>>, vector<16x32xf32>
    %4 = tpu.iota {dimensions = array<i32: 0>} : vector<32x4xi32>
    %5 = tpu.iota {dimensions = array<i32: 1>} : vector<32x4xi32>
    %c8_i32 = arith.constant 8 : i32
    %6 = vector.broadcast %c8_i32 : i32 to vector<32x4xi32>
    %7 = arith.muli %5, %6 : vector<32x4xi32>
    %8 = arith.cmpi sge, %4, %7 : vector<32x4xi32>
    %c1_i32 = arith.constant 1 : i32
    %9 = vector.broadcast %c1_i32 : i32 to vector<32x4xi32>
    %10 = arith.addi %5, %9 : vector<32x4xi32>
    %c8_i32_2 = arith.constant 8 : i32
    %11 = vector.broadcast %c8_i32_2 : i32 to vector<32x4xi32>
    %12 = arith.muli %10, %11 : vector<32x4xi32>
    %13 = arith.cmpi slt, %4, %12 : vector<32x4xi32>
    %14 = arith.andi %8, %13 : vector<32x4xi1>
    %15 = arith.extui %14 : vector<32x4xi1> to vector<32x4xi32>
    %16 = arith.sitofp %15 : vector<32x4xi32> to vector<32x4xf32>
    %17 = tpu.iota {dimensions = array<i32: 1>} : vector<4x32xi32>
    %18 = tpu.iota {dimensions = array<i32: 0>} : vector<4x32xi32>
    %c8_i32_3 = arith.constant 8 : i32
    %19 = vector.broadcast %c8_i32_3 : i32 to vector<4x32xi32>
    %20 = arith.muli %18, %19 : vector<4x32xi32>
    %21 = arith.cmpi sge, %17, %20 : vector<4x32xi32>
    %c1_i32_4 = arith.constant 1 : i32
    %22 = vector.broadcast %c1_i32_4 : i32 to vector<4x32xi32>
    %23 = arith.addi %18, %22 : vector<4x32xi32>
    %c8_i32_5 = arith.constant 8 : i32
    %24 = vector.broadcast %c8_i32_5 : i32 to vector<4x32xi32>
    %25 = arith.muli %23, %24 : vector<4x32xi32>
    %26 = arith.cmpi slt, %17, %25 : vector<4x32xi32>
    %27 = arith.andi %21, %26 : vector<4x32xi1>
    %28 = arith.extui %27 : vector<4x32xi1> to vector<4x32xi32>
    %29 = arith.sitofp %28 : vector<4x32xi32> to vector<4x32xf32>
    %30 = arith.truncf %3 : vector<16x32xf32> to vector<16x32xbf16>
    %c0_6 = arith.constant 0 : index
    %c0_7 = arith.constant 0 : index
    %c0_8 = arith.constant 0 : index
    %31 = vector.load %arg2[%c0_6, %c0_7, %c0_8] : memref<1x32x32xbf16, #tpu.memory_space<vmem>>, vector<1x32x32xbf16>
    %32 = vector.shape_cast %31 : vector<1x32x32xbf16> to vector<32x32xbf16>
    %cst = arith.constant dense<0.000000e+00> : vector<16x32xf32>
    %33 = tpu.matmul %30, %32, %cst {dimension_numbers = #tpu.dot_dimension_numbers<[1], [0], [0], [1], [0, 0, 1, 1], [], []>} : vector<16x32xbf16>, vector<32x32xbf16>, vector<16x32xf32> -> vector<16x32xf32>
    %c0_9 = arith.constant 0 : index
    %c0_10 = arith.constant 0 : index
    %c0_11 = arith.constant 0 : index
    %34 = vector.load %arg3[%c0_9, %c0_10, %c0_11] : memref<1x1x32xf32, #tpu.memory_space<vmem>>, vector<1x1x32xf32>
    %35 = vector.shape_cast %34 : vector<1x1x32xf32> to vector<1x32xf32>
    %36 = vector.broadcast %35 : vector<1x32xf32> to vector<16x32xf32>
    %37 = arith.addf %33, %36 : vector<16x32xf32>
    %cst_12 = arith.constant 0.353553385 : f32
    %38 = vector.broadcast %cst_12 : f32 to vector<16x32xf32>
    %39 = arith.mulf %37, %38 : vector<16x32xf32>
    %c0_13 = arith.constant 0 : index
    %c0_14 = arith.constant 0 : index
    %c0_15 = arith.constant 0 : index
    %40 = vector.load %arg4[%c0_13, %c0_14, %c0_15] : memref<1x32x32xbf16, #tpu.memory_space<vmem>>, vector<1x32x32xbf16>
    %41 = vector.shape_cast %40 : vector<1x32x32xbf16> to vector<32x32xbf16>
    %cst_16 = arith.constant dense<0.000000e+00> : vector<16x32xf32>
    %42 = tpu.matmul %30, %41, %cst_16 {dimension_numbers = #tpu.dot_dimension_numbers<[1], [0], [0], [1], [0, 0, 1, 1], [], []>} : vector<16x32xbf16>, vector<32x32xbf16>, vector<16x32xf32> -> vector<16x32xf32>
    %c0_17 = arith.constant 0 : index
    %c0_18 = arith.constant 0 : index
    %c0_19 = arith.constant 0 : index
    %43 = vector.load %arg5[%c0_17, %c0_18, %c0_19] : memref<1x1x32xf32, #tpu.memory_space<vmem>>, vector<1x1x32xf32>
    %44 = vector.shape_cast %43 : vector<1x1x32xf32> to vector<1x32xf32>
    %45 = vector.broadcast %44 : vector<1x32xf32> to vector<16x32xf32>
    %46 = arith.addf %42, %45 : vector<16x32xf32>
    %c0_20 = arith.constant 0 : index
    %c0_21 = arith.constant 0 : index
    %c0_22 = arith.constant 0 : index
    %47 = vector.load %arg6[%c0_20, %c0_21, %c0_22] : memref<1x32x32xbf16, #tpu.memory_space<vmem>>, vector<1x32x32xbf16>
    %48 = vector.shape_cast %47 : vector<1x32x32xbf16> to vector<32x32xbf16>
    %cst_23 = arith.constant dense<0.000000e+00> : vector<16x32xf32>
    %49 = tpu.matmul %30, %48, %cst_23 {dimension_numbers = #tpu.dot_dimension_numbers<[1], [0], [0], [1], [0, 0, 1, 1], [], []>} : vector<16x32xbf16>, vector<32x32xbf16>, vector<16x32xf32> -> vector<16x32xf32>
    %c0_24 = arith.constant 0 : index
    %c0_25 = arith.constant 0 : index
    %c0_26 = arith.constant 0 : index
    %50 = vector.load %arg7[%c0_24, %c0_25, %c0_26] : memref<1x1x32xf32, #tpu.memory_space<vmem>>, vector<1x1x32xf32>
    %51 = vector.shape_cast %50 : vector<1x1x32xf32> to vector<1x32xf32>
    %52 = vector.broadcast %51 : vector<1x32xf32> to vector<16x32xf32>
    %53 = arith.addf %49, %52 : vector<16x32xf32>
    %54 = vector.extract_strided_slice %39 {offsets = [0, 0], sizes = [8, 32], strides = [1, 1]} : vector<16x32xf32> to vector<8x32xf32>
    %55 = vector.extract_strided_slice %39 {offsets = [8, 0], sizes = [8, 32], strides = [1, 1]} : vector<16x32xf32> to vector<8x32xf32>
    %56 = vector.extract_strided_slice %46 {offsets = [0, 0], sizes = [8, 32], strides = [1, 1]} : vector<16x32xf32> to vector<8x32xf32>
    %57 = vector.extract_strided_slice %46 {offsets = [8, 0], sizes = [8, 32], strides = [1, 1]} : vector<16x32xf32> to vector<8x32xf32>
    %58 = vector.extract_strided_slice %53 {offsets = [0, 0], sizes = [8, 32], strides = [1, 1]} : vector<16x32xf32> to vector<8x32xf32>
    %59 = vector.extract_strided_slice %53 {offsets = [8, 0], sizes = [8, 32], strides = [1, 1]} : vector<16x32xf32> to vector<8x32xf32>
    %60 = arith.mulf %54, %56 : vector<8x32xf32>
    %cst_27 = arith.constant dense<0.000000e+00> : vector<8x4xf32>
    %61 = tpu.matmul %60, %16, %cst_27 {dimension_numbers = #tpu.dot_dimension_numbers<[1], [0], [0], [1], [0, 0, 1, 1], [], []>} : vector<8x32xf32>, vector<32x4xf32>, vector<8x4xf32> -> vector<8x4xf32>
    %62 = arith.mulf %54, %57 : vector<8x32xf32>
    %cst_28 = arith.constant dense<0.000000e+00> : vector<8x4xf32>
    %63 = tpu.matmul %62, %16, %cst_28 {dimension_numbers = #tpu.dot_dimension_numbers<[1], [0], [0], [1], [0, 0, 1, 1], [], []>} : vector<8x32xf32>, vector<32x4xf32>, vector<8x4xf32> -> vector<8x4xf32>
    %64 = arith.maximumf %61, %63 : vector<8x4xf32>
    %65 = arith.subf %61, %64 : vector<8x4xf32>
    %66 = math.exp %65 : vector<8x4xf32>
    %67 = arith.subf %63, %64 : vector<8x4xf32>
    %68 = math.exp %67 : vector<8x4xf32>
    %69 = arith.addf %66, %68 : vector<8x4xf32>
    %70 = tpu.reciprocal %69 {approx = true} : vector<8x4xf32> -> vector<8x4xf32>
    %cst_29 = arith.constant 0.000000e+00 : f32
    %71 = vector.broadcast %cst_29 : f32 to vector<8x32xf32>
    %72 = arith.mulf %66, %70 : vector<8x4xf32>
    %cst_30 = arith.constant dense<0.000000e+00> : vector<8x32xf32>
    %73 = tpu.matmul %72, %29, %cst_30 {dimension_numbers = #tpu.dot_dimension_numbers<[1], [0], [0], [1], [0, 0, 1, 1], [], []>} : vector<8x4xf32>, vector<4x32xf32>, vector<8x32xf32> -> vector<8x32xf32>
    %74 = arith.mulf %73, %58 : vector<8x32xf32>
    %75 = arith.addf %71, %74 : vector<8x32xf32>
    %76 = arith.mulf %68, %70 : vector<8x4xf32>
    %cst_31 = arith.constant dense<0.000000e+00> : vector<8x32xf32>
    %77 = tpu.matmul %76, %29, %cst_31 {dimension_numbers = #tpu.dot_dimension_numbers<[1], [0], [0], [1], [0, 0, 1, 1], [], []>} : vector<8x4xf32>, vector<4x32xf32>, vector<8x32xf32> -> vector<8x32xf32>
    %78 = arith.mulf %77, %59 : vector<8x32xf32>
    %79 = arith.addf %75, %78 : vector<8x32xf32>
    %80 = arith.mulf %55, %56 : vector<8x32xf32>
    %cst_32 = arith.constant dense<0.000000e+00> : vector<8x4xf32>
    %81 = tpu.matmul %80, %16, %cst_32 {dimension_numbers = #tpu.dot_dimension_numbers<[1], [0], [0], [1], [0, 0, 1, 1], [], []>} : vector<8x32xf32>, vector<32x4xf32>, vector<8x4xf32> -> vector<8x4xf32>
    %82 = arith.mulf %55, %57 : vector<8x32xf32>
    %cst_33 = arith.constant dense<0.000000e+00> : vector<8x4xf32>
    %83 = tpu.matmul %82, %16, %cst_33 {dimension_numbers = #tpu.dot_dimension_numbers<[1], [0], [0], [1], [0, 0, 1, 1], [], []>} : vector<8x32xf32>, vector<32x4xf32>, vector<8x4xf32> -> vector<8x4xf32>
    %84 = arith.maximumf %81, %83 : vector<8x4xf32>
    %85 = arith.subf %81, %84 : vector<8x4xf32>
    %86 = math.exp %85 : vector<8x4xf32>
    %87 = arith.subf %83, %84 : vector<8x4xf32>
    %88 = math.exp %87 : vector<8x4xf32>
    %89 = arith.addf %86, %88 : vector<8x4xf32>
    %90 = tpu.reciprocal %89 {approx = true} : vector<8x4xf32> -> vector<8x4xf32>
    %cst_34 = arith.constant 0.000000e+00 : f32
    %91 = vector.broadcast %cst_34 : f32 to vector<8x32xf32>
    %92 = arith.mulf %86, %90 : vector<8x4xf32>
    %cst_35 = arith.constant dense<0.000000e+00> : vector<8x32xf32>
    %93 = tpu.matmul %92, %29, %cst_35 {dimension_numbers = #tpu.dot_dimension_numbers<[1], [0], [0], [1], [0, 0, 1, 1], [], []>} : vector<8x4xf32>, vector<4x32xf32>, vector<8x32xf32> -> vector<8x32xf32>
    %94 = arith.mulf %93, %58 : vector<8x32xf32>
    %95 = arith.addf %91, %94 : vector<8x32xf32>
    %96 = arith.mulf %88, %90 : vector<8x4xf32>
    %cst_36 = arith.constant dense<0.000000e+00> : vector<8x32xf32>
    %97 = tpu.matmul %96, %29, %cst_36 {dimension_numbers = #tpu.dot_dimension_numbers<[1], [0], [0], [1], [0, 0, 1, 1], [], []>} : vector<8x4xf32>, vector<4x32xf32>, vector<8x32xf32> -> vector<8x32xf32>
    %98 = arith.mulf %97, %59 : vector<8x32xf32>
    %99 = arith.addf %95, %98 : vector<8x32xf32>
    %100 = tpu.concatenate %79, %99 in 0 : vector<8x32xf32>, vector<8x32xf32> -> vector<16x32xf32>
    %101 = arith.truncf %100 : vector<16x32xf32> to vector<16x32xbf16>
    %c0_37 = arith.constant 0 : index
    %c0_38 = arith.constant 0 : index
    %c0_39 = arith.constant 0 : index
    %102 = vector.load %arg8[%c0_37, %c0_38, %c0_39] : memref<1x32x32xbf16, #tpu.memory_space<vmem>>, vector<1x32x32xbf16>
    %103 = vector.shape_cast %102 : vector<1x32x32xbf16> to vector<32x32xbf16>
    %cst_40 = arith.constant dense<0.000000e+00> : vector<16x32xf32>
    %104 = tpu.matmul %101, %103, %cst_40 {dimension_numbers = #tpu.dot_dimension_numbers<[1], [0], [0], [1], [0, 0, 1, 1], [], []>} : vector<16x32xbf16>, vector<32x32xbf16>, vector<16x32xf32> -> vector<16x32xf32>
    %c0_41 = arith.constant 0 : index
    %c0_42 = arith.constant 0 : index
    %c0_43 = arith.constant 0 : index
    %105 = vector.load %arg9[%c0_41, %c0_42, %c0_43] : memref<1x1x32xf32, #tpu.memory_space<vmem>>, vector<1x1x32xf32>
    %106 = vector.shape_cast %105 : vector<1x1x32xf32> to vector<1x32xf32>
    %107 = vector.broadcast %106 : vector<1x32xf32> to vector<16x32xf32>
    %108 = arith.addf %104, %107 : vector<16x32xf32>
    %109 = arith.addf %3, %108 : vector<16x32xf32>
    %c0_44 = arith.constant 0 : index
    %c0_45 = arith.constant 0 : index
    %c0_46 = arith.constant 0 : index
    %110 = vector.load %arg10[%c0_44, %c0_45, %c0_46] : memref<1x1x32xf32, #tpu.memory_space<vmem>>, vector<1x1x32xf32>
    %111 = vector.shape_cast %110 : vector<1x1x32xf32> to vector<1x32xf32>
    %c0_47 = arith.constant 0 : index
    %c0_48 = arith.constant 0 : index
    %c0_49 = arith.constant 0 : index
    %112 = vector.load %arg11[%c0_47, %c0_48, %c0_49] : memref<1x1x32xf32, #tpu.memory_space<vmem>>, vector<1x1x32xf32>
    %113 = vector.shape_cast %112 : vector<1x1x32xf32> to vector<1x32xf32>
    %cst_50 = arith.constant dense<0.000000e+00> : vector<16xf32>
    %114 = vector.multi_reduction <add>, %109, %cst_50 [1] : vector<16x32xf32> to vector<16xf32>
    %115 = vector.shape_cast %114 : vector<16xf32> to vector<16x1xf32>
    %cst_51 = arith.constant 3.200000e+01 : f32
    %116 = vector.broadcast %cst_51 : f32 to vector<16x1xf32>
    %117 = arith.divf %115, %116 : vector<16x1xf32>
    %118 = vector.broadcast %117 : vector<16x1xf32> to vector<16x32xf32>
    %119 = arith.subf %109, %118 : vector<16x32xf32>
    %120 = arith.mulf %119, %119 : vector<16x32xf32>
    %cst_52 = arith.constant dense<0.000000e+00> : vector<16xf32>
    %121 = vector.multi_reduction <add>, %120, %cst_52 [1] : vector<16x32xf32> to vector<16xf32>
    %122 = vector.shape_cast %121 : vector<16xf32> to vector<16x1xf32>
    %cst_53 = arith.constant 3.200000e+01 : f32
    %123 = vector.broadcast %cst_53 : f32 to vector<16x1xf32>
    %124 = arith.divf %122, %123 : vector<16x1xf32>
    %cst_54 = arith.constant 9.99999974E-6 : f32
    %125 = vector.broadcast %cst_54 : f32 to vector<16x1xf32>
    %126 = arith.addf %124, %125 : vector<16x1xf32>
    %127 = math.rsqrt %126 : vector<16x1xf32>
    %128 = vector.broadcast %127 : vector<16x1xf32> to vector<16x32xf32>
    %129 = arith.mulf %119, %128 : vector<16x32xf32>
    %130 = vector.broadcast %111 : vector<1x32xf32> to vector<16x32xf32>
    %131 = arith.mulf %129, %130 : vector<16x32xf32>
    %132 = vector.broadcast %113 : vector<1x32xf32> to vector<16x32xf32>
    %133 = arith.addf %131, %132 : vector<16x32xf32>
    %134 = arith.truncf %133 : vector<16x32xf32> to vector<16x32xbf16>
    %c0_55 = arith.constant 0 : index
    %c0_56 = arith.constant 0 : index
    %c0_57 = arith.constant 0 : index
    %135 = vector.load %arg12[%c0_55, %c0_56, %c0_57] : memref<1x32x2048xbf16, #tpu.memory_space<vmem>>, vector<1x32x2048xbf16>
    %136 = vector.shape_cast %135 : vector<1x32x2048xbf16> to vector<32x2048xbf16>
    %cst_58 = arith.constant dense<0.000000e+00> : vector<16x2048xf32>
    %137 = tpu.matmul %134, %136, %cst_58 {dimension_numbers = #tpu.dot_dimension_numbers<[1], [0], [0], [1], [0, 0, 1, 1], [], []>} : vector<16x32xbf16>, vector<32x2048xbf16>, vector<16x2048xf32> -> vector<16x2048xf32>
    %c0_59 = arith.constant 0 : index
    %c0_60 = arith.constant 0 : index
    %c0_61 = arith.constant 0 : index
    %138 = vector.load %arg13[%c0_59, %c0_60, %c0_61] : memref<1x1x2048xf32, #tpu.memory_space<vmem>>, vector<1x1x2048xf32>
    %139 = vector.shape_cast %138 : vector<1x1x2048xf32> to vector<1x2048xf32>
    %140 = vector.broadcast %139 : vector<1x2048xf32> to vector<16x2048xf32>
    %141 = arith.addf %137, %140 : vector<16x2048xf32>
    %cst_62 = arith.constant 0.000000e+00 : f32
    %142 = vector.broadcast %cst_62 : f32 to vector<16x2048xf32>
    %143 = arith.maximumf %141, %142 : vector<16x2048xf32>
    %144 = arith.truncf %143 : vector<16x2048xf32> to vector<16x2048xbf16>
    %c0_63 = arith.constant 0 : index
    %c0_64 = arith.constant 0 : index
    %c0_65 = arith.constant 0 : index
    %145 = vector.load %arg14[%c0_63, %c0_64, %c0_65] : memref<1x2048x32xbf16, #tpu.memory_space<vmem>>, vector<1x2048x32xbf16>
    %146 = vector.shape_cast %145 : vector<1x2048x32xbf16> to vector<2048x32xbf16>
    %cst_66 = arith.constant dense<0.000000e+00> : vector<16x32xf32>
    %147 = tpu.matmul %144, %146, %cst_66 {dimension_numbers = #tpu.dot_dimension_numbers<[1], [0], [0], [1], [0, 0, 1, 1], [], []>} : vector<16x2048xbf16>, vector<2048x32xbf16>, vector<16x32xf32> -> vector<16x32xf32>
    %c0_67 = arith.constant 0 : index
    %c0_68 = arith.constant 0 : index
    %c0_69 = arith.constant 0 : index
    %148 = vector.load %arg15[%c0_67, %c0_68, %c0_69] : memref<1x1x32xf32, #tpu.memory_space<vmem>>, vector<1x1x32xf32>
    %149 = vector.shape_cast %148 : vector<1x1x32xf32> to vector<1x32xf32>
    %150 = vector.broadcast %149 : vector<1x32xf32> to vector<16x32xf32>
    %151 = arith.addf %147, %150 : vector<16x32xf32>
    %152 = arith.addf %133, %151 : vector<16x32xf32>
    %c0_70 = arith.constant 0 : index
    %c0_71 = arith.constant 0 : index
    %c0_72 = arith.constant 0 : index
    %153 = vector.load %arg16[%c0_70, %c0_71, %c0_72] : memref<1x1x32xf32, #tpu.memory_space<vmem>>, vector<1x1x32xf32>
    %154 = vector.shape_cast %153 : vector<1x1x32xf32> to vector<1x32xf32>
    %c0_73 = arith.constant 0 : index
    %c0_74 = arith.constant 0 : index
    %c0_75 = arith.constant 0 : index
    %155 = vector.load %arg17[%c0_73, %c0_74, %c0_75] : memref<1x1x32xf32, #tpu.memory_space<vmem>>, vector<1x1x32xf32>
    %156 = vector.shape_cast %155 : vector<1x1x32xf32> to vector<1x32xf32>
    %cst_76 = arith.constant dense<0.000000e+00> : vector<16xf32>
    %157 = vector.multi_reduction <add>, %152, %cst_76 [1] : vector<16x32xf32> to vector<16xf32>
    %158 = vector.shape_cast %157 : vector<16xf32> to vector<16x1xf32>
    %cst_77 = arith.constant 3.200000e+01 : f32
    %159 = vector.broadcast %cst_77 : f32 to vector<16x1xf32>
    %160 = arith.divf %158, %159 : vector<16x1xf32>
    %161 = vector.broadcast %160 : vector<16x1xf32> to vector<16x32xf32>
    %162 = arith.subf %152, %161 : vector<16x32xf32>
    %163 = arith.mulf %162, %162 : vector<16x32xf32>
    %cst_78 = arith.constant dense<0.000000e+00> : vector<16xf32>
    %164 = vector.multi_reduction <add>, %163, %cst_78 [1] : vector<16x32xf32> to vector<16xf32>
    %165 = vector.shape_cast %164 : vector<16xf32> to vector<16x1xf32>
    %cst_79 = arith.constant 3.200000e+01 : f32
    %166 = vector.broadcast %cst_79 : f32 to vector<16x1xf32>
    %167 = arith.divf %165, %166 : vector<16x1xf32>
    %cst_80 = arith.constant 9.99999974E-6 : f32
    %168 = vector.broadcast %cst_80 : f32 to vector<16x1xf32>
    %169 = arith.addf %167, %168 : vector<16x1xf32>
    %170 = math.rsqrt %169 : vector<16x1xf32>
    %171 = vector.broadcast %170 : vector<16x1xf32> to vector<16x32xf32>
    %172 = arith.mulf %162, %171 : vector<16x32xf32>
    %173 = vector.broadcast %154 : vector<1x32xf32> to vector<16x32xf32>
    %174 = arith.mulf %172, %173 : vector<16x32xf32>
    %175 = vector.broadcast %156 : vector<1x32xf32> to vector<16x32xf32>
    %176 = arith.addf %174, %175 : vector<16x32xf32>
    %c0_81 = arith.constant 0 : index
    %c0_82 = arith.constant 0 : index
    %177 = vector.load %arg21[%c0_81, %c0_82] : memref<16x32xf32, #tpu.memory_space<vmem>>, vector<16x32xf32>
    tpu.vector_store %arg21[%c0_81, %c0_82], %176 {strides = array<i32>} : memref<16x32xf32, #tpu.memory_space<vmem>>, vector<16x32xf32>,
    %c1_i32_83 = arith.constant 1 : i32
    %178 = arith.cmpi eq, %arg0, %c1_i32_83 : i32
    %179 = arith.extui %178 : i1 to i32
    %c0_i32_84 = arith.constant 0 : i32
    %180 = arith.cmpi ne, %179, %c0_i32_84 : i32
    scf.if %180 {
      %c0_85 = arith.constant 0 : index
      %c0_86 = arith.constant 0 : index
      %181 = vector.load %arg21[%c0_85, %c0_86] : memref<16x32xf32, #tpu.memory_space<vmem>>, vector<16x32xf32>
      %182 = arith.truncf %181 : vector<16x32xf32> to vector<16x32xbf16>
      %c0_87 = arith.constant 0 : index
      %c0_88 = arith.constant 0 : index
      %183 = vector.load %arg18[%c0_87, %c0_88] : memref<32x8xbf16, #tpu.memory_space<vmem>>, vector<32x8xbf16>
      %cst_89 = arith.constant dense<0.000000e+00> : vector<16x8xf32>
      %184 = tpu.matmul %182, %183, %cst_89 {dimension_numbers = #tpu.dot_dimension_numbers<[1], [0], [0], [1], [0, 0, 1, 1], [], []>} : vector<16x32xbf16>, vector<32x8xbf16>, vector<16x8xf32> -> vector<16x8xf32>
      %c0_90 = arith.constant 0 : index
      %c0_91 = arith.constant 0 : index
      %185 = vector.load %arg19[%c0_90, %c0_91] : memref<1x8xf32, #tpu.memory_space<vmem>>, vector<1x8xf32>
      %186 = vector.broadcast %185 : vector<1x8xf32> to vector<16x8xf32>
      %187 = arith.addf %184, %186 : vector<16x8xf32>
      %188 = vector.extract_strided_slice %187 {offsets = [0, 0], sizes = [8, 8], strides = [1, 1]} : vector<16x8xf32> to vector<8x8xf32>
      %cst_92 = arith.constant dense<0xFF800000> : vector<8xf32>
      %189 = vector.multi_reduction <maximumf>, %188, %cst_92 [0] : vector<8x8xf32> to vector<8xf32>
      %190 = vector.shape_cast %189 : vector<8xf32> to vector<1x8xf32>
      %191 = vector.extract_strided_slice %187 {offsets = [8, 0], sizes = [8, 8], strides = [1, 1]} : vector<16x8xf32> to vector<8x8xf32>
      %cst_93 = arith.constant dense<0xFF800000> : vector<8xf32>
      %192 = vector.multi_reduction <maximumf>, %191, %cst_93 [0] : vector<8x8xf32> to vector<8xf32>
      %193 = vector.shape_cast %192 : vector<8xf32> to vector<1x8xf32>
      %194 = tpu.concatenate %190, %193 in 0 : vector<1x8xf32>, vector<1x8xf32> -> vector<2x8xf32>
      %c0_94 = arith.constant 0 : index
      %c0_95 = arith.constant 0 : index
      %195 = vector.load %arg20[%c0_94, %c0_95] : memref<2x8xf32, #tpu.memory_space<vmem>>, vector<2x8xf32>
      tpu.vector_store %arg20[%c0_94, %c0_95], %194 {strides = array<i32>} : memref<2x8xf32, #tpu.memory_space<vmem>>, vector<2x8xf32>,
    } else {
    }
    return
  }
  func.func @transform_0(%arg0: i32) -> (i32, i32) {
    %c0_i32 = arith.constant 0 : i32
    %c0_i32_0 = arith.constant 0 : i32
    %c0_i32_1 = arith.constant 0 : i32
    return %c0_i32, %c0_i32_0 : i32, i32
  }
  func.func @transform_1(%arg0: i32) -> (i32, i32, i32) {
    %c0_i32 = arith.constant 0 : i32
    %c0_i32_0 = arith.constant 0 : i32
    %c0_i32_1 = arith.constant 0 : i32
    return %arg0, %c0_i32, %c0_i32_0 : i32, i32, i32
  }
  func.func @transform_2(%arg0: i32) -> (i32, i32, i32) {
    %c0_i32 = arith.constant 0 : i32
    %c0_i32_0 = arith.constant 0 : i32
    %c0_i32_1 = arith.constant 0 : i32
    return %arg0, %c0_i32, %c0_i32_0 : i32, i32, i32
  }
  func.func @transform_3(%arg0: i32) -> (i32, i32, i32) {
    %c0_i32 = arith.constant 0 : i32
    %c0_i32_0 = arith.constant 0 : i32
    %c0_i32_1 = arith.constant 0 : i32
    return %arg0, %c0_i32, %c0_i32_0 : i32, i32, i32
  }
  func.func @transform_4(%arg0: i32) -> (i32, i32, i32) {
    %c0_i32 = arith.constant 0 : i32
    %c0_i32_0 = arith.constant 0 : i32
    %c0_i32_1 = arith.constant 0 : i32
    return %arg0, %c0_i32, %c0_i32_0 : i32, i32, i32
  }
  func.func @transform_5(%arg0: i32) -> (i32, i32, i32) {
    %c0_i32 = arith.constant 0 : i32
    %c0_i32_0 = arith.constant 0 : i32
    %c0_i32_1 = arith.constant 0 : i32
    return %arg0, %c0_i32, %c0_i32_0 : i32, i32, i32
  }
  func.func @transform_6(%arg0: i32) -> (i32, i32, i32) {
    %c0_i32 = arith.constant 0 : i32
    %c0_i32_0 = arith.constant 0 : i32
    %c0_i32_1 = arith.constant 0 : i32
    return %arg0, %c0_i32, %c0_i32_0 : i32, i32, i32
  }
  func.func @transform_7(%arg0: i32) -> (i32, i32, i32) {
    %c0_i32 = arith.constant 0 : i32
    %c0_i32_0 = arith.constant 0 : i32
    %c0_i32_1 = arith.constant 0 : i32
    return %arg0, %c0_i32, %c0_i32_0 : i32, i32, i32
  }
  func.func @transform_8(%arg0: i32) -> (i32, i32, i32) {
    %c0_i32 = arith.constant 0 : i32
    %c0_i32_0 = arith.constant 0 : i32
    %c0_i32_1 = arith.constant 0 : i32
    return %arg0, %c0_i32, %c0_i32_0 : i32, i32, i32
  }
  func.func @transform_9(%arg0: i32) -> (i32, i32, i32) {
    %c0_i32 = arith.constant 0 : i32
    %c0_i32_0 = arith.constant 0 : i32
    %c0_i32_1 = arith.constant 0 : i32
    return %arg0, %c0_i32, %c0_i32_0 : i32, i32, i32
  }
  func.func @transform_10(%arg0: i32) -> (i32, i32, i32) {
    %c0_i32 = arith.constant 0 : i32
    %c0_i32_0 = arith.constant 0 : i32
    %c0_i32_1 = arith.constant 0 : i32
    return %arg0, %c0_i32, %c0_i32_0 : i32, i32, i32
  }
  func.func @transform_11(%arg0: i32) -> (i32, i32, i32) {
    %c0_i32 = arith.constant 0 : i32
    %c0_i32_0 = arith.constant 0 : i32
    %c0_i32_1 = arith.constant 0 : i32
    return %arg0, %c0_i32, %c0_i32_0 : i32, i32, i32
  }
  func.func @transform_12(%arg0: i32) -> (i32, i32, i32) {
    %c0_i32 = arith.constant 0 : i32
    %c0_i32_0 = arith.constant 0 : i32
    %c0_i32_1 = arith.constant 0 : i32
    return %arg0, %c0_i32, %c0_i32_0 : i32, i32, i32
  }
  func.func @transform_13(%arg0: i32) -> (i32, i32, i32) {
    %c0_i32 = arith.constant 0 : i32
    %c0_i32_0 = arith.constant 0 : i32
    %c0_i32_1 = arith.constant 0 : i32
    return %arg0, %c0_i32, %c0_i32_0 : i32, i32, i32
  }
  func.func @transform_14(%arg0: i32) -> (i32, i32, i32) {
    %c0_i32 = arith.constant 0 : i32
    %c0_i32_0 = arith.constant 0 : i32
    %c0_i32_1 = arith.constant 0 : i32
    return %arg0, %c0_i32, %c0_i32_0 : i32, i32, i32
  }
  func.func @transform_15(%arg0: i32) -> (i32, i32, i32) {
    %c0_i32 = arith.constant 0 : i32
    %c0_i32_0 = arith.constant 0 : i32
    %c0_i32_1 = arith.constant 0 : i32
    return %arg0, %c0_i32, %c0_i32_0 : i32, i32, i32
  }
  func.func @transform_16(%arg0: i32) -> (i32, i32, i32) {
    %c0_i32 = arith.constant 0 : i32
    %c0_i32_0 = arith.constant 0 : i32
    %c0_i32_1 = arith.constant 0 : i32
    return %arg0, %c0_i32, %c0_i32_0 : i32, i32, i32
  }
  func.func @transform_17(%arg0: i32) -> (i32, i32) {
    %c0_i32 = arith.constant 0 : i32
    %c0_i32_0 = arith.constant 0 : i32
    %c0_i32_1 = arith.constant 0 : i32
    return %c0_i32, %c0_i32_0 : i32, i32
  }
  func.func @transform_18(%arg0: i32) -> (i32, i32) {
    %c0_i32 = arith.constant 0 : i32
    %c0_i32_0 = arith.constant 0 : i32
    %c0_i32_1 = arith.constant 0 : i32
    return %c0_i32, %c0_i32_0 : i32, i32
  }
  func.func @transform_19(%arg0: i32) -> (i32, i32) {
    %c0_i32 = arith.constant 0 : i32
    %c0_i32_0 = arith.constant 0 : i32
    %c0_i32_1 = arith.constant 0 : i32
    return %c0_i32, %c0_i32_0 : i32, i32
  }
}

</mosaic_0001>

<llo_original>
// kernel: transformer_model_forward.2
$region0: #{transformer_model_forward.2}
  #allocation0 [shape = 'u32[]', space=smem, size = 0x4, offset = 0x4, fixed_abs, tag = 'smem constant byte address 0x4 - core index']
  #allocation1 [shape = 'u32[72,128]{1,0:T(1,128)}', space=vmem, size = 0x9000, scoped, tag = 'internal scratch']
  #allocation2 [shape = 'f32[80,4]{1,0:T(8,128)}', space=vmem, size = 0xa000, scoped, tag = 'scratch operand']
  #allocation3 [shape = 'f32[48,128]{1,0:T(8,128)}', space=vmem, size = 0x6000, scoped, tag = 'scratch operand']
  #allocation4 [shape = 'f32[32,96]{1,0:T(8,128)}', space=vmem, size = 0x4000, scoped, tag = 'scratch operand']
  %s0 = inlined_call_operand.vmem [shape: f32[2,64,4], index: 0, kind: input, shape index: {}]
  %s1 = inlined_call_operand.vmem [shape: f32[3,4,128], index: 1, kind: input, shape index: {}]
  %s2 = inlined_call_operand.vmem [shape: f32[1,128], index: 2, kind: input, shape index: {}]
  %s3 = inlined_call_operand.vmem [shape: f32[3,128,96], index: 3, kind: input, shape index: {}]
  %s4 = inlined_call_operand.vmem [shape: f32[1,96], index: 4, kind: input, shape index: {}]
  %s5 = inlined_call_operand.vmem [shape: f32[3,96,32], index: 5, kind: input, shape index: {}]
  %s6 = inlined_call_operand.vmem [shape: f32[1,32], index: 6, kind: input, shape index: {}]
  %s7 = inlined_call_operand.vmem [shape: f32[32,1,32], index: 7, kind: input, shape index: {}]
  %s8 = inlined_call_operand.vmem [shape: f32[2,8,32], index: 8, kind: output, shape index: {}]
  %s9 = sld [smem:[#allocation0]]
  $region65: #{transformer_model_forward.2} parent=0
    _
  %s11 = ssub.s32 1, %s9
  %s12 = scalar_select 0, %s11, %s9
  loop: start=0, step=1, limit=4
  $region2: #{transformer_model_forward.2} parent=0 // loop_pre_header
    _
  $region3: #{transformer_model_forward.2} parent=0 // loop_header
    %s14 = sphi 0, %s18
    %p15 = scmp.ge.s32.totalorder %s14, 4
    %s24 = sphi 0, %s26
    %s27 = sphi 0, %s24
    %s28 = sphi 0, %s27
    %s44 = sphi 0, %s28
    %s48 = sphi 0, %s48
    %s50 = sphi 0, %s48
    %s51 = sphi 0, %s50
    %s65 = sphi 0, %s51
    %s69 = sphi 0, %s69
    %s71 = sphi 0, %s69
    %s72 = sphi 0, %s71
    %s86 = sphi 0, %s72
    %s90 = sphi 0, %s90
    %s92 = sphi 0, %s90
    %s93 = sphi 0, %s92
    %s107 = sphi 0, %s93
    %s111 = sphi 0, %s111
    %s113 = sphi 0, %s111
    %s114 = sphi 0, %s113
    %s128 = sphi 0, %s114
    %s132 = sphi 0, %s132
    %s134 = sphi 0, %s132
    %s135 = sphi 0, %s134
    %s149 = sphi 0, %s135
    %s153 = sphi 0, %s153
    %s155 = sphi 0, %s153
    %s156 = sphi 0, %s155
    %s170 = sphi 0, %s156
    %s176 = sphi 0, %s178
    %s179 = sphi 0, %s176
    %s180 = sphi 0, %s179
    %s196 = sphi 0, %s180
    %s202 = sphi 0, %s204
    %s205 = sphi 0, %s202
    %s206 = sphi 0, %s205
    %s222 = sphi 0, %s206
  $region4: #{transformer_model_forward.2} parent=0 // loop_header_branch
    %17 = sbr.rel (%p15) target = $region8
  $region5: #{transformer_model_forward.2} parent=0 // loop_body
    %s19 = ssub.s32 %s14, 1
    %s20 = ssub.s32 %s14, 2
    %s21 = sadd.s32 %s14, 1
    %s22 = ssub.s32 %s14, %s21
    %p23 = scmp.eq.s32.totalorder %s22, 0
    %s25 = sadd.s32 %s24, 1
    %s26 = scalar_select %p23, %s24, %s25
    %p29 = pneg %p23
    %p30 = scmp.eq.s32.totalorder %s14, 1
    %p31 = por %p29, %p30
    %p32 = scmp.ne.s32.totalorder %s24, %s27
    %p33 = scmp.eq.s32.totalorder %s14, 0
    %p34 = por %p32, %p33
    %p35 = scmp.ne.s32.totalorder %s24, %s27
    %p36 = scmp.eq.s32.totalorder %s19, 1
    %p37 = por %p35, %p36
    %p38 = scmp.ne.s32.totalorder %s27, %s28
    %p39 = scmp.eq.s32.totalorder %s19, 0
    %p40 = por %p38, %p39
    %p41 = scmp.ne.s32.totalorder %s27, %s28
    %p42 = scmp.eq.s32.totalorder %s20, 1
    %p43 = por %p41, %p42
    %p45 = scmp.ne.s32.totalorder %s28, %s44
    %p46 = scmp.eq.s32.totalorder %s20, 0
    %p47 = por %p45, %p46
    %s49 = sadd.s32 %s48, 1
    %p52 = scmp.eq.s32.totalorder %s14, 1
    %p53 = scmp.ne.s32.totalorder %s48, %s50
    %p54 = scmp.eq.s32.totalorder %s14, 0
    %p55 = por %p53, %p54
    %p56 = scmp.ne.s32.totalorder %s48, %s50
    %p57 = scmp.eq.s32.totalorder %s19, 1
    %p58 = por %p56, %p57
    %p59 = scmp.ne.s32.totalorder %s50, %s51
    %p60 = scmp.eq.s32.totalorder %s19, 0
    %p61 = por %p59, %p60
    %p62 = scmp.ne.s32.totalorder %s50, %s51
    %p63 = scmp.eq.s32.totalorder %s20, 1
    %p64 = por %p62, %p63
    %p66 = scmp.ne.s32.totalorder %s51, %s65
    %p67 = scmp.eq.s32.totalorder %s20, 0
    %p68 = por %p66, %p67
    %s70 = sadd.s32 %s69, 1
    %p73 = scmp.eq.s32.totalorder %s14, 1
    %p74 = scmp.ne.s32.totalorder %s69, %s71
    %p75 = scmp.eq.s32.totalorder %s14, 0
    %p76 = por %p74, %p75
    %p77 = scmp.ne.s32.totalorder %s69, %s71
    %p78 = scmp.eq.s32.totalorder %s19, 1
    %p79 = por %p77, %p78
    %p80 = scmp.ne.s32.totalorder %s71, %s72
    %p81 = scmp.eq.s32.totalorder %s19, 0
    %p82 = por %p80, %p81
    %p83 = scmp.ne.s32.totalorder %s71, %s72
    %p84 = scmp.eq.s32.totalorder %s20, 1
    %p85 = por %p83, %p84
    %p87 = scmp.ne.s32.totalorder %s72, %s86
    %p88 = scmp.eq.s32.totalorder %s20, 0
    %p89 = por %p87, %p88
    %s91 = sadd.s32 %s90, 1
    %p94 = scmp.eq.s32.totalorder %s14, 1
    %p95 = scmp.ne.s32.totalorder %s90, %s92
    %p96 = scmp.eq.s32.totalorder %s14, 0
    %p97 = por %p95, %p96
    %p98 = scmp.ne.s32.totalorder %s90, %s92
    %p99 = scmp.eq.s32.totalorder %s19, 1
    %p100 = por %p98, %p99
    %p101 = scmp.ne.s32.totalorder %s92, %s93
    %p102 = scmp.eq.s32.totalorder %s19, 0
    %p103 = por %p101, %p102
    %p104 = scmp.ne.s32.totalorder %s92, %s93
    %p105 = scmp.eq.s32.totalorder %s20, 1
    %p106 = por %p104, %p105
    %p108 = scmp.ne.s32.totalorder %s93, %s107
    %p109 = scmp.eq.s32.totalorder %s20, 0
    %p110 = por %p108, %p109
    %s112 = sadd.s32 %s111, 1
    %p115 = scmp.eq.s32.totalorder %s14, 1
    %p116 = scmp.ne.s32.totalorder %s111, %s113
    %p117 = scmp.eq.s32.totalorder %s14, 0
    %p118 = por %p116, %p117
    %p119 = scmp.ne.s32.totalorder %s111, %s113
    %p120 = scmp.eq.s32.totalorder %s19, 1
    %p121 = por %p119, %p120
    %p122 = scmp.ne.s32.totalorder %s113, %s114
    %p123 = scmp.eq.s32.totalorder %s19, 0
    %p124 = por %p122, %p123
    %p125 = scmp.ne.s32.totalorder %s113, %s114
    %p126 = scmp.eq.s32.totalorder %s20, 1
    %p127 = por %p125, %p126
    %p129 = scmp.ne.s32.totalorder %s114, %s128
    %p130 = scmp.eq.s32.totalorder %s20, 0
    %p131 = por %p129, %p130
    %s133 = sadd.s32 %s132, 1
    %p136 = scmp.eq.s32.totalorder %s14, 1
    %p137 = scmp.ne.s32.totalorder %s132, %s134
    %p138 = scmp.eq.s32.totalorder %s14, 0
    %p139 = por %p137, %p138
    %p140 = scmp.ne.s32.totalorder %s132, %s134
    %p141 = scmp.eq.s32.totalorder %s19, 1
    %p142 = por %p140, %p141
    %p143 = scmp.ne.s32.totalorder %s134, %s135
    %p144 = scmp.eq.s32.totalorder %s19, 0
    %p145 = por %p143, %p144
    %p146 = scmp.ne.s32.totalorder %s134, %s135
    %p147 = scmp.eq.s32.totalorder %s20, 1
    %p148 = por %p146, %p147
    %p150 = scmp.ne.s32.totalorder %s135, %s149
    %p151 = scmp.eq.s32.totalorder %s20, 0
    %p152 = por %p150, %p151
    %s154 = sadd.s32 %s153, 1
    %p157 = scmp.eq.s32.totalorder %s14, 1
    %p158 = scmp.ne.s32.totalorder %s153, %s155
    %p159 = scmp.eq.s32.totalorder %s14, 0
    %p160 = por %p158, %p159
    %p161 = scmp.ne.s32.totalorder %s153, %s155
    %p162 = scmp.eq.s32.totalorder %s19, 1
    %p163 = por %p161, %p162
    %p164 = scmp.ne.s32.totalorder %s155, %s156
    %p165 = scmp.eq.s32.totalorder %s19, 0
    %p166 = por %p164, %p165
    %p167 = scmp.ne.s32.totalorder %s155, %s156
    %p168 = scmp.eq.s32.totalorder %s20, 1
    %p169 = por %p167, %p168
    %p171 = scmp.ne.s32.totalorder %s156, %s170
    %p172 = scmp.eq.s32.totalorder %s20, 0
    %p173 = por %p171, %p172
    %s174 = ssub.s32 %s14, %s21
    %p175 = scmp.eq.s32.totalorder %s174, 0
    %s177 = sadd.s32 %s176, 1
    %s178 = scalar_select %p175, %s176, %s177
    %p181 = pneg %p175
    %p182 = scmp.eq.s32.totalorder %s14, 1
    %p183 = por %p181, %p182
    %p184 = scmp.ne.s32.totalorder %s176, %s179
    %p185 = scmp.eq.s32.totalorder %s14, 0
    %p186 = por %p184, %p185
    %p187 = scmp.ne.s32.totalorder %s176, %s179
    %p188 = scmp.eq.s32.totalorder %s19, 1
    %p189 = por %p187, %p188
    %p190 = scmp.ne.s32.totalorder %s179, %s180
    %p191 = scmp.eq.s32.totalorder %s19, 0
    %p192 = por %p190, %p191
    %p193 = scmp.ne.s32.totalorder %s179, %s180
    %p194 = scmp.eq.s32.totalorder %s20, 1
    %p195 = por %p193, %p194
    %p197 = scmp.ne.s32.totalorder %s180, %s196
    %p198 = scmp.eq.s32.totalorder %s20, 0
    %p199 = por %p197, %p198
    %s200 = ssub.s32 %s14, %s21
    %p201 = scmp.eq.s32.totalorder %s200, 0
    %s203 = sadd.s32 %s202, 1
    %s204 = scalar_select %p201, %s202, %s203
    %p207 = pneg %p201
    %p208 = scmp.eq.s32.totalorder %s14, 1
    %p209 = por %p207, %p208
    %p210 = scmp.ne.s32.totalorder %s202, %s205
    %p211 = scmp.eq.s32.totalorder %s14, 0
    %p212 = por %p210, %p211
    %p213 = scmp.ne.s32.totalorder %s202, %s205
    %p214 = scmp.eq.s32.totalorder %s19, 1
    %p215 = por %p213, %p214
    %p216 = scmp.ne.s32.totalorder %s205, %s206
    %p217 = scmp.eq.s32.totalorder %s19, 0
    %p218 = por %p216, %p217
    %p219 = scmp.ne.s32.totalorder %s205, %s206
    %p220 = scmp.eq.s32.totalorder %s20, 1
    %p221 = por %p219, %p220
    %p223 = scmp.ne.s32.totalorder %s206, %s222
    %p224 = scmp.eq.s32.totalorder %s20, 0
    %p225 = por %p223, %p224
    %p226 = scmp.le.s32.totalorder 1, %s14
    %p227 = scmp.lt.s32.totalorder %s14, 3
    %p228 = pnand %p226, %p227
    %p229 = pneg %p228
    // Predicated region
    $region9: #{transformer_model_forward.2} parent=5 // pred_check
      _
    $region10: #{transformer_model_forward.2} parent=5 // pred_check_branch
      %231 = sbr.rel (%p228) target = $region12
    $region11: #{transformer_model_forward.2} parent=5 // pred_region
      %s232 = ssub.s32 %s14, 1
      // Predicated region
      $region13: #{transformer_model_forward.2} parent=11 // pred_check
        %p233 = pneg %p61
      $region14: #{transformer_model_forward.2} parent=11 // pred_check_branch
        %235 = sbr.rel (%p233) target = $region16
      $region15: #{transformer_model_forward.2} parent=11 // pred_region
        _
      $region16: #{transformer_model_forward.2} parent=11 // pred_fallthru
        _
      // Predicated region
      $region17: #{transformer_model_forward.2} parent=11 // pred_check
        %p236 = pneg %p82
      $region18: #{transformer_model_forward.2} parent=11 // pred_check_branch
        %238 = sbr.rel (%p236) target = $region20
      $region19: #{transformer_model_forward.2} parent=11 // pred_region
        _
      $region20: #{transformer_model_forward.2} parent=11 // pred_fallthru
        _
      // Predicated region
      $region21: #{transformer_model_forward.2} parent=11 // pred_check
        %p239 = pneg %p103
      $region22: #{transformer_model_forward.2} parent=11 // pred_check_branch
        %241 = sbr.rel (%p239) target = $region24
      $region23: #{transformer_model_forward.2} parent=11 // pred_region
        _
      $region24: #{transformer_model_forward.2} parent=11 // pred_fallthru
        _
      // Predicated region
      $region25: #{transformer_model_forward.2} parent=11 // pred_check
        %p242 = pneg %p124
      $region26: #{transformer_model_forward.2} parent=11 // pred_check_branch
        %244 = sbr.rel (%p242) target = $region28
      $region27: #{transformer_model_forward.2} parent=11 // pred_region
        _
      $region28: #{transformer_model_forward.2} parent=11 // pred_fallthru
        _
      // Predicated region
      $region29: #{transformer_model_forward.2} parent=11 // pred_check
        %p245 = pneg %p145
      $region30: #{transformer_model_forward.2} parent=11 // pred_check_branch
        %247 = sbr.rel (%p245) target = $region32
      $region31: #{transformer_model_forward.2} parent=11 // pred_region
        _
      $region32: #{transformer_model_forward.2} parent=11 // pred_fallthru
        _
      // Predicated region
      $region33: #{transformer_model_forward.2} parent=11 // pred_check
        %p248 = pneg %p166
      $region34: #{transformer_model_forward.2} parent=11 // pred_check_branch
        %250 = sbr.rel (%p248) target = $region36
      $region35: #{transformer_model_forward.2} parent=11 // pred_region
        _
      $region36: #{transformer_model_forward.2} parent=11 // pred_fallthru
        _
    $region12: #{transformer_model_forward.2} parent=5 // pred_fallthru
      _
    %p251 = scmp.lt.s32.totalorder %s14, 2
    // Predicated region
    $region37: #{transformer_model_forward.2} parent=5 // pred_check
      %p252 = pneg %p251
    $region38: #{transformer_model_forward.2} parent=5 // pred_check_branch
      %254 = sbr.rel (%p252) target = $region40
    $region39: #{transformer_model_forward.2} parent=5 // pred_region
      // Predicated region
      $region41: #{transformer_model_forward.2} parent=39 // pred_check
        %p255 = pneg %p34
      $region42: #{transformer_model_forward.2} parent=39 // pred_check_branch
        %257 = sbr.rel (%p255) target = $region44
      $region43: #{transformer_model_forward.2} parent=39 // pred_region
        %p258 = scmp.lt.s32.totalorder %s14, 1
        %s259 = scalar_select %p258, %s14, 1
        %s260 = smul.addr %s259, 8
        %s261 = smul.addr %s260, 8
        %s262 = scalar_lea.vmem %s0, %s261
      $region44: #{transformer_model_forward.2} parent=39 // pred_fallthru
        _
      // Predicated region
      $region45: #{transformer_model_forward.2} parent=39 // pred_check
        %p263 = pneg %p186
      $region46: #{transformer_model_forward.2} parent=39 // pred_check_branch
        %265 = sbr.rel (%p263) target = $region48
      $region47: #{transformer_model_forward.2} parent=39 // pred_region
        %p266 = scmp.lt.s32.totalorder %s14, 31
        %s267 = scalar_select %p266, %s14, 31
        %s268 = scalar_lea.vmem %s7, %s267
      $region48: #{transformer_model_forward.2} parent=39 // pred_fallthru
        _
    $region40: #{transformer_model_forward.2} parent=5 // pred_fallthru
      _
    %p269 = scmp.le.s32.totalorder 1, %s14
    %p270 = scmp.lt.s32.totalorder %s14, 3
    %p271 = pnand %p269, %p270
    %p272 = pneg %p271
    // Predicated region
    $region49: #{transformer_model_forward.2} parent=5 // pred_check
      _
    $region50: #{transformer_model_forward.2} parent=5 // pred_check_branch
      %274 = sbr.rel (%p271) target = $region52
    $region51: #{transformer_model_forward.2} parent=5 // pred_region
      %s275 = ssub.s32 %s14, 1
      %p276 = scmp.lt.s32.totalorder %s19, 1
      %s277 = scalar_select %p276, %s19, 1
      %s278 = smul.addr %s277, 8
      %s279 = smul.addr %s278, 8
      %s280 = scalar_lea.vmem %s0, %s279
      %p281 = pneg %p40
      %p282 = pneg %p37
      %p283 = pneg %p61
      %p284 = pneg %p58
      %p285 = pneg %p82
      %p286 = pneg %p79
      %p287 = pneg %p103
      %p288 = pneg %p100
      %p289 = pneg %p124
      %p290 = pneg %p121
      %p291 = pneg %p145
      %p292 = pneg %p142
      %p293 = pneg %p166
      %p294 = pneg %p163
      %p295 = scmp.lt.s32.totalorder %s19, 31
      %s296 = scalar_select %p295, %s19, 31
      %s297 = scalar_lea.vmem %s7, %s296
      %p298 = pneg %p192
      %p299 = pneg %p189
      %p300 = pneg %p218
      %p301 = pneg %p215
      %p302 = scmp.lt.s32.totalorder %s19, 1
      %s303 = scalar_select %p302, %s19, 1
      %s304 = smul.addr %s303, 8
      %s305 = scalar_lea.vmem %s8, %s304
      %p306 = scmp.lt.s32.totalorder %s19, 1
      %s307 = scalar_select %p306, %s19, 1
      %s308 = smul.addr %s307, 8
      %s309 = smul.addr %s308, 8
      %s310 = scalar_lea.vmem %s0, %s309
      %p311 = scmp.lt.s32.totalorder %s19, 31
      %s312 = scalar_select %p311, %s19, 31
      %s313 = scalar_lea.vmem %s7, %s312
      %p314 = scmp.lt.s32.totalorder %s19, 1
      %s315 = scalar_select %p314, %s19, 1
      %s316 = smul.addr %s315, 8
      %s317 = scalar_lea.vmem %s8, %s316
      %v318 = vld [vmem:[%s310] sm:$0xff]
      %v319 = vld [vmem:[%s310 + $0x8] sm:$0xff]
      %v320 = vld [vmem:[%s310 + $0x10] sm:$0xff]
      %v321 = vld [vmem:[%s310 + $0x18] sm:$0xff]
      %v322 = vld [vmem:[%s310 + $0x20] sm:$0xff]
      %v323 = vld [vmem:[%s310 + $0x28] sm:$0xff]
      %v324 = vld [vmem:[%s310 + $0x30] sm:$0xff]
      %v325 = vld [vmem:[%s310 + $0x38] sm:$0xff]
      %vm326 = vcmask 31744
      %327 = vst.msk [vmem:[#allocation2] sm:$0xff] %vm326, 0.0
      %328 = vst.msk [vmem:[#allocation2 + $0x48] sm:$0xff] %vm326, 0.0
      %329 = vst.msk [vmem:[#allocation2 + $0x8] sm:$0xff] %vm326, %v318
      %330 = vst.msk [vmem:[#allocation2 + $0x10] sm:$0xff] %vm326, %v319
      %331 = vst.msk [vmem:[#allocation2 + $0x18] sm:$0xff] %vm326, %v320
      %332 = vst.msk [vmem:[#allocation2 + $0x20] sm:$0xff] %vm326, %v321
      %333 = vst.msk [vmem:[#allocation2 + $0x28] sm:$0xff] %vm326, %v322
      %334 = vst.msk [vmem:[#allocation2 + $0x30] sm:$0xff] %vm326, %v323
      %335 = vst.msk [vmem:[#allocation2 + $0x38] sm:$0xff] %vm326, %v324
      %336 = vst.msk [vmem:[#allocation2 + $0x40] sm:$0xff] %vm326, %v325
      %v337 = vld [vmem:[#allocation2 + $0x7] sm:$0xff]
      %v338 = vld [vmem:[#allocation2 + $0xf] sm:$0xff]
      %v339 = vld [vmem:[#allocation2 + $0x17] sm:$0xff]
      %v340 = vld [vmem:[#allocation2 + $0x1f] sm:$0xff]
      %v341 = vld [vmem:[#allocation2 + $0x27] sm:$0xff]
      %v342 = vld [vmem:[#allocation2 + $0x2f] sm:$0xff]
      %v343 = vld [vmem:[#allocation2 + $0x37] sm:$0xff]
      %v344 = vld [vmem:[#allocation2 + $0x3f] sm:$0xff]
      %v345 = vld [vmem:[%s1] sm:$0xf]
      %v346 = vld [vmem:[#allocation2 + $0x8] sm:$0xff]
      %v347 = vld [vmem:[#allocation2 + $0x10] sm:$0xff]
      %v348 = vld [vmem:[#allocation2 + $0x18] sm:$0xff]
      %v349 = vld [vmem:[#allocation2 + $0x20] sm:$0xff]
      %v350 = vld [vmem:[#allocation2 + $0x28] sm:$0xff]
      %v351 = vld [vmem:[#allocation2 + $0x30] sm:$0xff]
      %v352 = vld [vmem:[#allocation2 + $0x38] sm:$0xff]
      %v353 = vld [vmem:[#allocation2 + $0x40] sm:$0xff]
      %s354 = scalar_lea.vmem %s1, 4
      %v355 = vld [vmem:[%s354] sm:$0xf]
      %v357 = vsel %vm326, %v346, 0
      %v360 = vsel %vm326, %v347, 0
      %v363 = vsel %vm326, %v348, 0
      %v366 = vsel %vm326, %v349, 0
      %v369 = vsel %vm326, %v350, 0
      %v372 = vsel %vm326, %v351, 0
      %v375 = vsel %vm326, %v352, 0
      %v378 = vsel %vm326, %v353, 0
      %vm380 = vcmask 1043456
      %v382 = vsel %vm380, %v355, 0
      %384 = vmatpush.msra.mxu0 0.0
      %385 = vmatpush.msra.mxu0 0.0
      %386 = vmatpush.msra.mxu0 0.0
      %387 = vmatpush.msra.mxu0 0.0
      %388 = vmatpush.msra.mxu0 0.0
      %389 = vmatpush.msra.mxu0 0.0
      %390 = vmatpush.msra.mxu0 0.0
      %391 = vmatpush.msra.mxu0 0.0
      %392 = vmatpush.msra.mxu0 0.0
      %393 = vmatpush.msra.mxu0 0.0
      %394 = vmatpush.msra.mxu0 0.0
      %395 = vmatpush.msra.mxu0 0.0
      %396 = vmatpush.msra.mxu0 0.0
      %397 = vmatpush.msra.mxu0 0.0
      %398 = vmatpush.msra.mxu0 0.0
      %399 = vmatpush.msra.mxu0 %v382
      %400 = vmatmul.f32.gmra.mxu0 %v357
      %v401 = vpop.f32.mrf.mxu0
      %v402 = vadd.f32 0.0, %v401
      %403 = vmatmul.f32.gmra.mxu0 %v360
      %v404 = vpop.f32.mrf.mxu0
      %v405 = vadd.f32 0.0, %v404
      %406 = vmatmul.f32.gmra.mxu0 %v363
      %v407 = vpop.f32.mrf.mxu0
      %v408 = vadd.f32 0.0, %v407
      %409 = vmatmul.f32.gmra.mxu0 %v366
      %v410 = vpop.f32.mrf.mxu0
      %v411 = vadd.f32 0.0, %v410
      %412 = vmatmul.f32.gmra.mxu0 %v369
      %v413 = vpop.f32.mrf.mxu0
      %v414 = vadd.f32 0.0, %v413
      %415 = vmatmul.f32.gmra.mxu0 %v372
      %v416 = vpop.f32.mrf.mxu0
      %v417 = vadd.f32 0.0, %v416
      %418 = vmatmul.f32.gmra.mxu0 %v375
      %v419 = vpop.f32.mrf.mxu0
      %v420 = vadd.f32 0.0, %v419
      %421 = vmatmul.f32.gmra.mxu0 %v378
      %v422 = vpop.f32.mrf.mxu0
      %v423 = vadd.f32 0.0, %v422
      %424 = vdwg.mxu0
      %v426 = vsel %vm326, %v337, 0
      %v429 = vsel %vm326, %v338, 0
      %v432 = vsel %vm326, %v339, 0
      %v435 = vsel %vm326, %v340, 0
      %v438 = vsel %vm326, %v341, 0
      %v441 = vsel %vm326, %v342, 0
      %v444 = vsel %vm326, %v343, 0
      %v447 = vsel %vm326, %v344, 0
      %v450 = vsel %vm380, %v345, 0
      %452 = vmatpush.msra.mxu0 0.0
      %453 = vmatpush.msra.mxu0 0.0
      %454 = vmatpush.msra.mxu0 0.0
      %455 = vmatpush.msra.mxu0 0.0
      %456 = vmatpush.msra.mxu0 0.0
      %457 = vmatpush.msra.mxu0 0.0
      %458 = vmatpush.msra.mxu0 0.0
      %459 = vmatpush.msra.mxu0 0.0
      %460 = vmatpush.msra.mxu0 0.0
      %461 = vmatpush.msra.mxu0 0.0
      %462 = vmatpush.msra.mxu0 0.0
      %463 = vmatpush.msra.mxu0 0.0
      %464 = vmatpush.msra.mxu0 0.0
      %465 = vmatpush.msra.mxu0 0.0
      %466 = vmatpush.msra.mxu0 0.0
      %467 = vmatpush.msra.mxu0 %v450
      %468 = vmatmul.f32.gmra.mxu0 %v426
      %v469 = vpop.f32.mrf.mxu0
      %v470 = vadd.f32 %v402, %v469
      %471 = vmatmul.f32.gmra.mxu0 %v429
      %v472 = vpop.f32.mrf.mxu0
      %v473 = vadd.f32 %v405, %v472
      %474 = vmatmul.f32.gmra.mxu0 %v432
      %v475 = vpop.f32.mrf.mxu0
      %v476 = vadd.f32 %v408, %v475
      %477 = vmatmul.f32.gmra.mxu0 %v435
      %v478 = vpop.f32.mrf.mxu0
      %v479 = vadd.f32 %v411, %v478
      %480 = vmatmul.f32.gmra.mxu0 %v438
      %v481 = vpop.f32.mrf.mxu0
      %v482 = vadd.f32 %v414, %v481
      %483 = vmatmul.f32.gmra.mxu0 %v441
      %v484 = vpop.f32.mrf.mxu0
      %v485 = vadd.f32 %v417, %v484
      %486 = vmatmul.f32.gmra.mxu0 %v444
      %v487 = vpop.f32.mrf.mxu0
      %v488 = vadd.f32 %v420, %v487
      %489 = vmatmul.f32.gmra.mxu0 %v447
      %v490 = vpop.f32.mrf.mxu0
      %v491 = vadd.f32 %v423, %v490
      %492 = vdwg.mxu0
      %v493 = vld [vmem:[#allocation2 + $0x9] sm:$0xff]
      %v494 = vld [vmem:[#allocation2 + $0x11] sm:$0xff]
      %v495 = vld [vmem:[#allocation2 + $0x19] sm:$0xff]
      %v496 = vld [vmem:[#allocation2 + $0x21] sm:$0xff]
      %v497 = vld [vmem:[#allocation2 + $0x29] sm:$0xff]
      %v498 = vld [vmem:[#allocation2 + $0x31] sm:$0xff]
      %v499 = vld [vmem:[#allocation2 + $0x39] sm:$0xff]
      %v500 = vld [vmem:[#allocation2 + $0x41] sm:$0xff]
      %s501 = scalar_lea.vmem %s1, 8
      %v502 = vld [vmem:[%s501] sm:$0xf]
      %v504 = vsel %vm326, %v493, 0
      %v507 = vsel %vm326, %v494, 0
      %v510 = vsel %vm326, %v495, 0
      %v513 = vsel %vm326, %v496, 0
      %v516 = vsel %vm326, %v497, 0
      %v519 = vsel %vm326, %v498, 0
      %v522 = vsel %vm326, %v499, 0
      %v525 = vsel %vm326, %v500, 0
      %v528 = vsel %vm380, %v502, 0
      %530 = vmatpush.msra.mxu0 0.0
      %531 = vmatpush.msra.mxu0 0.0
      %532 = vmatpush.msra.mxu0 0.0
      %533 = vmatpush.msra.mxu0 0.0
      %534 = vmatpush.msra.mxu0 0.0
      %535 = vmatpush.msra.mxu0 0.0
      %536 = vmatpush.msra.mxu0 0.0
      %537 = vmatpush.msra.mxu0 0.0
      %538 = vmatpush.msra.mxu0 0.0
      %539 = vmatpush.msra.mxu0 0.0
      %540 = vmatpush.msra.mxu0 0.0
      %541 = vmatpush.msra.mxu0 0.0
      %542 = vmatpush.msra.mxu0 0.0
      %543 = vmatpush.msra.mxu0 0.0
      %544 = vmatpush.msra.mxu0 0.0
      %545 = vmatpush.msra.mxu0 %v528
      %546 = vmatmul.f32.gmra.mxu0 %v504
      %v547 = vpop.f32.mrf.mxu0
      %v548 = vadd.f32 0.0, %v547
      %549 = vmatmul.f32.gmra.mxu0 %v507
      %v550 = vpop.f32.mrf.mxu0
      %v551 = vadd.f32 0.0, %v550
      %552 = vmatmul.f32.gmra.mxu0 %v510
      %v553 = vpop.f32.mrf.mxu0
      %v554 = vadd.f32 0.0, %v553
      %555 = vmatmul.f32.gmra.mxu0 %v513
      %v556 = vpop.f32.mrf.mxu0
      %v557 = vadd.f32 0.0, %v556
      %558 = vmatmul.f32.gmra.mxu0 %v516
      %v559 = vpop.f32.mrf.mxu0
      %v560 = vadd.f32 0.0, %v559
      %561 = vmatmul.f32.gmra.mxu0 %v519
      %v562 = vpop.f32.mrf.mxu0
      %v563 = vadd.f32 0.0, %v562
      %564 = vmatmul.f32.gmra.mxu0 %v522
      %v565 = vpop.f32.mrf.mxu0
      %v566 = vadd.f32 0.0, %v565
      %567 = vmatmul.f32.gmra.mxu0 %v525
      %v568 = vpop.f32.mrf.mxu0
      %v569 = vadd.f32 0.0, %v568
      %570 = vdwg.mxu0
      %v571 = vadd.f32 %v470, %v548
      %v572 = vadd.f32 %v473, %v551
      %v573 = vadd.f32 %v476, %v554
      %v574 = vadd.f32 %v479, %v557
      %v575 = vadd.f32 %v482, %v560
      %v576 = vadd.f32 %v485, %v563
      %v577 = vadd.f32 %v488, %v566
      %v578 = vadd.f32 %v491, %v569
      %v579 = vld [vmem:[%s2] sm:$0x1]
      %v581 = vperm.slane %v579, 0
      %v583 = vadd.f32 %v571, %v581
      %v584 = vadd.f32 %v572, %v581
      %v585 = vadd.f32 %v573, %v581
      %v586 = vadd.f32 %v574, %v581
      %v587 = vadd.f32 %v575, %v581
      %v588 = vadd.f32 %v576, %v581
      %v589 = vadd.f32 %v577, %v581
      %v590 = vadd.f32 %v578, %v581
      %v591 = vmax.f32 %v583, 0.0
      %v592 = vmax.f32 %v584, 0.0
      %v593 = vmax.f32 %v585, 0.0
      %v594 = vmax.f32 %v586, 0.0
      %v595 = vmax.f32 %v587, 0.0
      %v596 = vmax.f32 %v588, 0.0
      %v597 = vmax.f32 %v589, 0.0
      %v598 = vmax.f32 %v590, 0.0
      %v607 = vrot.slane %v591, 2
      %v608 = vrot.slane %v591, 4
      %v609 = vrot.slane %v591, 6
      %v610 = vrot.slane %v592, 2
      %v611 = vrot.slane %v592, 4
      %v612 = vrot.slane %v592, 6
      %v613 = vrot.slane %v593, 2
      %v614 = vrot.slane %v593, 4
      %v615 = vrot.slane %v593, 6
      %v616 = vrot.slane %v594, 2
      %v617 = vrot.slane %v594, 4
      %v618 = vrot.slane %v594, 6
      %v619 = vrot.slane %v595, 2
      %v620 = vrot.slane %v595, 4
      %v621 = vrot.slane %v595, 6
      %v622 = vrot.slane %v596, 2
      %v623 = vrot.slane %v596, 4
      %v624 = vrot.slane %v596, 6
      %v625 = vrot.slane %v597, 2
      %v626 = vrot.slane %v597, 4
      %v627 = vrot.slane %v597, 6
      %v628 = vrot.slane %v598, 2
      %v629 = vrot.slane %v598, 4
      %v630 = vrot.slane %v598, 6
      %vm655 = vcmask 1041408
      %v656 = vsel %vm655, %v591, -inf
      %v657 = vrot.slane %v656, 4
      %v658 = vmax.f32 %v656, %v657
      %v659 = vrot.slane %v658, 2
      %v660 = vmax.f32 %v658, %v659
      %v661 = vrot.slane %v660, 1
      %v662 = vmax.f32 %v660, %v661
      %v663 = vsel %vm655, %v607, -inf
      %v664 = vrot.slane %v663, 4
      %v665 = vmax.f32 %v663, %v664
      %v666 = vrot.slane %v665, 2
      %v667 = vmax.f32 %v665, %v666
      %v668 = vrot.slane %v667, 1
      %v669 = vmax.f32 %v667, %v668
      %v670 = vsel %vm655, %v608, -inf
      %v671 = vrot.slane %v670, 4
      %v672 = vmax.f32 %v670, %v671
      %v673 = vrot.slane %v672, 2
      %v674 = vmax.f32 %v672, %v673
      %v675 = vrot.slane %v674, 1
      %v676 = vmax.f32 %v674, %v675
      %v677 = vsel %vm655, %v609, -inf
      %v678 = vrot.slane %v677, 4
      %v679 = vmax.f32 %v677, %v678
      %v680 = vrot.slane %v679, 2
      %v681 = vmax.f32 %v679, %v680
      %v682 = vrot.slane %v681, 1
      %v683 = vmax.f32 %v681, %v682
      %v684 = vsel %vm655, %v592, -inf
      %v685 = vrot.slane %v684, 4
      %v686 = vmax.f32 %v684, %v685
      %v687 = vrot.slane %v686, 2
      %v688 = vmax.f32 %v686, %v687
      %v689 = vrot.slane %v688, 1
      %v690 = vmax.f32 %v688, %v689
      %v691 = vsel %vm655, %v610, -inf
      %v692 = vrot.slane %v691, 4
      %v693 = vmax.f32 %v691, %v692
      %v694 = vrot.slane %v693, 2
      %v695 = vmax.f32 %v693, %v694
      %v696 = vrot.slane %v695, 1
      %v697 = vmax.f32 %v695, %v696
      %v698 = vsel %vm655, %v611, -inf
      %v699 = vrot.slane %v698, 4
      %v700 = vmax.f32 %v698, %v699
      %v701 = vrot.slane %v700, 2
      %v702 = vmax.f32 %v700, %v701
      %v703 = vrot.slane %v702, 1
      %v704 = vmax.f32 %v702, %v703
      %v705 = vsel %vm655, %v612, -inf
      %v706 = vrot.slane %v705, 4
      %v707 = vmax.f32 %v705, %v706
      %v708 = vrot.slane %v707, 2
      %v709 = vmax.f32 %v707, %v708
      %v710 = vrot.slane %v709, 1
      %v711 = vmax.f32 %v709, %v710
      %v712 = vsel %vm655, %v593, -inf
      %v713 = vrot.slane %v712, 4
      %v714 = vmax.f32 %v712, %v713
      %v715 = vrot.slane %v714, 2
      %v716 = vmax.f32 %v714, %v715
      %v717 = vrot.slane %v716, 1
      %v718 = vmax.f32 %v716, %v717
      %v719 = vsel %vm655, %v613, -inf
      %v720 = vrot.slane %v719, 4
      %v721 = vmax.f32 %v719, %v720
      %v722 = vrot.slane %v721, 2
      %v723 = vmax.f32 %v721, %v722
      %v724 = vrot.slane %v723, 1
      %v725 = vmax.f32 %v723, %v724
      %v726 = vsel %vm655, %v614, -inf
      %v727 = vrot.slane %v726, 4
      %v728 = vmax.f32 %v726, %v727
      %v729 = vrot.slane %v728, 2
      %v730 = vmax.f32 %v728, %v729
      %v731 = vrot.slane %v730, 1
      %v732 = vmax.f32 %v730, %v731
      %v733 = vsel %vm655, %v615, -inf
      %v734 = vrot.slane %v733, 4
      %v735 = vmax.f32 %v733, %v734
      %v736 = vrot.slane %v735, 2
      %v737 = vmax.f32 %v735, %v736
      %v738 = vrot.slane %v737, 1
      %v739 = vmax.f32 %v737, %v738
      %v740 = vsel %vm655, %v594, -inf
      %v741 = vrot.slane %v740, 4
      %v742 = vmax.f32 %v740, %v741
      %v743 = vrot.slane %v742, 2
      %v744 = vmax.f32 %v742, %v743
      %v745 = vrot.slane %v744, 1
      %v746 = vmax.f32 %v744, %v745
      %v747 = vsel %vm655, %v616, -inf
      %v748 = vrot.slane %v747, 4
      %v749 = vmax.f32 %v747, %v748
      %v750 = vrot.slane %v749, 2
      %v751 = vmax.f32 %v749, %v750
      %v752 = vrot.slane %v751, 1
      %v753 = vmax.f32 %v751, %v752
      %v754 = vsel %vm655, %v617, -inf
      %v755 = vrot.slane %v754, 4
      %v756 = vmax.f32 %v754, %v755
      %v757 = vrot.slane %v756, 2
      %v758 = vmax.f32 %v756, %v757
      %v759 = vrot.slane %v758, 1
      %v760 = vmax.f32 %v758, %v759
      %v761 = vsel %vm655, %v618, -inf
      %v762 = vrot.slane %v761, 4
      %v763 = vmax.f32 %v761, %v762
      %v764 = vrot.slane %v763, 2
      %v765 = vmax.f32 %v763, %v764
      %v766 = vrot.slane %v765, 1
      %v767 = vmax.f32 %v765, %v766
      %v768 = vsel %vm655, %v595, -inf
      %v769 = vrot.slane %v768, 4
      %v770 = vmax.f32 %v768, %v769
      %v771 = vrot.slane %v770, 2
      %v772 = vmax.f32 %v770, %v771
      %v773 = vrot.slane %v772, 1
      %v774 = vmax.f32 %v772, %v773
      %v775 = vsel %vm655, %v619, -inf
      %v776 = vrot.slane %v775, 4
      %v777 = vmax.f32 %v775, %v776
      %v778 = vrot.slane %v777, 2
      %v779 = vmax.f32 %v777, %v778
      %v780 = vrot.slane %v779, 1
      %v781 = vmax.f32 %v779, %v780
      %v782 = vsel %vm655, %v620, -inf
      %v783 = vrot.slane %v782, 4
      %v784 = vmax.f32 %v782, %v783
      %v785 = vrot.slane %v784, 2
      %v786 = vmax.f32 %v784, %v785
      %v787 = vrot.slane %v786, 1
      %v788 = vmax.f32 %v786, %v787
      %v789 = vsel %vm655, %v621, -inf
      %v790 = vrot.slane %v789, 4
      %v791 = vmax.f32 %v789, %v790
      %v792 = vrot.slane %v791, 2
      %v793 = vmax.f32 %v791, %v792
      %v794 = vrot.slane %v793, 1
      %v795 = vmax.f32 %v793, %v794
      %v796 = vsel %vm655, %v596, -inf
      %v797 = vrot.slane %v796, 4
      %v798 = vmax.f32 %v796, %v797
      %v799 = vrot.slane %v798, 2
      %v800 = vmax.f32 %v798, %v799
      %v801 = vrot.slane %v800, 1
      %v802 = vmax.f32 %v800, %v801
      %v803 = vsel %vm655, %v622, -inf
      %v804 = vrot.slane %v803, 4
      %v805 = vmax.f32 %v803, %v804
      %v806 = vrot.slane %v805, 2
      %v807 = vmax.f32 %v805, %v806
      %v808 = vrot.slane %v807, 1
      %v809 = vmax.f32 %v807, %v808
      %v810 = vsel %vm655, %v623, -inf
      %v811 = vrot.slane %v810, 4
      %v812 = vmax.f32 %v810, %v811
      %v813 = vrot.slane %v812, 2
      %v814 = vmax.f32 %v812, %v813
      %v815 = vrot.slane %v814, 1
      %v816 = vmax.f32 %v814, %v815
      %v817 = vsel %vm655, %v624, -inf
      %v818 = vrot.slane %v817, 4
      %v819 = vmax.f32 %v817, %v818
      %v820 = vrot.slane %v819, 2
      %v821 = vmax.f32 %v819, %v820
      %v822 = vrot.slane %v821, 1
      %v823 = vmax.f32 %v821, %v822
      %v824 = vsel %vm655, %v597, -inf
      %v825 = vrot.slane %v824, 4
      %v826 = vmax.f32 %v824, %v825
      %v827 = vrot.slane %v826, 2
      %v828 = vmax.f32 %v826, %v827
      %v829 = vrot.slane %v828, 1
      %v830 = vmax.f32 %v828, %v829
      %v831 = vsel %vm655, %v625, -inf
      %v832 = vrot.slane %v831, 4
      %v833 = vmax.f32 %v831, %v832
      %v834 = vrot.slane %v833, 2
      %v835 = vmax.f32 %v833, %v834
      %v836 = vrot.slane %v835, 1
      %v837 = vmax.f32 %v835, %v836
      %v838 = vsel %vm655, %v626, -inf
      %v839 = vrot.slane %v838, 4
      %v840 = vmax.f32 %v838, %v839
      %v841 = vrot.slane %v840, 2
      %v842 = vmax.f32 %v840, %v841
      %v843 = vrot.slane %v842, 1
      %v844 = vmax.f32 %v842, %v843
      %v845 = vsel %vm655, %v627, -inf
      %v846 = vrot.slane %v845, 4
      %v847 = vmax.f32 %v845, %v846
      %v848 = vrot.slane %v847, 2
      %v849 = vmax.f32 %v847, %v848
      %v850 = vrot.slane %v849, 1
      %v851 = vmax.f32 %v849, %v850
      %v852 = vsel %vm655, %v598, -inf
      %v853 = vrot.slane %v852, 4
      %v854 = vmax.f32 %v852, %v853
      %v855 = vrot.slane %v854, 2
      %v856 = vmax.f32 %v854, %v855
      %v857 = vrot.slane %v856, 1
      %v858 = vmax.f32 %v856, %v857
      %v859 = vsel %vm655, %v628, -inf
      %v860 = vrot.slane %v859, 4
      %v861 = vmax.f32 %v859, %v860
      %v862 = vrot.slane %v861, 2
      %v863 = vmax.f32 %v861, %v862
      %v864 = vrot.slane %v863, 1
      %v865 = vmax.f32 %v863, %v864
      %v866 = vsel %vm655, %v629, -inf
      %v867 = vrot.slane %v866, 4
      %v868 = vmax.f32 %v866, %v867
      %v869 = vrot.slane %v868, 2
      %v870 = vmax.f32 %v868, %v869
      %v871 = vrot.slane %v870, 1
      %v872 = vmax.f32 %v870, %v871
      %v873 = vsel %vm655, %v630, -inf
      %v874 = vrot.slane %v873, 4
      %v875 = vmax.f32 %v873, %v874
      %v876 = vrot.slane %v875, 2
      %v877 = vmax.f32 %v875, %v876
      %v878 = vrot.slane %v877, 1
      %v879 = vmax.f32 %v877, %v878
      %880 = vst [vmem:[#allocation3] sm:$0xff] 0.0
      %881 = vst [vmem:[#allocation3 + $0x28] sm:$0xff] 0.0
      %vm914 = vcmask 1041409
      %v915 = vsel %vm914, %v669, %v662
      %vm916 = vcmask 1042434
      %v917 = vsel %vm916, %v676, %v915
      %vm918 = vcmask 1043459
      %v919 = vsel %vm918, %v683, %v917
      %vm920 = vcmask 1044484
      %v921 = vsel %vm920, %v690, %v919
      %vm922 = vcmask 1045509
      %v923 = vsel %vm922, %v697, %v921
      %vm924 = vcmask 1046534
      %v925 = vsel %vm924, %v704, %v923
      %vm926 = vcmask 1047559
      %v927 = vsel %vm926, %v711, %v925
      %v928 = vsel %vm914, %v725, %v718
      %v929 = vsel %vm916, %v732, %v928
      %v930 = vsel %vm918, %v739, %v929
      %v931 = vsel %vm920, %v746, %v930
      %v932 = vsel %vm922, %v753, %v931
      %v933 = vsel %vm924, %v760, %v932
      %v934 = vsel %vm926, %v767, %v933
      %v935 = vsel %vm914, %v781, %v774
      %v936 = vsel %vm916, %v788, %v935
      %v937 = vsel %vm918, %v795, %v936
      %v938 = vsel %vm920, %v802, %v937
      %v939 = vsel %vm922, %v809, %v938
      %v940 = vsel %vm924, %v816, %v939
      %v941 = vsel %vm926, %v823, %v940
      %v942 = vsel %vm914, %v837, %v830
      %v943 = vsel %vm916, %v844, %v942
      %v944 = vsel %vm918, %v851, %v943
      %v945 = vsel %vm920, %v858, %v944
      %v946 = vsel %vm922, %v865, %v945
      %v947 = vsel %vm924, %v872, %v946
      %v948 = vsel %vm926, %v879, %v947
      %953 = vst [vmem:[#allocation3 + $0x8] sm:$0xff] %v927
      %954 = vst [vmem:[#allocation3 + $0x10] sm:$0xff] %v934
      %955 = vst [vmem:[#allocation3 + $0x18] sm:$0xff] %v941
      %956 = vst [vmem:[#allocation3 + $0x20] sm:$0xff] %v948
      %v957 = vld [vmem:[#allocation3 + $0x7] sm:$0xff]
      %v958 = vld [vmem:[#allocation3 + $0xf] sm:$0xff]
      %v959 = vld [vmem:[#allocation3 + $0x17] sm:$0xff]
      %v960 = vld [vmem:[#allocation3 + $0x1f] sm:$0xff]
      %v961 = vld [vmem:[%s3] sm:$0xff]
      %v962 = vld [vmem:[%s3 + $0x8] sm:$0xff]
      %v963 = vld [vmem:[%s3 + $0x10] sm:$0xff]
      %v964 = vld [vmem:[%s3 + $0x18] sm:$0xff]
      %v965 = vld [vmem:[%s3 + $0x20] sm:$0xff]
      %v966 = vld [vmem:[%s3 + $0x28] sm:$0xff]
      %v967 = vld [vmem:[%s3 + $0x30] sm:$0xff]
      %v968 = vld [vmem:[%s3 + $0x38] sm:$0xff]
      %v969 = vld [vmem:[%s3 + $0x40] sm:$0xff]
      %v970 = vld [vmem:[%s3 + $0x48] sm:$0xff]
      %v971 = vld [vmem:[%s3 + $0x50] sm:$0xff]
      %v972 = vld [vmem:[%s3 + $0x58] sm:$0xff]
      %v973 = vld [vmem:[%s3 + $0x60] sm:$0xff]
      %v974 = vld [vmem:[%s3 + $0x68] sm:$0xff]
      %v975 = vld [vmem:[%s3 + $0x70] sm:$0xff]
      %v976 = vld [vmem:[%s3 + $0x78] sm:$0xff]
      %v977 = vld [vmem:[#allocation3 + $0x8] sm:$0xff]
      %v978 = vld [vmem:[#allocation3 + $0x10] sm:$0xff]
      %v979 = vld [vmem:[#allocation3 + $0x18] sm:$0xff]
      %v980 = vld [vmem:[#allocation3 + $0x20] sm:$0xff]
      %s981 = scalar_lea.vmem %s3, 128
      %v982 = vld [vmem:[%s981] sm:$0xff]
      %v983 = vld [vmem:[%s981 + $0x8] sm:$0xff]
      %v984 = vld [vmem:[%s981 + $0x10] sm:$0xff]
      %v985 = vld [vmem:[%s981 + $0x18] sm:$0xff]
      %v986 = vld [vmem:[%s981 + $0x20] sm:$0xff]
      %v987 = vld [vmem:[%s981 + $0x28] sm:$0xff]
      %v988 = vld [vmem:[%s981 + $0x30] sm:$0xff]
      %v989 = vld [vmem:[%s981 + $0x38] sm:$0xff]
      %v990 = vld [vmem:[%s981 + $0x40] sm:$0xff]
      %v991 = vld [vmem:[%s981 + $0x48] sm:$0xff]
      %v992 = vld [vmem:[%s981 + $0x50] sm:$0xff]
      %v993 = vld [vmem:[%s981 + $0x58] sm:$0xff]
      %v994 = vld [vmem:[%s981 + $0x60] sm:$0xff]
      %v995 = vld [vmem:[%s981 + $0x68] sm:$0xff]
      %v996 = vld [vmem:[%s981 + $0x70] sm:$0xff]
      %v997 = vld [vmem:[%s981 + $0x78] sm:$0xff]
      %998 = vmatpush.msra.mxu0 %v997
      %999 = vmatpush.msra.mxu0 %v996
      %1000 = vmatpush.msra.mxu0 %v995
      %1001 = vmatpush.msra.mxu0 %v994
      %1002 = vmatpush.msra.mxu0 %v993
      %1003 = vmatpush.msra.mxu0 %v992
      %1004 = vmatpush.msra.mxu0 %v991
      %1005 = vmatpush.msra.mxu0 %v990
      %1006 = vmatpush.msra.mxu0 %v989
      %1007 = vmatpush.msra.mxu0 %v988
      %1008 = vmatpush.msra.mxu0 %v987
      %1009 = vmatpush.msra.mxu0 %v986
      %1010 = vmatpush.msra.mxu0 %v985
      %1011 = vmatpush.msra.mxu0 %v984
      %1012 = vmatpush.msra.mxu0 %v983
      %1013 = vmatpush.msra.mxu0 %v982
      %1014 = vmatmul.f32.gmra.mxu0 %v977
      %v1015 = vpop.f32.mrf.mxu0
      %v1016 = vadd.f32 0.0, %v1015
      %1017 = vmatmul.f32.gmra.mxu0 %v978
      %v1018 = vpop.f32.mrf.mxu0
      %v1019 = vadd.f32 0.0, %v1018
      %1020 = vmatmul.f32.gmra.mxu0 %v979
      %v1021 = vpop.f32.mrf.mxu0
      %v1022 = vadd.f32 0.0, %v1021
      %1023 = vmatmul.f32.gmra.mxu0 %v980
      %v1024 = vpop.f32.mrf.mxu0
      %v1025 = vadd.f32 0.0, %v1024
      %1026 = vdwg.mxu0
      %1027 = vmatpush.msra.mxu0 %v976
      %1028 = vmatpush.msra.mxu0 %v975
      %1029 = vmatpush.msra.mxu0 %v974
      %1030 = vmatpush.msra.mxu0 %v973
      %1031 = vmatpush.msra.mxu0 %v972
      %1032 = vmatpush.msra.mxu0 %v971
      %1033 = vmatpush.msra.mxu0 %v970
      %1034 = vmatpush.msra.mxu0 %v969
      %1035 = vmatpush.msra.mxu0 %v968
      %1036 = vmatpush.msra.mxu0 %v967
      %1037 = vmatpush.msra.mxu0 %v966
      %1038 = vmatpush.msra.mxu0 %v965
      %1039 = vmatpush.msra.mxu0 %v964
      %1040 = vmatpush.msra.mxu0 %v963
      %1041 = vmatpush.msra.mxu0 %v962
      %1042 = vmatpush.msra.mxu0 %v961
      %1043 = vmatmul.f32.gmra.mxu0 %v957
      %v1044 = vpop.f32.mrf.mxu0
      %v1045 = vadd.f32 %v1016, %v1044
      %1046 = vmatmul.f32.gmra.mxu0 %v958
      %v1047 = vpop.f32.mrf.mxu0
      %v1048 = vadd.f32 %v1019, %v1047
      %1049 = vmatmul.f32.gmra.mxu0 %v959
      %v1050 = vpop.f32.mrf.mxu0
      %v1051 = vadd.f32 %v1022, %v1050
      %1052 = vmatmul.f32.gmra.mxu0 %v960
      %v1053 = vpop.f32.mrf.mxu0
      %v1054 = vadd.f32 %v1025, %v1053
      %1055 = vdwg.mxu0
      %v1056 = vld [vmem:[#allocation3 + $0x9] sm:$0xff]
      %v1057 = vld [vmem:[#allocation3 + $0x11] sm:$0xff]
      %v1058 = vld [vmem:[#allocation3 + $0x19] sm:$0xff]
      %v1059 = vld [vmem:[#allocation3 + $0x21] sm:$0xff]
      %s1060 = scalar_lea.vmem %s3, 256
      %v1061 = vld [vmem:[%s1060] sm:$0xff]
      %v1062 = vld [vmem:[%s1060 + $0x8] sm:$0xff]
      %v1063 = vld [vmem:[%s1060 + $0x10] sm:$0xff]
      %v1064 = vld [vmem:[%s1060 + $0x18] sm:$0xff]
      %v1065 = vld [vmem:[%s1060 + $0x20] sm:$0xff]
      %v1066 = vld [vmem:[%s1060 + $0x28] sm:$0xff]
      %v1067 = vld [vmem:[%s1060 + $0x30] sm:$0xff]
      %v1068 = vld [vmem:[%s1060 + $0x38] sm:$0xff]
      %v1069 = vld [vmem:[%s1060 + $0x40] sm:$0xff]
      %v1070 = vld [vmem:[%s1060 + $0x48] sm:$0xff]
      %v1071 = vld [vmem:[%s1060 + $0x50] sm:$0xff]
      %v1072 = vld [vmem:[%s1060 + $0x58] sm:$0xff]
      %v1073 = vld [vmem:[%s1060 + $0x60] sm:$0xff]
      %v1074 = vld [vmem:[%s1060 + $0x68] sm:$0xff]
      %v1075 = vld [vmem:[%s1060 + $0x70] sm:$0xff]
      %v1076 = vld [vmem:[%s1060 + $0x78] sm:$0xff]
      %1077 = vmatpush.msra.mxu0 %v1076
      %1078 = vmatpush.msra.mxu0 %v1075
      %1079 = vmatpush.msra.mxu0 %v1074
      %1080 = vmatpush.msra.mxu0 %v1073
      %1081 = vmatpush.msra.mxu0 %v1072
      %1082 = vmatpush.msra.mxu0 %v1071
      %1083 = vmatpush.msra.mxu0 %v1070
      %1084 = vmatpush.msra.mxu0 %v1069
      %1085 = vmatpush.msra.mxu0 %v1068
      %1086 = vmatpush.msra.mxu0 %v1067
      %1087 = vmatpush.msra.mxu0 %v1066
      %1088 = vmatpush.msra.mxu0 %v1065
      %1089 = vmatpush.msra.mxu0 %v1064
      %1090 = vmatpush.msra.mxu0 %v1063
      %1091 = vmatpush.msra.mxu0 %v1062
      %1092 = vmatpush.msra.mxu0 %v1061
      %1093 = vmatmul.f32.gmra.mxu0 %v1056
      %v1094 = vpop.f32.mrf.mxu0
      %v1095 = vadd.f32 0.0, %v1094
      %1096 = vmatmul.f32.gmra.mxu0 %v1057
      %v1097 = vpop.f32.mrf.mxu0
      %v1098 = vadd.f32 0.0, %v1097
      %1099 = vmatmul.f32.gmra.mxu0 %v1058
      %v1100 = vpop.f32.mrf.mxu0
      %v1101 = vadd.f32 0.0, %v1100
      %1102 = vmatmul.f32.gmra.mxu0 %v1059
      %v1103 = vpop.f32.mrf.mxu0
      %v1104 = vadd.f32 0.0, %v1103
      %1105 = vdwg.mxu0
      %v1106 = vadd.f32 %v1045, %v1095
      %v1107 = vadd.f32 %v1048, %v1098
      %v1108 = vadd.f32 %v1051, %v1101
      %v1109 = vadd.f32 %v1054, %v1104
      %v1110 = vld [vmem:[%s4] sm:$0x1]
      %v1112 = vperm.slane %v1110, 0
      %v1114 = vadd.f32 %v1106, %v1112
      %v1115 = vadd.f32 %v1107, %v1112
      %v1116 = vadd.f32 %v1108, %v1112
      %v1117 = vadd.f32 %v1109, %v1112
      %v1118 = vmax.f32 %v1114, 0.0
      %v1119 = vmax.f32 %v1115, 0.0
      %v1120 = vmax.f32 %v1116, 0.0
      %v1121 = vmax.f32 %v1117, 0.0
      %v1126 = vrot.slane %v1118, 2
      %v1127 = vrot.slane %v1118, 4
      %v1128 = vrot.slane %v1118, 6
      %v1129 = vrot.slane %v1119, 2
      %v1130 = vrot.slane %v1119, 4
      %v1131 = vrot.slane %v1119, 6
      %v1132 = vrot.slane %v1120, 2
      %v1133 = vrot.slane %v1120, 4
      %v1134 = vrot.slane %v1120, 6
      %v1135 = vrot.slane %v1121, 2
      %v1136 = vrot.slane %v1121, 4
      %v1137 = vrot.slane %v1121, 6
      %vm1150 = vcmask 779264
      %v1151 = vsel %vm1150, %v1118, -inf
      %v1152 = vrot.slane %v1151, 4
      %v1153 = vmax.f32 %v1151, %v1152
      %v1154 = vrot.slane %v1153, 2
      %v1155 = vmax.f32 %v1153, %v1154
      %v1156 = vrot.slane %v1155, 1
      %v1157 = vmax.f32 %v1155, %v1156
      %v1158 = vsel %vm1150, %v1126, -inf
      %v1159 = vrot.slane %v1158, 4
      %v1160 = vmax.f32 %v1158, %v1159
      %v1161 = vrot.slane %v1160, 2
      %v1162 = vmax.f32 %v1160, %v1161
      %v1163 = vrot.slane %v1162, 1
      %v1164 = vmax.f32 %v1162, %v1163
      %v1165 = vsel %vm1150, %v1127, -inf
      %v1166 = vrot.slane %v1165, 4
      %v1167 = vmax.f32 %v1165, %v1166
      %v1168 = vrot.slane %v1167, 2
      %v1169 = vmax.f32 %v1167, %v1168
      %v1170 = vrot.slane %v1169, 1
      %v1171 = vmax.f32 %v1169, %v1170
      %v1172 = vsel %vm1150, %v1128, -inf
      %v1173 = vrot.slane %v1172, 4
      %v1174 = vmax.f32 %v1172, %v1173
      %v1175 = vrot.slane %v1174, 2
      %v1176 = vmax.f32 %v1174, %v1175
      %v1177 = vrot.slane %v1176, 1
      %v1178 = vmax.f32 %v1176, %v1177
      %v1179 = vsel %vm1150, %v1119, -inf
      %v1180 = vrot.slane %v1179, 4
      %v1181 = vmax.f32 %v1179, %v1180
      %v1182 = vrot.slane %v1181, 2
      %v1183 = vmax.f32 %v1181, %v1182
      %v1184 = vrot.slane %v1183, 1
      %v1185 = vmax.f32 %v1183, %v1184
      %v1186 = vsel %vm1150, %v1129, -inf
      %v1187 = vrot.slane %v1186, 4
      %v1188 = vmax.f32 %v1186, %v1187
      %v1189 = vrot.slane %v1188, 2
      %v1190 = vmax.f32 %v1188, %v1189
      %v1191 = vrot.slane %v1190, 1
      %v1192 = vmax.f32 %v1190, %v1191
      %v1193 = vsel %vm1150, %v1130, -inf
      %v1194 = vrot.slane %v1193, 4
      %v1195 = vmax.f32 %v1193, %v1194
      %v1196 = vrot.slane %v1195, 2
      %v1197 = vmax.f32 %v1195, %v1196
      %v1198 = vrot.slane %v1197, 1
      %v1199 = vmax.f32 %v1197, %v1198
      %v1200 = vsel %vm1150, %v1131, -inf
      %v1201 = vrot.slane %v1200, 4
      %v1202 = vmax.f32 %v1200, %v1201
      %v1203 = vrot.slane %v1202, 2
      %v1204 = vmax.f32 %v1202, %v1203
      %v1205 = vrot.slane %v1204, 1
      %v1206 = vmax.f32 %v1204, %v1205
      %v1207 = vsel %vm1150, %v1120, -inf
      %v1208 = vrot.slane %v1207, 4
      %v1209 = vmax.f32 %v1207, %v1208
      %v1210 = vrot.slane %v1209, 2
      %v1211 = vmax.f32 %v1209, %v1210
      %v1212 = vrot.slane %v1211, 1
      %v1213 = vmax.f32 %v1211, %v1212
      %v1214 = vsel %vm1150, %v1132, -inf
      %v1215 = vrot.slane %v1214, 4
      %v1216 = vmax.f32 %v1214, %v1215
      %v1217 = vrot.slane %v1216, 2
      %v1218 = vmax.f32 %v1216, %v1217
      %v1219 = vrot.slane %v1218, 1
      %v1220 = vmax.f32 %v1218, %v1219
      %v1221 = vsel %vm1150, %v1133, -inf
      %v1222 = vrot.slane %v1221, 4
      %v1223 = vmax.f32 %v1221, %v1222
      %v1224 = vrot.slane %v1223, 2
      %v1225 = vmax.f32 %v1223, %v1224
      %v1226 = vrot.slane %v1225, 1
      %v1227 = vmax.f32 %v1225, %v1226
      %v1228 = vsel %vm1150, %v1134, -inf
      %v1229 = vrot.slane %v1228, 4
      %v1230 = vmax.f32 %v1228, %v1229
      %v1231 = vrot.slane %v1230, 2
      %v1232 = vmax.f32 %v1230, %v1231
      %v1233 = vrot.slane %v1232, 1
      %v1234 = vmax.f32 %v1232, %v1233
      %v1235 = vsel %vm1150, %v1121, -inf
      %v1236 = vrot.slane %v1235, 4
      %v1237 = vmax.f32 %v1235, %v1236
      %v1238 = vrot.slane %v1237, 2
      %v1239 = vmax.f32 %v1237, %v1238
      %v1240 = vrot.slane %v1239, 1
      %v1241 = vmax.f32 %v1239, %v1240
      %v1242 = vsel %vm1150, %v1135, -inf
      %v1243 = vrot.slane %v1242, 4
      %v1244 = vmax.f32 %v1242, %v1243
      %v1245 = vrot.slane %v1244, 2
      %v1246 = vmax.f32 %v1244, %v1245
      %v1247 = vrot.slane %v1246, 1
      %v1248 = vmax.f32 %v1246, %v1247
      %v1249 = vsel %vm1150, %v1136, -inf
      %v1250 = vrot.slane %v1249, 4
      %v1251 = vmax.f32 %v1249, %v1250
      %v1252 = vrot.slane %v1251, 2
      %v1253 = vmax.f32 %v1251, %v1252
      %v1254 = vrot.slane %v1253, 1
      %v1255 = vmax.f32 %v1253, %v1254
      %v1256 = vsel %vm1150, %v1137, -inf
      %v1257 = vrot.slane %v1256, 4
      %v1258 = vmax.f32 %v1256, %v1257
      %v1259 = vrot.slane %v1258, 2
      %v1260 = vmax.f32 %v1258, %v1259
      %v1261 = vrot.slane %v1260, 1
      %v1262 = vmax.f32 %v1260, %v1261
      %vm1263 = vcmask 785408
      %1264 = vst.msk [vmem:[#allocation4] sm:$0xff] %vm1263, 0.0
      %1265 = vst.msk [vmem:[#allocation4 + $0x18] sm:$0xff] %vm1263, 0.0
      %v1282 = vsel %vm914, %v1164, %v1157
      %v1283 = vsel %vm916, %v1171, %v1282
      %v1284 = vsel %vm918, %v1178, %v1283
      %v1285 = vsel %vm920, %v1185, %v1284
      %v1286 = vsel %vm922, %v1192, %v1285
      %v1287 = vsel %vm924, %v1199, %v1286
      %v1288 = vsel %vm926, %v1206, %v1287
      %v1289 = vsel %vm914, %v1220, %v1213
      %v1290 = vsel %vm916, %v1227, %v1289
      %v1291 = vsel %vm918, %v1234, %v1290
      %v1292 = vsel %vm920, %v1241, %v1291
      %v1293 = vsel %vm922, %v1248, %v1292
      %v1294 = vsel %vm924, %v1255, %v1293
      %v1295 = vsel %vm926, %v1262, %v1294
      %1298 = vst.msk [vmem:[#allocation4 + $0x8] sm:$0xff] %vm1263, %v1288
      %1299 = vst.msk [vmem:[#allocation4 + $0x10] sm:$0xff] %vm1263, %v1295
      %v1300 = vld [vmem:[#allocation4 + $0x7] sm:$0xff]
      %v1301 = vld [vmem:[#allocation4 + $0xf] sm:$0xff]
      %v1302 = vld [vmem:[%s5] sm:$0xff]
      %v1303 = vld [vmem:[%s5 + $0x8] sm:$0xff]
      %v1304 = vld [vmem:[%s5 + $0x10] sm:$0xff]
      %v1305 = vld [vmem:[%s5 + $0x18] sm:$0xff]
      %v1306 = vld [vmem:[%s5 + $0x20] sm:$0xff]
      %v1307 = vld [vmem:[%s5 + $0x28] sm:$0xff]
      %v1308 = vld [vmem:[%s5 + $0x30] sm:$0xff]
      %v1309 = vld [vmem:[%s5 + $0x38] sm:$0xff]
      %v1310 = vld [vmem:[%s5 + $0x40] sm:$0xff]
      %v1311 = vld [vmem:[%s5 + $0x48] sm:$0xff]
      %v1312 = vld [vmem:[%s5 + $0x50] sm:$0xff]
      %v1313 = vld [vmem:[%s5 + $0x58] sm:$0xff]
      %v1314 = vld [vmem:[#allocation4 + $0x8] sm:$0xff]
      %v1315 = vld [vmem:[#allocation4 + $0x10] sm:$0xff]
      %s1316 = scalar_lea.vmem %s5, 96
      %v1317 = vld [vmem:[%s1316] sm:$0xff]
      %v1318 = vld [vmem:[%s1316 + $0x8] sm:$0xff]
      %v1319 = vld [vmem:[%s1316 + $0x10] sm:$0xff]
      %v1320 = vld [vmem:[%s1316 + $0x18] sm:$0xff]
      %v1321 = vld [vmem:[%s1316 + $0x20] sm:$0xff]
      %v1322 = vld [vmem:[%s1316 + $0x28] sm:$0xff]
      %v1323 = vld [vmem:[%s1316 + $0x30] sm:$0xff]
      %v1324 = vld [vmem:[%s1316 + $0x38] sm:$0xff]
      %v1325 = vld [vmem:[%s1316 + $0x40] sm:$0xff]
      %v1326 = vld [vmem:[%s1316 + $0x48] sm:$0xff]
      %v1327 = vld [vmem:[%s1316 + $0x50] sm:$0xff]
      %v1328 = vld [vmem:[%s1316 + $0x58] sm:$0xff]
      %v1330 = vsel %vm1263, %v1314, 0
      %v1333 = vsel %vm1263, %v1315, 0
      %1335 = vmatpush.msra.mxu0 0.0
      %1336 = vmatpush.msra.mxu0 0.0
      %1337 = vmatpush.msra.mxu0 0.0
      %1338 = vmatpush.msra.mxu0 0.0
      %1339 = vmatpush.msra.mxu0 %v1328
      %1340 = vmatpush.msra.mxu0 %v1327
      %1341 = vmatpush.msra.mxu0 %v1326
      %1342 = vmatpush.msra.mxu0 %v1325
      %1343 = vmatpush.msra.mxu0 %v1324
      %1344 = vmatpush.msra.mxu0 %v1323
      %1345 = vmatpush.msra.mxu0 %v1322
      %1346 = vmatpush.msra.mxu0 %v1321
      %1347 = vmatpush.msra.mxu0 %v1320
      %1348 = vmatpush.msra.mxu0 %v1319
      %1349 = vmatpush.msra.mxu0 %v1318
      %1350 = vmatpush.msra.mxu0 %v1317
      %1351 = vmatmul.f32.gmra.mxu0 %v1330
      %v1352 = vpop.f32.mrf.mxu0
      %v1353 = vadd.f32 0.0, %v1352
      %1354 = vmatmul.f32.gmra.mxu0 %v1333
      %v1355 = vpop.f32.mrf.mxu0
      %v1356 = vadd.f32 0.0, %v1355
      %1357 = vdwg.mxu0
      %v1359 = vsel %vm1263, %v1300, 0
      %v1362 = vsel %vm1263, %v1301, 0
      %1364 = vmatpush.msra.mxu0 0.0
      %1365 = vmatpush.msra.mxu0 0.0
      %1366 = vmatpush.msra.mxu0 0.0
      %1367 = vmatpush.msra.mxu0 0.0
      %1368 = vmatpush.msra.mxu0 %v1313
      %1369 = vmatpush.msra.mxu0 %v1312
      %1370 = vmatpush.msra.mxu0 %v1311
      %1371 = vmatpush.msra.mxu0 %v1310
      %1372 = vmatpush.msra.mxu0 %v1309
      %1373 = vmatpush.msra.mxu0 %v1308
      %1374 = vmatpush.msra.mxu0 %v1307
      %1375 = vmatpush.msra.mxu0 %v1306
      %1376 = vmatpush.msra.mxu0 %v1305
      %1377 = vmatpush.msra.mxu0 %v1304
      %1378 = vmatpush.msra.mxu0 %v1303
      %1379 = vmatpush.msra.mxu0 %v1302
      %1380 = vmatmul.f32.gmra.mxu0 %v1359
      %v1381 = vpop.f32.mrf.mxu0
      %v1382 = vadd.f32 %v1353, %v1381
      %1383 = vmatmul.f32.gmra.mxu0 %v1362
      %v1384 = vpop.f32.mrf.mxu0
      %v1385 = vadd.f32 %v1356, %v1384
      %1386 = vdwg.mxu0
      %v1387 = vld [vmem:[#allocation4 + $0x9] sm:$0xff]
      %v1388 = vld [vmem:[#allocation4 + $0x11] sm:$0xff]
      %s1389 = scalar_lea.vmem %s5, 192
      %v1390 = vld [vmem:[%s1389] sm:$0xff]
      %v1391 = vld [vmem:[%s1389 + $0x8] sm:$0xff]
      %v1392 = vld [vmem:[%s1389 + $0x10] sm:$0xff]
      %v1393 = vld [vmem:[%s1389 + $0x18] sm:$0xff]
      %v1394 = vld [vmem:[%s1389 + $0x20] sm:$0xff]
      %v1395 = vld [vmem:[%s1389 + $0x28] sm:$0xff]
      %v1396 = vld [vmem:[%s1389 + $0x30] sm:$0xff]
      %v1397 = vld [vmem:[%s1389 + $0x38] sm:$0xff]
      %v1398 = vld [vmem:[%s1389 + $0x40] sm:$0xff]
      %v1399 = vld [vmem:[%s1389 + $0x48] sm:$0xff]
      %v1400 = vld [vmem:[%s1389 + $0x50] sm:$0xff]
      %v1401 = vld [vmem:[%s1389 + $0x58] sm:$0xff]
      %v1403 = vsel %vm1263, %v1387, 0
      %v1406 = vsel %vm1263, %v1388, 0
      %1408 = vmatpush.msra.mxu0 0.0
      %1409 = vmatpush.msra.mxu0 0.0
      %1410 = vmatpush.msra.mxu0 0.0
      %1411 = vmatpush.msra.mxu0 0.0
      %1412 = vmatpush.msra.mxu0 %v1401
      %1413 = vmatpush.msra.mxu0 %v1400
      %1414 = vmatpush.msra.mxu0 %v1399
      %1415 = vmatpush.msra.mxu0 %v1398
      %1416 = vmatpush.msra.mxu0 %v1397
      %1417 = vmatpush.msra.mxu0 %v1396
      %1418 = vmatpush.msra.mxu0 %v1395
      %1419 = vmatpush.msra.mxu0 %v1394
      %1420 = vmatpush.msra.mxu0 %v1393
      %1421 = vmatpush.msra.mxu0 %v1392
      %1422 = vmatpush.msra.mxu0 %v1391
      %1423 = vmatpush.msra.mxu0 %v1390
      %1424 = vmatmul.f32.gmra.mxu0 %v1403
      %v1425 = vpop.f32.mrf.mxu0
      %v1426 = vadd.f32 0.0, %v1425
      %1427 = vmatmul.f32.gmra.mxu0 %v1406
      %v1428 = vpop.f32.mrf.mxu0
      %v1429 = vadd.f32 0.0, %v1428
      %1430 = vdwg.mxu0
      %v1431 = vadd.f32 %v1382, %v1426
      %v1432 = vadd.f32 %v1385, %v1429
      %v1433 = vld [vmem:[%s6] sm:$0x1]
      %v1435 = vperm.slane %v1433, 0
      %v1437 = vadd.f32 %v1431, %v1435
      %v1438 = vadd.f32 %v1432, %v1435
      %v1439 = vmax.f32 %v1437, 0.0
      %v1440 = vmax.f32 %v1438, 0.0
      %v1443 = vrot.slane %v1439, 2
      %v1444 = vrot.slane %v1439, 4
      %v1445 = vrot.slane %v1439, 6
      %v1446 = vrot.slane %v1440, 2
      %v1447 = vrot.slane %v1440, 4
      %v1448 = vrot.slane %v1440, 6
      %vm1455 = vcmask 254976
      %v1456 = vsel %vm1455, %v1439, -inf
      %v1457 = vrot.slane %v1456, 4
      %v1458 = vmax.f32 %v1456, %v1457
      %v1459 = vrot.slane %v1458, 2
      %v1460 = vmax.f32 %v1458, %v1459
      %v1461 = vrot.slane %v1460, 1
      %v1462 = vmax.f32 %v1460, %v1461
      %v1463 = vsel %vm1455, %v1443, -inf
      %v1464 = vrot.slane %v1463, 4
      %v1465 = vmax.f32 %v1463, %v1464
      %v1466 = vrot.slane %v1465, 2
      %v1467 = vmax.f32 %v1465, %v1466
      %v1468 = vrot.slane %v1467, 1
      %v1469 = vmax.f32 %v1467, %v1468
      %v1470 = vsel %vm1455, %v1444, -inf
      %v1471 = vrot.slane %v1470, 4
      %v1472 = vmax.f32 %v1470, %v1471
      %v1473 = vrot.slane %v1472, 2
      %v1474 = vmax.f32 %v1472, %v1473
      %v1475 = vrot.slane %v1474, 1
      %v1476 = vmax.f32 %v1474, %v1475
      %v1477 = vsel %vm1455, %v1445, -inf
      %v1478 = vrot.slane %v1477, 4
      %v1479 = vmax.f32 %v1477, %v1478
      %v1480 = vrot.slane %v1479, 2
      %v1481 = vmax.f32 %v1479, %v1480
      %v1482 = vrot.slane %v1481, 1
      %v1483 = vmax.f32 %v1481, %v1482
      %v1484 = vsel %vm1455, %v1440, -inf
      %v1485 = vrot.slane %v1484, 4
      %v1486 = vmax.f32 %v1484, %v1485
      %v1487 = vrot.slane %v1486, 2
      %v1488 = vmax.f32 %v1486, %v1487
      %v1489 = vrot.slane %v1488, 1
      %v1490 = vmax.f32 %v1488, %v1489
      %v1491 = vsel %vm1455, %v1446, -inf
      %v1492 = vrot.slane %v1491, 4
      %v1493 = vmax.f32 %v1491, %v1492
      %v1494 = vrot.slane %v1493, 2
      %v1495 = vmax.f32 %v1493, %v1494
      %v1496 = vrot.slane %v1495, 1
      %v1497 = vmax.f32 %v1495, %v1496
      %v1498 = vsel %vm1455, %v1447, -inf
      %v1499 = vrot.slane %v1498, 4
      %v1500 = vmax.f32 %v1498, %v1499
      %v1501 = vrot.slane %v1500, 2
      %v1502 = vmax.f32 %v1500, %v1501
      %v1503 = vrot.slane %v1502, 1
      %v1504 = vmax.f32 %v1502, %v1503
      %v1505 = vsel %vm1455, %v1448, -inf
      %v1506 = vrot.slane %v1505, 4
      %v1507 = vmax.f32 %v1505, %v1506
      %v1508 = vrot.slane %v1507, 2
      %v1509 = vmax.f32 %v1507, %v1508
      %v1510 = vrot.slane %v1509, 1
      %v1511 = vmax.f32 %v1509, %v1510
      %v1512 = vld [vmem:[%s313] sm:$0x1]
      %v1514 = vperm.slane %v1512, 0
      %v1516 = vadd.f32 %v1462, %v1514
      %v1517 = vadd.f32 %v1469, %v1514
      %v1518 = vadd.f32 %v1476, %v1514
      %v1519 = vadd.f32 %v1483, %v1514
      %v1520 = vadd.f32 %v1490, %v1514
      %v1521 = vadd.f32 %v1497, %v1514
      %v1522 = vadd.f32 %v1504, %v1514
      %v1523 = vadd.f32 %v1511, %v1514
      %v1532 = vrot.slane %v1517, 7
      %v1533 = vsel %vm914, %v1532, %v1516
      %v1534 = vrot.slane %v1518, 6
      %v1535 = vsel %vm916, %v1534, %v1533
      %v1536 = vrot.slane %v1519, 5
      %v1537 = vsel %vm918, %v1536, %v1535
      %v1538 = vrot.slane %v1520, 4
      %v1539 = vsel %vm920, %v1538, %v1537
      %v1540 = vrot.slane %v1521, 3
      %v1541 = vsel %vm922, %v1540, %v1539
      %v1542 = vrot.slane %v1522, 2
      %v1543 = vsel %vm924, %v1542, %v1541
      %v1544 = vrot.slane %v1523, 1
      %v1545 = vsel %vm926, %v1544, %v1543
      %vm1547 = vcmask 261120
      %1548 = vst.msk [vmem:[%s317] sm:$0xff] %vm1547, %v1545
      %p1549 = scmp.lt.s32.totalorder %s19, 1
      %s1550 = scalar_select %p1549, %s19, 1
      %s1551 = smul.addr %s1550, 8
      %s1552 = scalar_lea.vmem %s8, %s1551
      // Predicated region
      $region53: #{transformer_model_forward.2} parent=51 // pred_check
        %p1553 = pneg %p215
      $region54: #{transformer_model_forward.2} parent=51 // pred_check_branch
        %1555 = sbr.rel (%p1553) target = $region56
      $region55: #{transformer_model_forward.2} parent=51 // pred_region
        _
      $region56: #{transformer_model_forward.2} parent=51 // pred_fallthru
        _
    $region52: #{transformer_model_forward.2} parent=5 // pred_fallthru
      _
    %p1556 = scmp.le.s32.totalorder 2, %s14
    // Predicated region
    $region57: #{transformer_model_forward.2} parent=5 // pred_check
      %p1557 = pneg %p1556
    $region58: #{transformer_model_forward.2} parent=5 // pred_check_branch
      %1559 = sbr.rel (%p1557) target = $region60
    $region59: #{transformer_model_forward.2} parent=5 // pred_region
      %s1560 = ssub.s32 %s14, 2
      // Predicated region
      $region61: #{transformer_model_forward.2} parent=59 // pred_check
        %p1561 = pneg %p221
      $region62: #{transformer_model_forward.2} parent=59 // pred_check_branch
        %1563 = sbr.rel (%p1561) target = $region64
      $region63: #{transformer_model_forward.2} parent=59 // pred_region
        %p1564 = scmp.lt.s32.totalorder %s20, 1
        %s1565 = scalar_select %p1564, %s20, 1
        %s1566 = smul.addr %s1565, 8
        %s1567 = scalar_lea.vmem %s8, %s1566
      $region64: #{transformer_model_forward.2} parent=59 // pred_fallthru
        _
    $region60: #{transformer_model_forward.2} parent=5 // pred_fallthru
      _
  $region6: #{transformer_model_forward.2} parent=0 // loop_footer
    %s18 = sadd.s32 1, %s14
  $region7: #{transformer_model_forward.2} parent=0 // loop_footer_branch
    %13 = sbr.rel target = $region3
  $region8: #{transformer_model_forward.2} parent=0 // loop_exit
    _

// kernel: transformer_model_forward.3
$region0: #{transformer_model_forward.3}
  #allocation0 [shape = 'u32[]', space=smem, size = 0x4, offset = 0x4, fixed_abs, tag = 'smem constant byte address 0x4 - core index']
  #allocation1 [shape = 'u32[72,128]{1,0:T(1,128)}', space=vmem, size = 0x9000, scoped, tag = 'internal scratch']
  #allocation2 [shape = 'f32[16,32]{1,0:T(8,128)}', space=vmem, size = 0x2000, scoped, tag = 'scratch operand']
  %s0 = inlined_call_operand.vmem [shape: f32[16,32], index: 0, kind: input, shape index: {}]
  %s1 = inlined_call_operand.vmem [shape: bf16[2,32,32], index: 1, kind: input, shape index: {}]
  %s2 = inlined_call_operand.vmem [shape: f32[2,1,32], index: 2, kind: input, shape index: {}]
  %s3 = inlined_call_operand.vmem [shape: bf16[2,32,32], index: 3, kind: input, shape index: {}]
  %s4 = inlined_call_operand.vmem [shape: f32[2,1,32], index: 4, kind: input, shape index: {}]
  %s5 = inlined_call_operand.vmem [shape: bf16[2,32,32], index: 5, kind: input, shape index: {}]
  %s6 = inlined_call_operand.vmem [shape: f32[2,1,32], index: 6, kind: input, shape index: {}]
  %s7 = inlined_call_operand.vmem [shape: bf16[2,32,32], index: 7, kind: input, shape index: {}]
  %s8 = inlined_call_operand.vmem [shape: f32[2,1,32], index: 8, kind: input, shape index: {}]
  %s9 = inlined_call_operand.vmem [shape: f32[2,1,32], index: 9, kind: input, shape index: {}]
  %s10 = inlined_call_operand.vmem [shape: f32[2,1,32], index: 10, kind: input, shape index: {}]
  %s11 = inlined_call_operand.vmem [shape: bf16[2,32,2048], index: 11, kind: input, shape index: {}]
  %s12 = inlined_call_operand.vmem [shape: f32[2,1,2048], index: 12, kind: input, shape index: {}]
  %s13 = inlined_call_operand.vmem [shape: bf16[2,2048,32], index: 13, kind: input, shape index: {}]
  %s14 = inlined_call_operand.vmem [shape: f32[2,1,32], index: 14, kind: input, shape index: {}]
  %s15 = inlined_call_operand.vmem [shape: f32[2,1,32], index: 15, kind: input, shape index: {}]
  %s16 = inlined_call_operand.vmem [shape: f32[2,1,32], index: 16, kind: input, shape index: {}]
  %s17 = inlined_call_operand.vmem [shape: bf16[32,8], index: 17, kind: input, shape index: {}]
  %s18 = inlined_call_operand.vmem [shape: f32[1,8], index: 18, kind: input, shape index: {}]
  %s19 = inlined_call_operand.hbm [shape: f32[2,8], index: 19, kind: output, shape index: {}]
  %s20 = sld [smem:[#allocation0]]
  $region117: #{transformer_model_forward.3} parent=0
    _
  %s22 = ssub.s32 1, %s20
  %s23 = scalar_select 0, %s22, %s20
  $region1: #{transformer_model_forward.3} parent=0
    #allocation3 [shape = 'u8[1024]{0}', space=vmem, size = 0x400, scoped, tag = 'output window, operand 0, single buffered']
    #allocation4 [shape = 's32[2]{0}', space=sflag, size = 0x8, scoped, tag = 'scoped memory for transformer_model_forward.3']
    %24 = vsyncpa [#allocation4], 0
    loop: start=0, step=1, limit=4
    $region2: #{transformer_model_forward.3} parent=1 // loop_pre_header
      _
    $region3: #{transformer_model_forward.3} parent=1 // loop_header
      %s26 = sphi 0, %s30
      %p27 = scmp.ge.s32.totalorder %s26, 4
      %s34 = sphi 0, %s34
      %s36 = sphi 0, %s34
      %s37 = sphi 0, %s36
      %s51 = sphi 0, %s37
      %s57 = sphi 0, %s59
      %s60 = sphi 0, %s57
      %s61 = sphi 0, %s60
      %s77 = sphi 0, %s61
      %s83 = sphi 0, %s85
      %s86 = sphi 0, %s83
      %s87 = sphi 0, %s86
      %s103 = sphi 0, %s87
      %s109 = sphi 0, %s111
      %s112 = sphi 0, %s109
      %s113 = sphi 0, %s112
      %s129 = sphi 0, %s113
      %s135 = sphi 0, %s137
      %s138 = sphi 0, %s135
      %s139 = sphi 0, %s138
      %s155 = sphi 0, %s139
      %s161 = sphi 0, %s163
      %s164 = sphi 0, %s161
      %s165 = sphi 0, %s164
      %s181 = sphi 0, %s165
      %s187 = sphi 0, %s189
      %s190 = sphi 0, %s187
      %s191 = sphi 0, %s190
      %s207 = sphi 0, %s191
      %s213 = sphi 0, %s215
      %s216 = sphi 0, %s213
      %s217 = sphi 0, %s216
      %s233 = sphi 0, %s217
      %s239 = sphi 0, %s241
      %s242 = sphi 0, %s239
      %s243 = sphi 0, %s242
      %s259 = sphi 0, %s243
      %s265 = sphi 0, %s267
      %s268 = sphi 0, %s265
      %s269 = sphi 0, %s268
      %s285 = sphi 0, %s269
      %s291 = sphi 0, %s293
      %s294 = sphi 0, %s291
      %s295 = sphi 0, %s294
      %s311 = sphi 0, %s295
      %s317 = sphi 0, %s319
      %s320 = sphi 0, %s317
      %s321 = sphi 0, %s320
      %s337 = sphi 0, %s321
      %s343 = sphi 0, %s345
      %s346 = sphi 0, %s343
      %s347 = sphi 0, %s346
      %s363 = sphi 0, %s347
      %s369 = sphi 0, %s371
      %s372 = sphi 0, %s369
      %s373 = sphi 0, %s372
      %s389 = sphi 0, %s373
      %s395 = sphi 0, %s397
      %s398 = sphi 0, %s395
      %s399 = sphi 0, %s398
      %s415 = sphi 0, %s399
      %s421 = sphi 0, %s423
      %s424 = sphi 0, %s421
      %s425 = sphi 0, %s424
      %s441 = sphi 0, %s425
      %s447 = sphi 0, %s449
      %s450 = sphi 0, %s447
      %s451 = sphi 0, %s450
      %s467 = sphi 0, %s451
      %s471 = sphi 0, %s471
      %s473 = sphi 0, %s471
      %s474 = sphi 0, %s473
      %s488 = sphi 0, %s474
      %s492 = sphi 0, %s492
      %s494 = sphi 0, %s492
      %s495 = sphi 0, %s494
      %s509 = sphi 0, %s495
      %s513 = sphi 0, %s513
      %s515 = sphi 0, %s513
      %s516 = sphi 0, %s515
      %s530 = sphi 0, %s516
    $region4: #{transformer_model_forward.3} parent=1 // loop_header_branch
      %29 = sbr.rel (%p27) target = $region8
    $region5: #{transformer_model_forward.3} parent=1 // loop_body
      %s31 = ssub.s32 %s26, 1
      %s32 = ssub.s32 %s26, 2
      %s33 = sadd.s32 %s26, 1
      %s35 = sadd.s32 %s34, 1
      %p38 = scmp.eq.s32.totalorder %s26, 1
      %p39 = scmp.ne.s32.totalorder %s34, %s36
      %p40 = scmp.eq.s32.totalorder %s26, 0
      %p41 = por %p39, %p40
      %p42 = scmp.ne.s32.totalorder %s34, %s36
      %p43 = scmp.eq.s32.totalorder %s31, 1
      %p44 = por %p42, %p43
      %p45 = scmp.ne.s32.totalorder %s36, %s37
      %p46 = scmp.eq.s32.totalorder %s31, 0
      %p47 = por %p45, %p46
      %p48 = scmp.ne.s32.totalorder %s36, %s37
      %p49 = scmp.eq.s32.totalorder %s32, 1
      %p50 = por %p48, %p49
      %p52 = scmp.ne.s32.totalorder %s37, %s51
      %p53 = scmp.eq.s32.totalorder %s32, 0
      %p54 = por %p52, %p53
      %s55 = ssub.s32 %s26, %s33
      %p56 = scmp.eq.s32.totalorder %s55, 0
      %s58 = sadd.s32 %s57, 1
      %s59 = scalar_select %p56, %s57, %s58
      %p62 = pneg %p56
      %p63 = scmp.eq.s32.totalorder %s26, 1
      %p64 = por %p62, %p63
      %p65 = scmp.ne.s32.totalorder %s57, %s60
      %p66 = scmp.eq.s32.totalorder %s26, 0
      %p67 = por %p65, %p66
      %p68 = scmp.ne.s32.totalorder %s57, %s60
      %p69 = scmp.eq.s32.totalorder %s31, 1
      %p70 = por %p68, %p69
      %p71 = scmp.ne.s32.totalorder %s60, %s61
      %p72 = scmp.eq.s32.totalorder %s31, 0
      %p73 = por %p71, %p72
      %p74 = scmp.ne.s32.totalorder %s60, %s61
      %p75 = scmp.eq.s32.totalorder %s32, 1
      %p76 = por %p74, %p75
      %p78 = scmp.ne.s32.totalorder %s61, %s77
      %p79 = scmp.eq.s32.totalorder %s32, 0
      %p80 = por %p78, %p79
      %s81 = ssub.s32 %s26, %s33
      %p82 = scmp.eq.s32.totalorder %s81, 0
      %s84 = sadd.s32 %s83, 1
      %s85 = scalar_select %p82, %s83, %s84
      %p88 = pneg %p82
      %p89 = scmp.eq.s32.totalorder %s26, 1
      %p90 = por %p88, %p89
      %p91 = scmp.ne.s32.totalorder %s83, %s86
      %p92 = scmp.eq.s32.totalorder %s26, 0
      %p93 = por %p91, %p92
      %p94 = scmp.ne.s32.totalorder %s83, %s86
      %p95 = scmp.eq.s32.totalorder %s31, 1
      %p96 = por %p94, %p95
      %p97 = scmp.ne.s32.totalorder %s86, %s87
      %p98 = scmp.eq.s32.totalorder %s31, 0
      %p99 = por %p97, %p98
      %p100 = scmp.ne.s32.totalorder %s86, %s87
      %p101 = scmp.eq.s32.totalorder %s32, 1
      %p102 = por %p100, %p101
      %p104 = scmp.ne.s32.totalorder %s87, %s103
      %p105 = scmp.eq.s32.totalorder %s32, 0
      %p106 = por %p104, %p105
      %s107 = ssub.s32 %s26, %s33
      %p108 = scmp.eq.s32.totalorder %s107, 0
      %s110 = sadd.s32 %s109, 1
      %s111 = scalar_select %p108, %s109, %s110
      %p114 = pneg %p108
      %p115 = scmp.eq.s32.totalorder %s26, 1
      %p116 = por %p114, %p115
      %p117 = scmp.ne.s32.totalorder %s109, %s112
      %p118 = scmp.eq.s32.totalorder %s26, 0
      %p119 = por %p117, %p118
      %p120 = scmp.ne.s32.totalorder %s109, %s112
      %p121 = scmp.eq.s32.totalorder %s31, 1
      %p122 = por %p120, %p121
      %p123 = scmp.ne.s32.totalorder %s112, %s113
      %p124 = scmp.eq.s32.totalorder %s31, 0
      %p125 = por %p123, %p124
      %p126 = scmp.ne.s32.totalorder %s112, %s113
      %p127 = scmp.eq.s32.totalorder %s32, 1
      %p128 = por %p126, %p127
      %p130 = scmp.ne.s32.totalorder %s113, %s129
      %p131 = scmp.eq.s32.totalorder %s32, 0
      %p132 = por %p130, %p131
      %s133 = ssub.s32 %s26, %s33
      %p134 = scmp.eq.s32.totalorder %s133, 0
      %s136 = sadd.s32 %s135, 1
      %s137 = scalar_select %p134, %s135, %s136
      %p140 = pneg %p134
      %p141 = scmp.eq.s32.totalorder %s26, 1
      %p142 = por %p140, %p141
      %p143 = scmp.ne.s32.totalorder %s135, %s138
      %p144 = scmp.eq.s32.totalorder %s26, 0
      %p145 = por %p143, %p144
      %p146 = scmp.ne.s32.totalorder %s135, %s138
      %p147 = scmp.eq.s32.totalorder %s31, 1
      %p148 = por %p146, %p147
      %p149 = scmp.ne.s32.totalorder %s138, %s139
      %p150 = scmp.eq.s32.totalorder %s31, 0
      %p151 = por %p149, %p150
      %p152 = scmp.ne.s32.totalorder %s138, %s139
      %p153 = scmp.eq.s32.totalorder %s32, 1
      %p154 = por %p152, %p153
      %p156 = scmp.ne.s32.totalorder %s139, %s155
      %p157 = scmp.eq.s32.totalorder %s32, 0
      %p158 = por %p156, %p157
      %s159 = ssub.s32 %s26, %s33
      %p160 = scmp.eq.s32.totalorder %s159, 0
      %s162 = sadd.s32 %s161, 1
      %s163 = scalar_select %p160, %s161, %s162
      %p166 = pneg %p160
      %p167 = scmp.eq.s32.totalorder %s26, 1
      %p168 = por %p166, %p167
      %p169 = scmp.ne.s32.totalorder %s161, %s164
      %p170 = scmp.eq.s32.totalorder %s26, 0
      %p171 = por %p169, %p170
      %p172 = scmp.ne.s32.totalorder %s161, %s164
      %p173 = scmp.eq.s32.totalorder %s31, 1
      %p174 = por %p172, %p173
      %p175 = scmp.ne.s32.totalorder %s164, %s165
      %p176 = scmp.eq.s32.totalorder %s31, 0
      %p177 = por %p175, %p176
      %p178 = scmp.ne.s32.totalorder %s164, %s165
      %p179 = scmp.eq.s32.totalorder %s32, 1
      %p180 = por %p178, %p179
      %p182 = scmp.ne.s32.totalorder %s165, %s181
      %p183 = scmp.eq.s32.totalorder %s32, 0
      %p184 = por %p182, %p183
      %s185 = ssub.s32 %s26, %s33
      %p186 = scmp.eq.s32.totalorder %s185, 0
      %s188 = sadd.s32 %s187, 1
      %s189 = scalar_select %p186, %s187, %s188
      %p192 = pneg %p186
      %p193 = scmp.eq.s32.totalorder %s26, 1
      %p194 = por %p192, %p193
      %p195 = scmp.ne.s32.totalorder %s187, %s190
      %p196 = scmp.eq.s32.totalorder %s26, 0
      %p197 = por %p195, %p196
      %p198 = scmp.ne.s32.totalorder %s187, %s190
      %p199 = scmp.eq.s32.totalorder %s31, 1
      %p200 = por %p198, %p199
      %p201 = scmp.ne.s32.totalorder %s190, %s191
      %p202 = scmp.eq.s32.totalorder %s31, 0
      %p203 = por %p201, %p202
      %p204 = scmp.ne.s32.totalorder %s190, %s191
      %p205 = scmp.eq.s32.totalorder %s32, 1
      %p206 = por %p204, %p205
      %p208 = scmp.ne.s32.totalorder %s191, %s207
      %p209 = scmp.eq.s32.totalorder %s32, 0
      %p210 = por %p208, %p209
      %s211 = ssub.s32 %s26, %s33
      %p212 = scmp.eq.s32.totalorder %s211, 0
      %s214 = sadd.s32 %s213, 1
      %s215 = scalar_select %p212, %s213, %s214
      %p218 = pneg %p212
      %p219 = scmp.eq.s32.totalorder %s26, 1
      %p220 = por %p218, %p219
      %p221 = scmp.ne.s32.totalorder %s213, %s216
      %p222 = scmp.eq.s32.totalorder %s26, 0
      %p223 = por %p221, %p222
      %p224 = scmp.ne.s32.totalorder %s213, %s216
      %p225 = scmp.eq.s32.totalorder %s31, 1
      %p226 = por %p224, %p225
      %p227 = scmp.ne.s32.totalorder %s216, %s217
      %p228 = scmp.eq.s32.totalorder %s31, 0
      %p229 = por %p227, %p228
      %p230 = scmp.ne.s32.totalorder %s216, %s217
      %p231 = scmp.eq.s32.totalorder %s32, 1
      %p232 = por %p230, %p231
      %p234 = scmp.ne.s32.totalorder %s217, %s233
      %p235 = scmp.eq.s32.totalorder %s32, 0
      %p236 = por %p234, %p235
      %s237 = ssub.s32 %s26, %s33
      %p238 = scmp.eq.s32.totalorder %s237, 0
      %s240 = sadd.s32 %s239, 1
      %s241 = scalar_select %p238, %s239, %s240
      %p244 = pneg %p238
      %p245 = scmp.eq.s32.totalorder %s26, 1
      %p246 = por %p244, %p245
      %p247 = scmp.ne.s32.totalorder %s239, %s242
      %p248 = scmp.eq.s32.totalorder %s26, 0
      %p249 = por %p247, %p248
      %p250 = scmp.ne.s32.totalorder %s239, %s242
      %p251 = scmp.eq.s32.totalorder %s31, 1
      %p252 = por %p250, %p251
      %p253 = scmp.ne.s32.totalorder %s242, %s243
      %p254 = scmp.eq.s32.totalorder %s31, 0
      %p255 = por %p253, %p254
      %p256 = scmp.ne.s32.totalorder %s242, %s243
      %p257 = scmp.eq.s32.totalorder %s32, 1
      %p258 = por %p256, %p257
      %p260 = scmp.ne.s32.totalorder %s243, %s259
      %p261 = scmp.eq.s32.totalorder %s32, 0
      %p262 = por %p260, %p261
      %s263 = ssub.s32 %s26, %s33
      %p264 = scmp.eq.s32.totalorder %s263, 0
      %s266 = sadd.s32 %s265, 1
      %s267 = scalar_select %p264, %s265, %s266
      %p270 = pneg %p264
      %p271 = scmp.eq.s32.totalorder %s26, 1
      %p272 = por %p270, %p271
      %p273 = scmp.ne.s32.totalorder %s265, %s268
      %p274 = scmp.eq.s32.totalorder %s26, 0
      %p275 = por %p273, %p274
      %p276 = scmp.ne.s32.totalorder %s265, %s268
      %p277 = scmp.eq.s32.totalorder %s31, 1
      %p278 = por %p276, %p277
      %p279 = scmp.ne.s32.totalorder %s268, %s269
      %p280 = scmp.eq.s32.totalorder %s31, 0
      %p281 = por %p279, %p280
      %p282 = scmp.ne.s32.totalorder %s268, %s269
      %p283 = scmp.eq.s32.totalorder %s32, 1
      %p284 = por %p282, %p283
      %p286 = scmp.ne.s32.totalorder %s269, %s285
      %p287 = scmp.eq.s32.totalorder %s32, 0
      %p288 = por %p286, %p287
      %s289 = ssub.s32 %s26, %s33
      %p290 = scmp.eq.s32.totalorder %s289, 0
      %s292 = sadd.s32 %s291, 1
      %s293 = scalar_select %p290, %s291, %s292
      %p296 = pneg %p290
      %p297 = scmp.eq.s32.totalorder %s26, 1
      %p298 = por %p296, %p297
      %p299 = scmp.ne.s32.totalorder %s291, %s294
      %p300 = scmp.eq.s32.totalorder %s26, 0
      %p301 = por %p299, %p300
      %p302 = scmp.ne.s32.totalorder %s291, %s294
      %p303 = scmp.eq.s32.totalorder %s31, 1
      %p304 = por %p302, %p303
      %p305 = scmp.ne.s32.totalorder %s294, %s295
      %p306 = scmp.eq.s32.totalorder %s31, 0
      %p307 = por %p305, %p306
      %p308 = scmp.ne.s32.totalorder %s294, %s295
      %p309 = scmp.eq.s32.totalorder %s32, 1
      %p310 = por %p308, %p309
      %p312 = scmp.ne.s32.totalorder %s295, %s311
      %p313 = scmp.eq.s32.totalorder %s32, 0
      %p314 = por %p312, %p313
      %s315 = ssub.s32 %s26, %s33
      %p316 = scmp.eq.s32.totalorder %s315, 0
      %s318 = sadd.s32 %s317, 1
      %s319 = scalar_select %p316, %s317, %s318
      %p322 = pneg %p316
      %p323 = scmp.eq.s32.totalorder %s26, 1
      %p324 = por %p322, %p323
      %p325 = scmp.ne.s32.totalorder %s317, %s320
      %p326 = scmp.eq.s32.totalorder %s26, 0
      %p327 = por %p325, %p326
      %p328 = scmp.ne.s32.totalorder %s317, %s320
      %p329 = scmp.eq.s32.totalorder %s31, 1
      %p330 = por %p328, %p329
      %p331 = scmp.ne.s32.totalorder %s320, %s321
      %p332 = scmp.eq.s32.totalorder %s31, 0
      %p333 = por %p331, %p332
      %p334 = scmp.ne.s32.totalorder %s320, %s321
      %p335 = scmp.eq.s32.totalorder %s32, 1
      %p336 = por %p334, %p335
      %p338 = scmp.ne.s32.totalorder %s321, %s337
      %p339 = scmp.eq.s32.totalorder %s32, 0
      %p340 = por %p338, %p339
      %s341 = ssub.s32 %s26, %s33
      %p342 = scmp.eq.s32.totalorder %s341, 0
      %s344 = sadd.s32 %s343, 1
      %s345 = scalar_select %p342, %s343, %s344
      %p348 = pneg %p342
      %p349 = scmp.eq.s32.totalorder %s26, 1
      %p350 = por %p348, %p349
      %p351 = scmp.ne.s32.totalorder %s343, %s346
      %p352 = scmp.eq.s32.totalorder %s26, 0
      %p353 = por %p351, %p352
      %p354 = scmp.ne.s32.totalorder %s343, %s346
      %p355 = scmp.eq.s32.totalorder %s31, 1
      %p356 = por %p354, %p355
      %p357 = scmp.ne.s32.totalorder %s346, %s347
      %p358 = scmp.eq.s32.totalorder %s31, 0
      %p359 = por %p357, %p358
      %p360 = scmp.ne.s32.totalorder %s346, %s347
      %p361 = scmp.eq.s32.totalorder %s32, 1
      %p362 = por %p360, %p361
      %p364 = scmp.ne.s32.totalorder %s347, %s363
      %p365 = scmp.eq.s32.totalorder %s32, 0
      %p366 = por %p364, %p365
      %s367 = ssub.s32 %s26, %s33
      %p368 = scmp.eq.s32.totalorder %s367, 0
      %s370 = sadd.s32 %s369, 1
      %s371 = scalar_select %p368, %s369, %s370
      %p374 = pneg %p368
      %p375 = scmp.eq.s32.totalorder %s26, 1
      %p376 = por %p374, %p375
      %p377 = scmp.ne.s32.totalorder %s369, %s372
      %p378 = scmp.eq.s32.totalorder %s26, 0
      %p379 = por %p377, %p378
      %p380 = scmp.ne.s32.totalorder %s369, %s372
      %p381 = scmp.eq.s32.totalorder %s31, 1
      %p382 = por %p380, %p381
      %p383 = scmp.ne.s32.totalorder %s372, %s373
      %p384 = scmp.eq.s32.totalorder %s31, 0
      %p385 = por %p383, %p384
      %p386 = scmp.ne.s32.totalorder %s372, %s373
      %p387 = scmp.eq.s32.totalorder %s32, 1
      %p388 = por %p386, %p387
      %p390 = scmp.ne.s32.totalorder %s373, %s389
      %p391 = scmp.eq.s32.totalorder %s32, 0
      %p392 = por %p390, %p391
      %s393 = ssub.s32 %s26, %s33
      %p394 = scmp.eq.s32.totalorder %s393, 0
      %s396 = sadd.s32 %s395, 1
      %s397 = scalar_select %p394, %s395, %s396
      %p400 = pneg %p394
      %p401 = scmp.eq.s32.totalorder %s26, 1
      %p402 = por %p400, %p401
      %p403 = scmp.ne.s32.totalorder %s395, %s398
      %p404 = scmp.eq.s32.totalorder %s26, 0
      %p405 = por %p403, %p404
      %p406 = scmp.ne.s32.totalorder %s395, %s398
      %p407 = scmp.eq.s32.totalorder %s31, 1
      %p408 = por %p406, %p407
      %p409 = scmp.ne.s32.totalorder %s398, %s399
      %p410 = scmp.eq.s32.totalorder %s31, 0
      %p411 = por %p409, %p410
      %p412 = scmp.ne.s32.totalorder %s398, %s399
      %p413 = scmp.eq.s32.totalorder %s32, 1
      %p414 = por %p412, %p413
      %p416 = scmp.ne.s32.totalorder %s399, %s415
      %p417 = scmp.eq.s32.totalorder %s32, 0
      %p418 = por %p416, %p417
      %s419 = ssub.s32 %s26, %s33
      %p420 = scmp.eq.s32.totalorder %s419, 0
      %s422 = sadd.s32 %s421, 1
      %s423 = scalar_select %p420, %s421, %s422
      %p426 = pneg %p420
      %p427 = scmp.eq.s32.totalorder %s26, 1
      %p428 = por %p426, %p427
      %p429 = scmp.ne.s32.totalorder %s421, %s424
      %p430 = scmp.eq.s32.totalorder %s26, 0
      %p431 = por %p429, %p430
      %p432 = scmp.ne.s32.totalorder %s421, %s424
      %p433 = scmp.eq.s32.totalorder %s31, 1
      %p434 = por %p432, %p433
      %p435 = scmp.ne.s32.totalorder %s424, %s425
      %p436 = scmp.eq.s32.totalorder %s31, 0
      %p437 = por %p435, %p436
      %p438 = scmp.ne.s32.totalorder %s424, %s425
      %p439 = scmp.eq.s32.totalorder %s32, 1
      %p440 = por %p438, %p439
      %p442 = scmp.ne.s32.totalorder %s425, %s441
      %p443 = scmp.eq.s32.totalorder %s32, 0
      %p444 = por %p442, %p443
      %s445 = ssub.s32 %s26, %s33
      %p446 = scmp.eq.s32.totalorder %s445, 0
      %s448 = sadd.s32 %s447, 1
      %s449 = scalar_select %p446, %s447, %s448
      %p452 = pneg %p446
      %p453 = scmp.eq.s32.totalorder %s26, 1
      %p454 = por %p452, %p453
      %p455 = scmp.ne.s32.totalorder %s447, %s450
      %p456 = scmp.eq.s32.totalorder %s26, 0
      %p457 = por %p455, %p456
      %p458 = scmp.ne.s32.totalorder %s447, %s450
      %p459 = scmp.eq.s32.totalorder %s31, 1
      %p460 = por %p458, %p459
      %p461 = scmp.ne.s32.totalorder %s450, %s451
      %p462 = scmp.eq.s32.totalorder %s31, 0
      %p463 = por %p461, %p462
      %p464 = scmp.ne.s32.totalorder %s450, %s451
      %p465 = scmp.eq.s32.totalorder %s32, 1
      %p466 = por %p464, %p465
      %p468 = scmp.ne.s32.totalorder %s451, %s467
      %p469 = scmp.eq.s32.totalorder %s32, 0
      %p470 = por %p468, %p469
      %s472 = sadd.s32 %s471, 1
      %p475 = scmp.eq.s32.totalorder %s26, 1
      %p476 = scmp.ne.s32.totalorder %s471, %s473
      %p477 = scmp.eq.s32.totalorder %s26, 0
      %p478 = por %p476, %p477
      %p479 = scmp.ne.s32.totalorder %s471, %s473
      %p480 = scmp.eq.s32.totalorder %s31, 1
      %p481 = por %p479, %p480
      %p482 = scmp.ne.s32.totalorder %s473, %s474
      %p483 = scmp.eq.s32.totalorder %s31, 0
      %p484 = por %p482, %p483
      %p485 = scmp.ne.s32.totalorder %s473, %s474
      %p486 = scmp.eq.s32.totalorder %s32, 1
      %p487 = por %p485, %p486
      %p489 = scmp.ne.s32.totalorder %s474, %s488
      %p490 = scmp.eq.s32.totalorder %s32, 0
      %p491 = por %p489, %p490
      %s493 = sadd.s32 %s492, 1
      %p496 = scmp.eq.s32.totalorder %s26, 1
      %p497 = scmp.ne.s32.totalorder %s492, %s494
      %p498 = scmp.eq.s32.totalorder %s26, 0
      %p499 = por %p497, %p498
      %p500 = scmp.ne.s32.totalorder %s492, %s494
      %p501 = scmp.eq.s32.totalorder %s31, 1
      %p502 = por %p500, %p501
      %p503 = scmp.ne.s32.totalorder %s494, %s495
      %p504 = scmp.eq.s32.totalorder %s31, 0
      %p505 = por %p503, %p504
      %p506 = scmp.ne.s32.totalorder %s494, %s495
      %p507 = scmp.eq.s32.totalorder %s32, 1
      %p508 = por %p506, %p507
      %p510 = scmp.ne.s32.totalorder %s495, %s509
      %p511 = scmp.eq.s32.totalorder %s32, 0
      %p512 = por %p510, %p511
      %s514 = sadd.s32 %s513, 1
      %p517 = scmp.eq.s32.totalorder %s26, 1
      %p518 = scmp.ne.s32.totalorder %s513, %s515
      %p519 = scmp.eq.s32.totalorder %s26, 0
      %p520 = por %p518, %p519
      %p521 = scmp.ne.s32.totalorder %s513, %s515
      %p522 = scmp.eq.s32.totalorder %s31, 1
      %p523 = por %p521, %p522
      %p524 = scmp.ne.s32.totalorder %s515, %s516
      %p525 = scmp.eq.s32.totalorder %s31, 0
      %p526 = por %p524, %p525
      %p527 = scmp.ne.s32.totalorder %s515, %s516
      %p528 = scmp.eq.s32.totalorder %s32, 1
      %p529 = por %p527, %p528
      %p531 = scmp.ne.s32.totalorder %s516, %s530
      %p532 = scmp.eq.s32.totalorder %s32, 0
      %p533 = por %p531, %p532
      %p534 = scmp.le.s32.totalorder 1, %s26
      %p535 = scmp.lt.s32.totalorder %s26, 3
      %p536 = pnand %p534, %p535
      %p537 = pneg %p536
      // Predicated region
      $region9: #{transformer_model_forward.3} parent=5 // pred_check
        _
      $region10: #{transformer_model_forward.3} parent=5 // pred_check_branch
        %539 = sbr.rel (%p536) target = $region12
      $region11: #{transformer_model_forward.3} parent=5 // pred_region
        %s540 = ssub.s32 %s26, 1
        // Predicated region
        $region13: #{transformer_model_forward.3} parent=11 // pred_check
          %p541 = pneg %p47
        $region14: #{transformer_model_forward.3} parent=11 // pred_check_branch
          %543 = sbr.rel (%p541) target = $region16
        $region15: #{transformer_model_forward.3} parent=11 // pred_region
          _
        $region16: #{transformer_model_forward.3} parent=11 // pred_fallthru
          _
        // Predicated region
        $region17: #{transformer_model_forward.3} parent=11 // pred_check
          %p544 = pneg %p484
        $region18: #{transformer_model_forward.3} parent=11 // pred_check_branch
          %546 = sbr.rel (%p544) target = $region20
        $region19: #{transformer_model_forward.3} parent=11 // pred_region
          _
        $region20: #{transformer_model_forward.3} parent=11 // pred_fallthru
          _
        // Predicated region
        $region21: #{transformer_model_forward.3} parent=11 // pred_check
          %p547 = pneg %p505
        $region22: #{transformer_model_forward.3} parent=11 // pred_check_branch
          %549 = sbr.rel (%p547) target = $region24
        $region23: #{transformer_model_forward.3} parent=11 // pred_region
          _
        $region24: #{transformer_model_forward.3} parent=11 // pred_fallthru
          _
      $region12: #{transformer_model_forward.3} parent=5 // pred_fallthru
        _
      %p550 = scmp.lt.s32.totalorder %s26, 2
      // Predicated region
      $region25: #{transformer_model_forward.3} parent=5 // pred_check
        %p551 = pneg %p550
      $region26: #{transformer_model_forward.3} parent=5 // pred_check_branch
        %553 = sbr.rel (%p551) target = $region28
      $region27: #{transformer_model_forward.3} parent=5 // pred_region
        // Predicated region
        $region29: #{transformer_model_forward.3} parent=27 // pred_check
          %p554 = pneg %p67
        $region30: #{transformer_model_forward.3} parent=27 // pred_check_branch
          %556 = sbr.rel (%p554) target = $region32
        $region31: #{transformer_model_forward.3} parent=27 // pred_region
          %p557 = scmp.lt.s32.totalorder %s26, 1
          %s558 = scalar_select %p557, %s26, 1
          %s559 = smul.addr %s558, 4
          %s560 = smul.addr %s559, 4
          %s561 = scalar_lea.vmem %s1, %s560
        $region32: #{transformer_model_forward.3} parent=27 // pred_fallthru
          _
        // Predicated region
        $region33: #{transformer_model_forward.3} parent=27 // pred_check
          %p562 = pneg %p93
        $region34: #{transformer_model_forward.3} parent=27 // pred_check_branch
          %564 = sbr.rel (%p562) target = $region36
        $region35: #{transformer_model_forward.3} parent=27 // pred_region
          %p565 = scmp.lt.s32.totalorder %s26, 1
          %s566 = scalar_select %p565, %s26, 1
          %s567 = scalar_lea.vmem %s2, %s566
        $region36: #{transformer_model_forward.3} parent=27 // pred_fallthru
          _
        // Predicated region
        $region37: #{transformer_model_forward.3} parent=27 // pred_check
          %p568 = pneg %p119
        $region38: #{transformer_model_forward.3} parent=27 // pred_check_branch
          %570 = sbr.rel (%p568) target = $region40
        $region39: #{transformer_model_forward.3} parent=27 // pred_region
          %p571 = scmp.lt.s32.totalorder %s26, 1
          %s572 = scalar_select %p571, %s26, 1
          %s573 = smul.addr %s572, 4
          %s574 = smul.addr %s573, 4
          %s575 = scalar_lea.vmem %s3, %s574
        $region40: #{transformer_model_forward.3} parent=27 // pred_fallthru
          _
        // Predicated region
        $region41: #{transformer_model_forward.3} parent=27 // pred_check
          %p576 = pneg %p145
        $region42: #{transformer_model_forward.3} parent=27 // pred_check_branch
          %578 = sbr.rel (%p576) target = $region44
        $region43: #{transformer_model_forward.3} parent=27 // pred_region
          %p579 = scmp.lt.s32.totalorder %s26, 1
          %s580 = scalar_select %p579, %s26, 1
          %s581 = scalar_lea.vmem %s4, %s580
        $region44: #{transformer_model_forward.3} parent=27 // pred_fallthru
          _
        // Predicated region
        $region45: #{transformer_model_forward.3} parent=27 // pred_check
          %p582 = pneg %p171
        $region46: #{transformer_model_forward.3} parent=27 // pred_check_branch
          %584 = sbr.rel (%p582) target = $region48
        $region47: #{transformer_model_forward.3} parent=27 // pred_region
          %p585 = scmp.lt.s32.totalorder %s26, 1
          %s586 = scalar_select %p585, %s26, 1
          %s587 = smul.addr %s586, 4
          %s588 = smul.addr %s587, 4
          %s589 = scalar_lea.vmem %s5, %s588
        $region48: #{transformer_model_forward.3} parent=27 // pred_fallthru
          _
        // Predicated region
        $region49: #{transformer_model_forward.3} parent=27 // pred_check
          %p590 = pneg %p197
        $region50: #{transformer_model_forward.3} parent=27 // pred_check_branch
          %592 = sbr.rel (%p590) target = $region52
        $region51: #{transformer_model_forward.3} parent=27 // pred_region
          %p593 = scmp.lt.s32.totalorder %s26, 1
          %s594 = scalar_select %p593, %s26, 1
          %s595 = scalar_lea.vmem %s6, %s594
        $region52: #{transformer_model_forward.3} parent=27 // pred_fallthru
          _
        // Predicated region
        $region53: #{transformer_model_forward.3} parent=27 // pred_check
          %p596 = pneg %p223
        $region54: #{transformer_model_forward.3} parent=27 // pred_check_branch
          %598 = sbr.rel (%p596) target = $region56
        $region55: #{transformer_model_forward.3} parent=27 // pred_region
          %p599 = scmp.lt.s32.totalorder %s26, 1
          %s600 = scalar_select %p599, %s26, 1
          %s601 = smul.addr %s600, 4
          %s602 = smul.addr %s601, 4
          %s603 = scalar_lea.vmem %s7, %s602
        $region56: #{transformer_model_forward.3} parent=27 // pred_fallthru
          _
        // Predicated region
        $region57: #{transformer_model_forward.3} parent=27 // pred_check
          %p604 = pneg %p249
        $region58: #{transformer_model_forward.3} parent=27 // pred_check_branch
          %606 = sbr.rel (%p604) target = $region60
        $region59: #{transformer_model_forward.3} parent=27 // pred_region
          %p607 = scmp.lt.s32.totalorder %s26, 1
          %s608 = scalar_select %p607, %s26, 1
          %s609 = scalar_lea.vmem %s8, %s608
        $region60: #{transformer_model_forward.3} parent=27 // pred_fallthru
          _
        // Predicated region
        $region61: #{transformer_model_forward.3} parent=27 // pred_check
          %p610 = pneg %p275
        $region62: #{transformer_model_forward.3} parent=27 // pred_check_branch
          %612 = sbr.rel (%p610) target = $region64
        $region63: #{transformer_model_forward.3} parent=27 // pred_region
          %p613 = scmp.lt.s32.totalorder %s26, 1
          %s614 = scalar_select %p613, %s26, 1
          %s615 = scalar_lea.vmem %s9, %s614
        $region64: #{transformer_model_forward.3} parent=27 // pred_fallthru
          _
        // Predicated region
        $region65: #{transformer_model_forward.3} parent=27 // pred_check
          %p616 = pneg %p301
        $region66: #{transformer_model_forward.3} parent=27 // pred_check_branch
          %618 = sbr.rel (%p616) target = $region68
        $region67: #{transformer_model_forward.3} parent=27 // pred_region
          %p619 = scmp.lt.s32.totalorder %s26, 1
          %s620 = scalar_select %p619, %s26, 1
          %s621 = scalar_lea.vmem %s10, %s620
        $region68: #{transformer_model_forward.3} parent=27 // pred_fallthru
          _
        // Predicated region
        $region69: #{transformer_model_forward.3} parent=27 // pred_check
          %p622 = pneg %p327
        $region70: #{transformer_model_forward.3} parent=27 // pred_check_branch
          %624 = sbr.rel (%p622) target = $region72
        $region71: #{transformer_model_forward.3} parent=27 // pred_region
          %p625 = scmp.lt.s32.totalorder %s26, 1
          %s626 = scalar_select %p625, %s26, 1
          %s627 = smul.addr %s626, 64
          %s628 = smul.addr %s627, 4
          %s629 = scalar_lea.vmem %s11, %s628
        $region72: #{transformer_model_forward.3} parent=27 // pred_fallthru
          _
        // Predicated region
        $region73: #{transformer_model_forward.3} parent=27 // pred_check
          %p630 = pneg %p353
        $region74: #{transformer_model_forward.3} parent=27 // pred_check_branch
          %632 = sbr.rel (%p630) target = $region76
        $region75: #{transformer_model_forward.3} parent=27 // pred_region
          %p633 = scmp.lt.s32.totalorder %s26, 1
          %s634 = scalar_select %p633, %s26, 1
          %s635 = smul.addr %s634, 16
          %s636 = scalar_lea.vmem %s12, %s635
        $region76: #{transformer_model_forward.3} parent=27 // pred_fallthru
          _
        // Predicated region
        $region77: #{transformer_model_forward.3} parent=27 // pred_check
          %p637 = pneg %p379
        $region78: #{transformer_model_forward.3} parent=27 // pred_check_branch
          %639 = sbr.rel (%p637) target = $region80
        $region79: #{transformer_model_forward.3} parent=27 // pred_region
          %p640 = scmp.lt.s32.totalorder %s26, 1
          %s641 = scalar_select %p640, %s26, 1
          %s642 = smul.addr %s641, 256
          %s643 = smul.addr %s642, 4
          %s644 = scalar_lea.vmem %s13, %s643
        $region80: #{transformer_model_forward.3} parent=27 // pred_fallthru
          _
        // Predicated region
        $region81: #{transformer_model_forward.3} parent=27 // pred_check
          %p645 = pneg %p405
        $region82: #{transformer_model_forward.3} parent=27 // pred_check_branch
          %647 = sbr.rel (%p645) target = $region84
        $region83: #{transformer_model_forward.3} parent=27 // pred_region
          %p648 = scmp.lt.s32.totalorder %s26, 1
          %s649 = scalar_select %p648, %s26, 1
          %s650 = scalar_lea.vmem %s14, %s649
        $region84: #{transformer_model_forward.3} parent=27 // pred_fallthru
          _
        // Predicated region
        $region85: #{transformer_model_forward.3} parent=27 // pred_check
          %p651 = pneg %p431
        $region86: #{transformer_model_forward.3} parent=27 // pred_check_branch
          %653 = sbr.rel (%p651) target = $region88
        $region87: #{transformer_model_forward.3} parent=27 // pred_region
          %p654 = scmp.lt.s32.totalorder %s26, 1
          %s655 = scalar_select %p654, %s26, 1
          %s656 = scalar_lea.vmem %s15, %s655
        $region88: #{transformer_model_forward.3} parent=27 // pred_fallthru
          _
        // Predicated region
        $region89: #{transformer_model_forward.3} parent=27 // pred_check
          %p657 = pneg %p457
        $region90: #{transformer_model_forward.3} parent=27 // pred_check_branch
          %659 = sbr.rel (%p657) target = $region92
        $region91: #{transformer_model_forward.3} parent=27 // pred_region
          %p660 = scmp.lt.s32.totalorder %s26, 1
          %s661 = scalar_select %p660, %s26, 1
          %s662 = scalar_lea.vmem %s16, %s661
        $region92: #{transformer_model_forward.3} parent=27 // pred_fallthru
          _
      $region28: #{transformer_model_forward.3} parent=5 // pred_fallthru
        _
      %p663 = scmp.le.s32.totalorder 1, %s26
      %p664 = scmp.lt.s32.totalorder %s26, 3
      %p665 = pnand %p663, %p664
      %p666 = pneg %p665
      // Predicated region
      $region93: #{transformer_model_forward.3} parent=5 // pred_check
        _
      $region94: #{transformer_model_forward.3} parent=5 // pred_check_branch
        %668 = sbr.rel (%p665) target = $region96
      $region95: #{transformer_model_forward.3} parent=5 // pred_region
        %s669 = ssub.s32 %s26, 1
        %p670 = pneg %p47
        %p671 = pneg %p44
        %p672 = scmp.lt.s32.totalorder %s31, 1
        %s673 = scalar_select %p672, %s31, 1
        %s674 = smul.addr %s673, 4
        %s675 = smul.addr %s674, 4
        %s676 = scalar_lea.vmem %s1, %s675
        %p677 = pneg %p73
        %p678 = pneg %p70
        %p679 = scmp.lt.s32.totalorder %s31, 1
        %s680 = scalar_select %p679, %s31, 1
        %s681 = scalar_lea.vmem %s2, %s680
        %p682 = pneg %p99
        %p683 = pneg %p96
        %p684 = scmp.lt.s32.totalorder %s31, 1
        %s685 = scalar_select %p684, %s31, 1
        %s686 = smul.addr %s685, 4
        %s687 = smul.addr %s686, 4
        %s688 = scalar_lea.vmem %s3, %s687
        %p689 = pneg %p125
        %p690 = pneg %p122
        %p691 = scmp.lt.s32.totalorder %s31, 1
        %s692 = scalar_select %p691, %s31, 1
        %s693 = scalar_lea.vmem %s4, %s692
        %p694 = pneg %p151
        %p695 = pneg %p148
        %p696 = scmp.lt.s32.totalorder %s31, 1
        %s697 = scalar_select %p696, %s31, 1
        %s698 = smul.addr %s697, 4
        %s699 = smul.addr %s698, 4
        %s700 = scalar_lea.vmem %s5, %s699
        %p701 = pneg %p177
        %p702 = pneg %p174
        %p703 = scmp.lt.s32.totalorder %s31, 1
        %s704 = scalar_select %p703, %s31, 1
        %s705 = scalar_lea.vmem %s6, %s704
        %p706 = pneg %p203
        %p707 = pneg %p200
        %p708 = scmp.lt.s32.totalorder %s31, 1
        %s709 = scalar_select %p708, %s31, 1
        %s710 = smul.addr %s709, 4
        %s711 = smul.addr %s710, 4
        %s712 = scalar_lea.vmem %s7, %s711
        %p713 = pneg %p229
        %p714 = pneg %p226
        %p715 = scmp.lt.s32.totalorder %s31, 1
        %s716 = scalar_select %p715, %s31, 1
        %s717 = scalar_lea.vmem %s8, %s716
        %p718 = pneg %p255
        %p719 = pneg %p252
        %p720 = scmp.lt.s32.totalorder %s31, 1
        %s721 = scalar_select %p720, %s31, 1
        %s722 = scalar_lea.vmem %s9, %s721
        %p723 = pneg %p281
        %p724 = pneg %p278
        %p725 = scmp.lt.s32.totalorder %s31, 1
        %s726 = scalar_select %p725, %s31, 1
        %s727 = scalar_lea.vmem %s10, %s726
        %p728 = pneg %p307
        %p729 = pneg %p304
        %p730 = scmp.lt.s32.totalorder %s31, 1
        %s731 = scalar_select %p730, %s31, 1
        %s732 = smul.addr %s731, 64
        %s733 = smul.addr %s732, 4
        %s734 = scalar_lea.vmem %s11, %s733
        %p735 = pneg %p333
        %p736 = pneg %p330
        %p737 = scmp.lt.s32.totalorder %s31, 1
        %s738 = scalar_select %p737, %s31, 1
        %s739 = smul.addr %s738, 16
        %s740 = scalar_lea.vmem %s12, %s739
        %p741 = pneg %p359
        %p742 = pneg %p356
        %p743 = scmp.lt.s32.totalorder %s31, 1
        %s744 = scalar_select %p743, %s31, 1
        %s745 = smul.addr %s744, 256
        %s746 = smul.addr %s745, 4
        %s747 = scalar_lea.vmem %s13, %s746
        %p748 = pneg %p385
        %p749 = pneg %p382
        %p750 = scmp.lt.s32.totalorder %s31, 1
        %s751 = scalar_select %p750, %s31, 1
        %s752 = scalar_lea.vmem %s14, %s751
        %p753 = pneg %p411
        %p754 = pneg %p408
        %p755 = scmp.lt.s32.totalorder %s31, 1
        %s756 = scalar_select %p755, %s31, 1
        %s757 = scalar_lea.vmem %s15, %s756
        %p758 = pneg %p437
        %p759 = pneg %p434
        %p760 = scmp.lt.s32.totalorder %s31, 1
        %s761 = scalar_select %p760, %s31, 1
        %s762 = scalar_lea.vmem %s16, %s761
        %p763 = pneg %p463
        %p764 = pneg %p460
        %p765 = pneg %p484
        %p766 = pneg %p481
        %p767 = pneg %p505
        %p768 = pneg %p502
        %p769 = pneg %p526
        %p770 = pneg %p523
        %p771 = scmp.lt.s32.totalorder %s31, 1
        %s772 = scalar_select %p771, %s31, 1
        %s773 = smul.addr %s772, 4
        %s774 = smul.addr %s773, 4
        %s775 = scalar_lea.vmem %s1, %s774
        %p776 = scmp.lt.s32.totalorder %s31, 1
        %s777 = scalar_select %p776, %s31, 1
        %s778 = scalar_lea.vmem %s2, %s777
        %p779 = scmp.lt.s32.totalorder %s31, 1
        %s780 = scalar_select %p779, %s31, 1
        %s781 = smul.addr %s780, 4
        %s782 = smul.addr %s781, 4
        %s783 = scalar_lea.vmem %s3, %s782
        %p784 = scmp.lt.s32.totalorder %s31, 1
        %s785 = scalar_select %p784, %s31, 1
        %s786 = scalar_lea.vmem %s4, %s785
        %p787 = scmp.lt.s32.totalorder %s31, 1
        %s788 = scalar_select %p787, %s31, 1
        %s789 = smul.addr %s788, 4
        %s790 = smul.addr %s789, 4
        %s791 = scalar_lea.vmem %s5, %s790
        %p792 = scmp.lt.s32.totalorder %s31, 1
        %s793 = scalar_select %p792, %s31, 1
        %s794 = scalar_lea.vmem %s6, %s793
        %p795 = scmp.lt.s32.totalorder %s31, 1
        %s796 = scalar_select %p795, %s31, 1
        %s797 = smul.addr %s796, 4
        %s798 = smul.addr %s797, 4
        %s799 = scalar_lea.vmem %s7, %s798
        %p800 = scmp.lt.s32.totalorder %s31, 1
        %s801 = scalar_select %p800, %s31, 1
        %s802 = scalar_lea.vmem %s8, %s801
        %p803 = scmp.lt.s32.totalorder %s31, 1
        %s804 = scalar_select %p803, %s31, 1
        %s805 = scalar_lea.vmem %s9, %s804
        %p806 = scmp.lt.s32.totalorder %s31, 1
        %s807 = scalar_select %p806, %s31, 1
        %s808 = scalar_lea.vmem %s10, %s807
        %p809 = scmp.lt.s32.totalorder %s31, 1
        %s810 = scalar_select %p809, %s31, 1
        %s811 = smul.addr %s810, 64
        %s812 = smul.addr %s811, 4
        %s813 = scalar_lea.vmem %s11, %s812
        %p814 = scmp.lt.s32.totalorder %s31, 1
        %s815 = scalar_select %p814, %s31, 1
        %s816 = smul.addr %s815, 16
        %s817 = scalar_lea.vmem %s12, %s816
        %p818 = scmp.lt.s32.totalorder %s31, 1
        %s819 = scalar_select %p818, %s31, 1
        %s820 = smul.addr %s819, 256
        %s821 = smul.addr %s820, 4
        %s822 = scalar_lea.vmem %s13, %s821
        %p823 = scmp.lt.s32.totalorder %s31, 1
        %s824 = scalar_select %p823, %s31, 1
        %s825 = scalar_lea.vmem %s14, %s824
        %p826 = scmp.lt.s32.totalorder %s31, 1
        %s827 = scalar_select %p826, %s31, 1
        %s828 = scalar_lea.vmem %s15, %s827
        %p829 = scmp.lt.s32.totalorder %s31, 1
        %s830 = scalar_select %p829, %s31, 1
        %s831 = scalar_lea.vmem %s16, %s830
        %p833 = scmp.eq.s32.totalorder %s31, 0
        // Predicated region
        $region97: #{transformer_model_forward.3} parent=95 // pred_check
          %p834 = pneg %p833
        $region98: #{transformer_model_forward.3} parent=95 // pred_check_branch
          %836 = sbr.rel (%p834) target = $region100
        $region99: #{transformer_model_forward.3} parent=95 // pred_region
          %v837 = vld [vmem:[%s0] sm:$0xff]
          %v838 = vld [vmem:[%s0 + $0x8] sm:$0xff]
          %vm839 = vcmask 261120
          %840 = vst.msk [vmem:[#allocation2] sm:$0xff] %vm839, %v837
          %841 = vst.msk [vmem:[#allocation2 + $0x8] sm:$0xff] %vm839, %v838
        $region100: #{transformer_model_forward.3} parent=95 // pred_fallthru
          _
        %v842 = vld [vmem:[#allocation2] sm:$0xff]
        %v843 = vld [vmem:[#allocation2 + $0x8] sm:$0xff]
        %v844 = vlaneseq
        %v845 = vshrl.u32 %v844, 7
        %v846 = vadd.s32 %v845, 8
        %v847 = vadd.s32 %v845, 16
        %v848 = vadd.s32 %v845, 24
        %v849 = vlaneseq
        %v850 = vand.u32 %v849, 127
        %v851 = vmul.u32 %v850, 8
        %vm852 = vcmp.ge.s32.totalorder %v845, %v851
        %vm853 = vcmp.ge.s32.totalorder %v846, %v851
        %vm854 = vcmp.ge.s32.totalorder %v847, %v851
        %vm855 = vcmp.ge.s32.totalorder %v848, %v851
        %v856 = vadd.s32 %v850, 1
        %v857 = vmul.u32 %v856, 8
        %vm858 = vcmp.lt.s32.totalorder %v845, %v857
        %vm859 = vcmp.lt.s32.totalorder %v846, %v857
        %vm860 = vcmp.lt.s32.totalorder %v847, %v857
        %vm861 = vcmp.lt.s32.totalorder %v848, %v857
        %vm862 = vmand %vm852, %vm858
        %vm863 = vmand %vm853, %vm859
        %vm864 = vmand %vm854, %vm860
        %vm865 = vmand %vm855, %vm861
        %v866 = vsel %vm862, 1, 0
        %v867 = vsel %vm863, 1, 0
        %v868 = vsel %vm864, 1, 0
        %v869 = vsel %vm865, 1, 0
        %v870 = vcvt.s32.f32 %v866
        %v871 = vcvt.s32.f32 %v867
        %v872 = vcvt.s32.f32 %v868
        %v873 = vcvt.s32.f32 %v869
        %v874 = vmul.u32 %v845, 8
        %vm875 = vcmp.ge.s32.totalorder %v850, %v874
        %v876 = vadd.s32 %v845, 1
        %v877 = vmul.u32 %v876, 8
        %vm878 = vcmp.lt.s32.totalorder %v850, %v877
        %vm879 = vmand %vm875, %vm878
        %v880 = vsel %vm879, 1, 0
        %v881 = vcvt.s32.f32 %v880
        %v882 = vpack.c.bf16 %v843, %v842
        %v883 = vld [vmem:[%s775] sm:$0xf]
        %v884 = vld [vmem:[%s775 + $0x4] sm:$0xf]
        %v885 = vld [vmem:[%s775 + $0x8] sm:$0xf]
        %v886 = vld [vmem:[%s775 + $0xc] sm:$0xf]
        %v887 = vld [vmem:[%s778] sm:$0x1]
        %v889 = vperm.slane %v887, 0
        %v895 = vunpack.c.l.b16 %v883
        %v896 = vunpack.c.l.b16 %v884
        %v897 = vunpack.c.l.b16 %v885
        %v898 = vunpack.c.l.b16 %v886
        %v899 = vpack.c.b16 %v896, %v895
        %v900 = vpack.c.b16 %v898, %v897
        %vm903 = vcmask 261120
        %v905 = vsel %vm903, %v882, 0
        %907 = vmatpush.bf16.msra.mxu0 0
        %908 = vmatpush.bf16.msra.mxu0 0
        %909 = vmatpush.bf16.msra.mxu0 0
        %910 = vmatpush.bf16.msra.mxu0 0
        %911 = vmatpush.bf16.msra.mxu0 0
        %912 = vmatpush.bf16.msra.mxu0 0
        %913 = vmatpush.bf16.msra.mxu0 %v900
        %914 = vmatpush.bf16.msra.mxu0 %v899
        %915 = vmatmul.bf16.gmra.mxu0 %v905
        %v916 = vpop.f32.mrf.mxu0
        %v917 = vadd.f32 %v889, %v916
        %v918 = vpop.f32.mrf.mxu0
        %v919 = vadd.f32 %v889, %v918
        %920 = vdwg.mxu0
        %v921 = vmul.f32 %v917, 0.35355338
        %v922 = vmul.f32 %v919, 0.35355338
        %v923 = vld [vmem:[%s783] sm:$0xf]
        %v924 = vld [vmem:[%s783 + $0x4] sm:$0xf]
        %v925 = vld [vmem:[%s783 + $0x8] sm:$0xf]
        %v926 = vld [vmem:[%s783 + $0xc] sm:$0xf]
        %v927 = vld [vmem:[%s786] sm:$0x1]
        %v929 = vperm.slane %v927, 0
        %v935 = vunpack.c.l.b16 %v923
        %v936 = vunpack.c.l.b16 %v924
        %v937 = vunpack.c.l.b16 %v925
        %v938 = vunpack.c.l.b16 %v926
        %v939 = vpack.c.b16 %v936, %v935
        %v940 = vpack.c.b16 %v938, %v937
        %943 = vmatpush.bf16.msra.mxu0 0
        %944 = vmatpush.bf16.msra.mxu0 0
        %945 = vmatpush.bf16.msra.mxu0 0
        %946 = vmatpush.bf16.msra.mxu0 0
        %947 = vmatpush.bf16.msra.mxu0 0
        %948 = vmatpush.bf16.msra.mxu0 0
        %949 = vmatpush.bf16.msra.mxu0 %v940
        %950 = vmatpush.bf16.msra.mxu0 %v939
        %951 = vmatmul.bf16.gmra.mxu0 %v905
        %v952 = vpop.f32.mrf.mxu0
        %v953 = vadd.f32 %v929, %v952
        %v954 = vpop.f32.mrf.mxu0
        %v955 = vadd.f32 %v929, %v954
        %956 = vdwg.mxu0
        %v957 = vld [vmem:[%s791] sm:$0xf]
        %v958 = vld [vmem:[%s791 + $0x4] sm:$0xf]
        %v959 = vld [vmem:[%s791 + $0x8] sm:$0xf]
        %v960 = vld [vmem:[%s791 + $0xc] sm:$0xf]
        %v961 = vld [vmem:[%s794] sm:$0x1]
        %v963 = vperm.slane %v961, 0
        %v969 = vunpack.c.l.b16 %v957
        %v970 = vunpack.c.l.b16 %v958
        %v971 = vunpack.c.l.b16 %v959
        %v972 = vunpack.c.l.b16 %v960
        %v973 = vpack.c.b16 %v970, %v969
        %v974 = vpack.c.b16 %v972, %v971
        %977 = vmatpush.bf16.msra.mxu0 0
        %978 = vmatpush.bf16.msra.mxu0 0
        %979 = vmatpush.bf16.msra.mxu0 0
        %980 = vmatpush.bf16.msra.mxu0 0
        %981 = vmatpush.bf16.msra.mxu0 0
        %982 = vmatpush.bf16.msra.mxu0 0
        %983 = vmatpush.bf16.msra.mxu0 %v974
        %984 = vmatpush.bf16.msra.mxu0 %v973
        %985 = vmatmul.bf16.gmra.mxu0 %v905
        %v986 = vpop.f32.mrf.mxu0
        %v987 = vadd.f32 %v963, %v986
        %v988 = vpop.f32.mrf.mxu0
        %v989 = vadd.f32 %v963, %v988
        %990 = vdwg.mxu0
        %v991 = vmul.f32 %v921, %v953
        %v993 = vsel %vm903, %v991, 0
        %995 = vmatpush.msra.mxu0 0.0
        %996 = vmatpush.msra.mxu0 0.0
        %997 = vmatpush.msra.mxu0 0.0
        %998 = vmatpush.msra.mxu0 0.0
        %999 = vmatpush.msra.mxu0 0.0
        %1000 = vmatpush.msra.mxu0 0.0
        %1001 = vmatpush.msra.mxu0 0.0
        %1002 = vmatpush.msra.mxu0 0.0
        %1003 = vmatpush.msra.mxu0 0.0
        %1004 = vmatpush.msra.mxu0 0.0
        %1005 = vmatpush.msra.mxu0 0.0
        %1006 = vmatpush.msra.mxu0 0.0
        %1007 = vmatpush.msra.mxu0 %v873
        %1008 = vmatpush.msra.mxu0 %v872
        %1009 = vmatpush.msra.mxu0 %v871
        %1010 = vmatpush.msra.mxu0 %v870
        %1011 = vmatmul.f32.gmra.mxu0 %v993
        %v1012 = vpop.f32.mrf.mxu0
        %v1013 = vadd.f32 0.0, %v1012
        %1014 = vdwg.mxu0
        %v1015 = vmul.f32 %v921, %v955
        %v1017 = vsel %vm903, %v1015, 0
        %1019 = vmatpush.msra.mxu0 0.0
        %1020 = vmatpush.msra.mxu0 0.0
        %1021 = vmatpush.msra.mxu0 0.0
        %1022 = vmatpush.msra.mxu0 0.0
        %1023 = vmatpush.msra.mxu0 0.0
        %1024 = vmatpush.msra.mxu0 0.0
        %1025 = vmatpush.msra.mxu0 0.0
        %1026 = vmatpush.msra.mxu0 0.0
        %1027 = vmatpush.msra.mxu0 0.0
        %1028 = vmatpush.msra.mxu0 0.0
        %1029 = vmatpush.msra.mxu0 0.0
        %1030 = vmatpush.msra.mxu0 0.0
        %1031 = vmatpush.msra.mxu0 %v873
        %1032 = vmatpush.msra.mxu0 %v872
        %1033 = vmatpush.msra.mxu0 %v871
        %1034 = vmatpush.msra.mxu0 %v870
        %1035 = vmatmul.f32.gmra.mxu0 %v1017
        %v1036 = vpop.f32.mrf.mxu0
        %v1037 = vadd.f32 0.0, %v1036
        %1038 = vdwg.mxu0
        %v1039 = vmax.f32 %v1013, %v1037
        %v1040 = vsub.f32 %v1013, %v1039
        %v1041 = vmul.f32 %v1040, 1.442695
        %v1042 = vpow.pop %v1041
        %v1043 = vsub.f32 %v1037, %v1039
        %v1044 = vmul.f32 %v1043, 1.442695
        %v1045 = vpow.pop %v1044
        %v1046 = vadd.f32 %v1042, %v1045
        %v1047 = vrcp.pop %v1046
        %v1048 = vmul.f32 %v1042, %v1047
        %vm1049 = vcmask 31744
        %v1051 = vsel %vm1049, %v1048, 0
        %vm1053 = vcmask 1043456
        %v1055 = vsel %vm1053, %v881, 0
        %1057 = vmatpush.msra.mxu0 0.0
        %1058 = vmatpush.msra.mxu0 0.0
        %1059 = vmatpush.msra.mxu0 0.0
        %1060 = vmatpush.msra.mxu0 0.0
        %1061 = vmatpush.msra.mxu0 0.0
        %1062 = vmatpush.msra.mxu0 0.0
        %1063 = vmatpush.msra.mxu0 0.0
        %1064 = vmatpush.msra.mxu0 0.0
        %1065 = vmatpush.msra.mxu0 0.0
        %1066 = vmatpush.msra.mxu0 0.0
        %1067 = vmatpush.msra.mxu0 0.0
        %1068 = vmatpush.msra.mxu0 0.0
        %1069 = vmatpush.msra.mxu0 0.0
        %1070 = vmatpush.msra.mxu0 0.0
        %1071 = vmatpush.msra.mxu0 0.0
        %1072 = vmatpush.msra.mxu0 %v1055
        %1073 = vmatmul.f32.gmra.mxu0 %v1051
        %v1074 = vpop.f32.mrf.mxu0
        %v1075 = vadd.f32 0.0, %v1074
        %1076 = vdwg.mxu0
        %v1077 = vmul.f32 %v1075, %v987
        %v1078 = vadd.f32 %v1077, 0.0
        %v1079 = vmul.f32 %v1045, %v1047
        %v1081 = vsel %vm1049, %v1079, 0
        %1083 = vmatpush.msra.mxu0 0.0
        %1084 = vmatpush.msra.mxu0 0.0
        %1085 = vmatpush.msra.mxu0 0.0
        %1086 = vmatpush.msra.mxu0 0.0
        %1087 = vmatpush.msra.mxu0 0.0
        %1088 = vmatpush.msra.mxu0 0.0
        %1089 = vmatpush.msra.mxu0 0.0
        %1090 = vmatpush.msra.mxu0 0.0
        %1091 = vmatpush.msra.mxu0 0.0
        %1092 = vmatpush.msra.mxu0 0.0
        %1093 = vmatpush.msra.mxu0 0.0
        %1094 = vmatpush.msra.mxu0 0.0
        %1095 = vmatpush.msra.mxu0 0.0
        %1096 = vmatpush.msra.mxu0 0.0
        %1097 = vmatpush.msra.mxu0 0.0
        %1098 = vmatpush.msra.mxu0 %v1055
        %1099 = vmatmul.f32.gmra.mxu0 %v1081
        %v1100 = vpop.f32.mrf.mxu0
        %v1101 = vadd.f32 0.0, %v1100
        %1102 = vdwg.mxu0
        %v1103 = vmul.f32 %v1101, %v989
        %v1104 = vadd.f32 %v1078, %v1103
        %v1105 = vmul.f32 %v922, %v953
        %v1107 = vsel %vm903, %v1105, 0
        %1109 = vmatpush.msra.mxu0 0.0
        %1110 = vmatpush.msra.mxu0 0.0
        %1111 = vmatpush.msra.mxu0 0.0
        %1112 = vmatpush.msra.mxu0 0.0
        %1113 = vmatpush.msra.mxu0 0.0
        %1114 = vmatpush.msra.mxu0 0.0
        %1115 = vmatpush.msra.mxu0 0.0
        %1116 = vmatpush.msra.mxu0 0.0
        %1117 = vmatpush.msra.mxu0 0.0
        %1118 = vmatpush.msra.mxu0 0.0
        %1119 = vmatpush.msra.mxu0 0.0
        %1120 = vmatpush.msra.mxu0 0.0
        %1121 = vmatpush.msra.mxu0 %v873
        %1122 = vmatpush.msra.mxu0 %v872
        %1123 = vmatpush.msra.mxu0 %v871
        %1124 = vmatpush.msra.mxu0 %v870
        %1125 = vmatmul.f32.gmra.mxu0 %v1107
        %v1126 = vpop.f32.mrf.mxu0
        %v1127 = vadd.f32 0.0, %v1126
        %1128 = vdwg.mxu0
        %v1129 = vmul.f32 %v922, %v955
        %v1131 = vsel %vm903, %v1129, 0
        %1133 = vmatpush.msra.mxu0 0.0
        %1134 = vmatpush.msra.mxu0 0.0
        %1135 = vmatpush.msra.mxu0 0.0
        %1136 = vmatpush.msra.mxu0 0.0
        %1137 = vmatpush.msra.mxu0 0.0
        %1138 = vmatpush.msra.mxu0 0.0
        %1139 = vmatpush.msra.mxu0 0.0
        %1140 = vmatpush.msra.mxu0 0.0
        %1141 = vmatpush.msra.mxu0 0.0
        %1142 = vmatpush.msra.mxu0 0.0
        %1143 = vmatpush.msra.mxu0 0.0
        %1144 = vmatpush.msra.mxu0 0.0
        %1145 = vmatpush.msra.mxu0 %v873
        %1146 = vmatpush.msra.mxu0 %v872
        %1147 = vmatpush.msra.mxu0 %v871
        %1148 = vmatpush.msra.mxu0 %v870
        %1149 = vmatmul.f32.gmra.mxu0 %v1131
        %v1150 = vpop.f32.mrf.mxu0
        %v1151 = vadd.f32 0.0, %v1150
        %1152 = vdwg.mxu0
        %v1153 = vmax.f32 %v1127, %v1151
        %v1154 = vsub.f32 %v1127, %v1153
        %v1155 = vmul.f32 %v1154, 1.442695
        %v1156 = vpow.pop %v1155
        %v1157 = vsub.f32 %v1151, %v1153
        %v1158 = vmul.f32 %v1157, 1.442695
        %v1159 = vpow.pop %v1158
        %v1160 = vadd.f32 %v1156, %v1159
        %v1161 = vrcp.pop %v1160
        %v1162 = vmul.f32 %v1156, %v1161
        %v1164 = vsel %vm1049, %v1162, 0
        %1166 = vmatpush.msra.mxu0 0.0
        %1167 = vmatpush.msra.mxu0 0.0
        %1168 = vmatpush.msra.mxu0 0.0
        %1169 = vmatpush.msra.mxu0 0.0
        %1170 = vmatpush.msra.mxu0 0.0
        %1171 = vmatpush.msra.mxu0 0.0
        %1172 = vmatpush.msra.mxu0 0.0
        %1173 = vmatpush.msra.mxu0 0.0
        %1174 = vmatpush.msra.mxu0 0.0
        %1175 = vmatpush.msra.mxu0 0.0
        %1176 = vmatpush.msra.mxu0 0.0
        %1177 = vmatpush.msra.mxu0 0.0
        %1178 = vmatpush.msra.mxu0 0.0
        %1179 = vmatpush.msra.mxu0 0.0
        %1180 = vmatpush.msra.mxu0 0.0
        %1181 = vmatpush.msra.mxu0 %v1055
        %1182 = vmatmul.f32.gmra.mxu0 %v1164
        %v1183 = vpop.f32.mrf.mxu0
        %v1184 = vadd.f32 0.0, %v1183
        %1185 = vdwg.mxu0
        %v1186 = vmul.f32 %v1184, %v987
        %v1187 = vadd.f32 %v1186, 0.0
        %v1188 = vmul.f32 %v1159, %v1161
        %v1190 = vsel %vm1049, %v1188, 0
        %1192 = vmatpush.msra.mxu0 0.0
        %1193 = vmatpush.msra.mxu0 0.0
        %1194 = vmatpush.msra.mxu0 0.0
        %1195 = vmatpush.msra.mxu0 0.0
        %1196 = vmatpush.msra.mxu0 0.0
        %1197 = vmatpush.msra.mxu0 0.0
        %1198 = vmatpush.msra.mxu0 0.0
        %1199 = vmatpush.msra.mxu0 0.0
        %1200 = vmatpush.msra.mxu0 0.0
        %1201 = vmatpush.msra.mxu0 0.0
        %1202 = vmatpush.msra.mxu0 0.0
        %1203 = vmatpush.msra.mxu0 0.0
        %1204 = vmatpush.msra.mxu0 0.0
        %1205 = vmatpush.msra.mxu0 0.0
        %1206 = vmatpush.msra.mxu0 0.0
        %1207 = vmatpush.msra.mxu0 %v1055
        %1208 = vmatmul.f32.gmra.mxu0 %v1190
        %v1209 = vpop.f32.mrf.mxu0
        %v1210 = vadd.f32 0.0, %v1209
        %1211 = vdwg.mxu0
        %v1212 = vmul.f32 %v1210, %v989
        %v1213 = vadd.f32 %v1187, %v1212
        %v1214 = vpack.c.bf16 %v1213, %v1104
        %v1215 = vld [vmem:[%s799] sm:$0xf]
        %v1216 = vld [vmem:[%s799 + $0x4] sm:$0xf]
        %v1217 = vld [vmem:[%s799 + $0x8] sm:$0xf]
        %v1218 = vld [vmem:[%s799 + $0xc] sm:$0xf]
        %v1219 = vld [vmem:[%s802] sm:$0x1]
        %v1221 = vperm.slane %v1219, 0
        %v1227 = vunpack.c.l.b16 %v1215
        %v1228 = vunpack.c.l.b16 %v1216
        %v1229 = vunpack.c.l.b16 %v1217
        %v1230 = vunpack.c.l.b16 %v1218
        %v1231 = vpack.c.b16 %v1228, %v1227
        %v1232 = vpack.c.b16 %v1230, %v1229
        %v1236 = vsel %vm903, %v1214, 0
        %1238 = vmatpush.bf16.msra.mxu0 0
        %1239 = vmatpush.bf16.msra.mxu0 0
        %1240 = vmatpush.bf16.msra.mxu0 0
        %1241 = vmatpush.bf16.msra.mxu0 0
        %1242 = vmatpush.bf16.msra.mxu0 0
        %1243 = vmatpush.bf16.msra.mxu0 0
        %1244 = vmatpush.bf16.msra.mxu0 %v1232
        %1245 = vmatpush.bf16.msra.mxu0 %v1231
        %1246 = vmatmul.bf16.gmra.mxu0 %v1236
        %v1247 = vpop.f32.mrf.mxu0
        %v1248 = vadd.f32 %v1221, %v1247
        %v1249 = vpop.f32.mrf.mxu0
        %v1250 = vadd.f32 %v1221, %v1249
        %1251 = vdwg.mxu0
        %v1252 = vadd.f32 %v842, %v1248
        %v1253 = vadd.f32 %v843, %v1250
        %v1254 = vld [vmem:[%s805] sm:$0x1]
        %v1255 = vld [vmem:[%s808] sm:$0x1]
        %v1256 = vsel %vm903, %v1252, 0.0
        %1257 = vadd.xlane.f32.xlu0 %v1256
        %v1258 = vpop.xlane.xlu0 %1257
        %v1259 = vsel %vm903, %v1253, 0.0
        %1260 = vadd.xlane.f32.xlu0 %v1259
        %v1261 = vpop.xlane.xlu0 %1260
        %v1262 = vrcp.pop 32.0
        %v1263 = vmul.f32 32.0, %v1262
        %v1264 = vsub.f32 1.0, %v1263
        %v1265 = vmul.f32 %v1262, %v1264
        %v1266 = vadd.f32 %v1262, %v1265
        %vm1267 = vweird.f32 %v1262
        %v1268 = vsel %vm1267, %v1262, %v1266
        %v1269 = vmul.f32 %v1258, %v1268
        %v1270 = vmul.f32 %v1261, %v1268
        %v1271 = vsub.f32 %v1252, %v1269
        %v1272 = vsub.f32 %v1253, %v1270
        %v1273 = vmul.f32 %v1271, %v1271
        %v1274 = vmul.f32 %v1272, %v1272
        %v1275 = vsel %vm903, %v1273, 0.0
        %1276 = vadd.xlane.f32.xlu0 %v1275
        %v1277 = vpop.xlane.xlu0 %1276
        %v1278 = vsel %vm903, %v1274, 0.0
        %1279 = vadd.xlane.f32.xlu0 %v1278
        %v1280 = vpop.xlane.xlu0 %1279
        %v1281 = vmul.f32 %v1277, %v1268
        %v1282 = vmul.f32 %v1280, %v1268
        %v1283 = vadd.f32 %v1281, 1e-05
        %v1284 = vadd.f32 %v1282, 1e-05
        %v1285 = vrsqrt.pop %v1283
        %v1286 = vmul.f32 %v1285, %v1283
        %v1287 = vmul.f32 %v1286, %v1285
        %v1288 = vmul.f32 0.5, %v1287
        %v1289 = vsub.f32 1.5, %v1288
        %v1290 = vmul.f32 %v1285, %v1289
        %vm1291 = vweird.f32 %v1283
        %vm1292 = vweird.f32 %v1285
        %vm1293 = vmor %vm1291, %vm1292
        %v1294 = vsel %vm1293, %v1285, %v1290
        %v1295 = vrsqrt.pop %v1284
        %v1296 = vmul.f32 %v1295, %v1284
        %v1297 = vmul.f32 %v1296, %v1295
        %v1298 = vmul.f32 0.5, %v1297
        %v1299 = vsub.f32 1.5, %v1298
        %v1300 = vmul.f32 %v1295, %v1299
        %vm1301 = vweird.f32 %v1284
        %vm1302 = vweird.f32 %v1295
        %vm1303 = vmor %vm1301, %vm1302
        %v1304 = vsel %vm1303, %v1295, %v1300
        %v1305 = vmul.f32 %v1271, %v1294
        %v1306 = vmul.f32 %v1272, %v1304
        %v1308 = vperm.slane %v1254, 0
        %v1310 = vmul.f32 %v1305, %v1308
        %v1311 = vmul.f32 %v1306, %v1308
        %v1313 = vperm.slane %v1255, 0
        %v1315 = vadd.f32 %v1310, %v1313
        %v1316 = vadd.f32 %v1311, %v1313
        %v1317 = vpack.c.bf16 %v1316, %v1315
        %v1318 = vld [vmem:[%s813] sm:$0xff]
        %v1319 = vld [vmem:[%s813 + $0x8] sm:$0xff]
        %v1320 = vld [vmem:[%s813 + $0x10] sm:$0xff]
        %v1321 = vld [vmem:[%s813 + $0x18] sm:$0xff]
        %v1322 = vld [vmem:[%s813 + $0x20] sm:$0xff]
        %v1323 = vld [vmem:[%s813 + $0x28] sm:$0xff]
        %v1324 = vld [vmem:[%s813 + $0x30] sm:$0xff]
        %v1325 = vld [vmem:[%s813 + $0x38] sm:$0xff]
        %v1326 = vld [vmem:[%s813 + $0x40] sm:$0xff]
        %v1327 = vld [vmem:[%s813 + $0x48] sm:$0xff]
        %v1328 = vld [vmem:[%s813 + $0x50] sm:$0xff]
        %v1329 = vld [vmem:[%s813 + $0x58] sm:$0xff]
        %v1330 = vld [vmem:[%s813 + $0x60] sm:$0xff]
        %v1331 = vld [vmem:[%s813 + $0x68] sm:$0xff]
        %v1332 = vld [vmem:[%s813 + $0x70] sm:$0xff]
        %v1333 = vld [vmem:[%s813 + $0x78] sm:$0xff]
        %v1334 = vld [vmem:[%s813 + $0x80] sm:$0xff]
        %v1335 = vld [vmem:[%s813 + $0x88] sm:$0xff]
        %v1336 = vld [vmem:[%s813 + $0x90] sm:$0xff]
        %v1337 = vld [vmem:[%s813 + $0x98] sm:$0xff]
        %v1338 = vld [vmem:[%s813 + $0xa0] sm:$0xff]
        %v1339 = vld [vmem:[%s813 + $0xa8] sm:$0xff]
        %v1340 = vld [vmem:[%s813 + $0xb0] sm:$0xff]
        %v1341 = vld [vmem:[%s813 + $0xb8] sm:$0xff]
        %v1342 = vld [vmem:[%s813 + $0xc0] sm:$0xff]
        %v1343 = vld [vmem:[%s813 + $0xc8] sm:$0xff]
        %v1344 = vld [vmem:[%s813 + $0xd0] sm:$0xff]
        %v1345 = vld [vmem:[%s813 + $0xd8] sm:$0xff]
        %v1346 = vld [vmem:[%s813 + $0xe0] sm:$0xff]
        %v1347 = vld [vmem:[%s813 + $0xe8] sm:$0xff]
        %v1348 = vld [vmem:[%s813 + $0xf0] sm:$0xff]
        %v1349 = vld [vmem:[%s813 + $0xf8] sm:$0xff]
        %v1350 = vld [vmem:[%s817] sm:$0xff]
        %v1351 = vld [vmem:[%s817 + $0x8] sm:$0xff]
        %v1354 = vperm.slane %v1350, 0
        %v1355 = vperm.slane %v1350, 1
        %v1356 = vperm.slane %v1350, 2
        %v1357 = vperm.slane %v1350, 3
        %v1358 = vperm.slane %v1350, 4
        %v1359 = vperm.slane %v1350, 5
        %v1360 = vperm.slane %v1350, 6
        %v1361 = vperm.slane %v1350, 7
        %v1362 = vperm.slane %v1351, 0
        %v1363 = vperm.slane %v1351, 1
        %v1364 = vperm.slane %v1351, 2
        %v1365 = vperm.slane %v1351, 3
        %v1366 = vperm.slane %v1351, 4
        %v1367 = vperm.slane %v1351, 5
        %v1368 = vperm.slane %v1351, 6
        %v1369 = vperm.slane %v1351, 7
        %v1418 = vunpack.c.l.b16 %v1318
        %v1419 = vunpack.c.h.b16 %v1318
        %v1420 = vunpack.c.l.b16 %v1319
        %v1421 = vunpack.c.h.b16 %v1319
        %v1422 = vunpack.c.l.b16 %v1320
        %v1423 = vunpack.c.h.b16 %v1320
        %v1424 = vunpack.c.l.b16 %v1321
        %v1425 = vunpack.c.h.b16 %v1321
        %v1426 = vunpack.c.l.b16 %v1322
        %v1427 = vunpack.c.h.b16 %v1322
        %v1428 = vunpack.c.l.b16 %v1323
        %v1429 = vunpack.c.h.b16 %v1323
        %v1430 = vunpack.c.l.b16 %v1324
        %v1431 = vunpack.c.h.b16 %v1324
        %v1432 = vunpack.c.l.b16 %v1325
        %v1433 = vunpack.c.h.b16 %v1325
        %v1434 = vunpack.c.l.b16 %v1326
        %v1435 = vunpack.c.h.b16 %v1326
        %v1436 = vunpack.c.l.b16 %v1327
        %v1437 = vunpack.c.h.b16 %v1327
        %v1438 = vunpack.c.l.b16 %v1328
        %v1439 = vunpack.c.h.b16 %v1328
        %v1440 = vunpack.c.l.b16 %v1329
        %v1441 = vunpack.c.h.b16 %v1329
        %v1442 = vunpack.c.l.b16 %v1330
        %v1443 = vunpack.c.h.b16 %v1330
        %v1444 = vunpack.c.l.b16 %v1331
        %v1445 = vunpack.c.h.b16 %v1331
        %v1446 = vunpack.c.l.b16 %v1332
        %v1447 = vunpack.c.h.b16 %v1332
        %v1448 = vunpack.c.l.b16 %v1333
        %v1449 = vunpack.c.h.b16 %v1333
        %v1450 = vunpack.c.l.b16 %v1334
        %v1451 = vunpack.c.h.b16 %v1334
        %v1452 = vunpack.c.l.b16 %v1335
        %v1453 = vunpack.c.h.b16 %v1335
        %v1454 = vunpack.c.l.b16 %v1336
        %v1455 = vunpack.c.h.b16 %v1336
        %v1456 = vunpack.c.l.b16 %v1337
        %v1457 = vunpack.c.h.b16 %v1337
        %v1458 = vunpack.c.l.b16 %v1338
        %v1459 = vunpack.c.h.b16 %v1338
        %v1460 = vunpack.c.l.b16 %v1339
        %v1461 = vunpack.c.h.b16 %v1339
        %v1462 = vunpack.c.l.b16 %v1340
        %v1463 = vunpack.c.h.b16 %v1340
        %v1464 = vunpack.c.l.b16 %v1341
        %v1465 = vunpack.c.h.b16 %v1341
        %v1466 = vunpack.c.l.b16 %v1342
        %v1467 = vunpack.c.h.b16 %v1342
        %v1468 = vunpack.c.l.b16 %v1343
        %v1469 = vunpack.c.h.b16 %v1343
        %v1470 = vunpack.c.l.b16 %v1344
        %v1471 = vunpack.c.h.b16 %v1344
        %v1472 = vunpack.c.l.b16 %v1345
        %v1473 = vunpack.c.h.b16 %v1345
        %v1474 = vunpack.c.l.b16 %v1346
        %v1475 = vunpack.c.h.b16 %v1346
        %v1476 = vunpack.c.l.b16 %v1347
        %v1477 = vunpack.c.h.b16 %v1347
        %v1478 = vunpack.c.l.b16 %v1348
        %v1479 = vunpack.c.h.b16 %v1348
        %v1480 = vunpack.c.l.b16 %v1349
        %v1481 = vunpack.c.h.b16 %v1349
        %v1482 = vpack.c.b16 %v1434, %v1418
        %v1483 = vpack.c.b16 %v1435, %v1419
        %v1484 = vpack.c.b16 %v1436, %v1420
        %v1485 = vpack.c.b16 %v1437, %v1421
        %v1486 = vpack.c.b16 %v1438, %v1422
        %v1487 = vpack.c.b16 %v1439, %v1423
        %v1488 = vpack.c.b16 %v1440, %v1424
        %v1489 = vpack.c.b16 %v1441, %v1425
        %v1490 = vpack.c.b16 %v1442, %v1426
        %v1491 = vpack.c.b16 %v1443, %v1427
        %v1492 = vpack.c.b16 %v1444, %v1428
        %v1493 = vpack.c.b16 %v1445, %v1429
        %v1494 = vpack.c.b16 %v1446, %v1430
        %v1495 = vpack.c.b16 %v1447, %v1431
        %v1496 = vpack.c.b16 %v1448, %v1432
        %v1497 = vpack.c.b16 %v1449, %v1433
        %v1498 = vpack.c.b16 %v1466, %v1450
        %v1499 = vpack.c.b16 %v1467, %v1451
        %v1500 = vpack.c.b16 %v1468, %v1452
        %v1501 = vpack.c.b16 %v1469, %v1453
        %v1502 = vpack.c.b16 %v1470, %v1454
        %v1503 = vpack.c.b16 %v1471, %v1455
        %v1504 = vpack.c.b16 %v1472, %v1456
        %v1505 = vpack.c.b16 %v1473, %v1457
        %v1506 = vpack.c.b16 %v1474, %v1458
        %v1507 = vpack.c.b16 %v1475, %v1459
        %v1508 = vpack.c.b16 %v1476, %v1460
        %v1509 = vpack.c.b16 %v1477, %v1461
        %v1510 = vpack.c.b16 %v1478, %v1462
        %v1511 = vpack.c.b16 %v1479, %v1463
        %v1512 = vpack.c.b16 %v1480, %v1464
        %v1513 = vpack.c.b16 %v1481, %v1465
        %v1547 = vsel %vm903, %v1317, 0
        %1549 = vmatpush.bf16.msra.mxu0 0
        %1550 = vmatpush.bf16.msra.mxu0 0
        %1551 = vmatpush.bf16.msra.mxu0 0
        %1552 = vmatpush.bf16.msra.mxu0 0
        %1553 = vmatpush.bf16.msra.mxu0 0
        %1554 = vmatpush.bf16.msra.mxu0 0
        %1555 = vmatpush.bf16.msra.mxu0 %v1498
        %1556 = vmatpush.bf16.msra.mxu0 %v1482
        %1557 = vmatmul.bf16.gmra.mxu0 %v1547
        %v1558 = vpop.f32.mrf.mxu0
        %v1559 = vadd.f32 %v1354, %v1558
        %v1560 = vpop.f32.mrf.mxu0
        %v1561 = vadd.f32 %v1354, %v1560
        %1562 = vdwg.mxu0
        %1563 = vmatpush.bf16.msra.mxu0 0
        %1564 = vmatpush.bf16.msra.mxu0 0
        %1565 = vmatpush.bf16.msra.mxu0 0
        %1566 = vmatpush.bf16.msra.mxu0 0
        %1567 = vmatpush.bf16.msra.mxu0 0
        %1568 = vmatpush.bf16.msra.mxu0 0
        %1569 = vmatpush.bf16.msra.mxu0 %v1499
        %1570 = vmatpush.bf16.msra.mxu0 %v1483
        %1571 = vmatmul.bf16.gmra.mxu0 %v1547
        %v1572 = vpop.f32.mrf.mxu0
        %v1573 = vadd.f32 %v1355, %v1572
        %v1574 = vpop.f32.mrf.mxu0
        %v1575 = vadd.f32 %v1355, %v1574
        %1576 = vdwg.mxu0
        %1577 = vmatpush.bf16.msra.mxu0 0
        %1578 = vmatpush.bf16.msra.mxu0 0
        %1579 = vmatpush.bf16.msra.mxu0 0
        %1580 = vmatpush.bf16.msra.mxu0 0
        %1581 = vmatpush.bf16.msra.mxu0 0
        %1582 = vmatpush.bf16.msra.mxu0 0
        %1583 = vmatpush.bf16.msra.mxu0 %v1500
        %1584 = vmatpush.bf16.msra.mxu0 %v1484
        %1585 = vmatmul.bf16.gmra.mxu0 %v1547
        %v1586 = vpop.f32.mrf.mxu0
        %v1587 = vadd.f32 %v1356, %v1586
        %v1588 = vpop.f32.mrf.mxu0
        %v1589 = vadd.f32 %v1356, %v1588
        %1590 = vdwg.mxu0
        %1591 = vmatpush.bf16.msra.mxu0 0
        %1592 = vmatpush.bf16.msra.mxu0 0
        %1593 = vmatpush.bf16.msra.mxu0 0
        %1594 = vmatpush.bf16.msra.mxu0 0
        %1595 = vmatpush.bf16.msra.mxu0 0
        %1596 = vmatpush.bf16.msra.mxu0 0
        %1597 = vmatpush.bf16.msra.mxu0 %v1501
        %1598 = vmatpush.bf16.msra.mxu0 %v1485
        %1599 = vmatmul.bf16.gmra.mxu0 %v1547
        %v1600 = vpop.f32.mrf.mxu0
        %v1601 = vadd.f32 %v1357, %v1600
        %v1602 = vpop.f32.mrf.mxu0
        %v1603 = vadd.f32 %v1357, %v1602
        %1604 = vdwg.mxu0
        %1605 = vmatpush.bf16.msra.mxu0 0
        %1606 = vmatpush.bf16.msra.mxu0 0
        %1607 = vmatpush.bf16.msra.mxu0 0
        %1608 = vmatpush.bf16.msra.mxu0 0
        %1609 = vmatpush.bf16.msra.mxu0 0
        %1610 = vmatpush.bf16.msra.mxu0 0
        %1611 = vmatpush.bf16.msra.mxu0 %v1502
        %1612 = vmatpush.bf16.msra.mxu0 %v1486
        %1613 = vmatmul.bf16.gmra.mxu0 %v1547
        %v1614 = vpop.f32.mrf.mxu0
        %v1615 = vadd.f32 %v1358, %v1614
        %v1616 = vpop.f32.mrf.mxu0
        %v1617 = vadd.f32 %v1358, %v1616
        %1618 = vdwg.mxu0
        %1619 = vmatpush.bf16.msra.mxu0 0
        %1620 = vmatpush.bf16.msra.mxu0 0
        %1621 = vmatpush.bf16.msra.mxu0 0
        %1622 = vmatpush.bf16.msra.mxu0 0
        %1623 = vmatpush.bf16.msra.mxu0 0
        %1624 = vmatpush.bf16.msra.mxu0 0
        %1625 = vmatpush.bf16.msra.mxu0 %v1503
        %1626 = vmatpush.bf16.msra.mxu0 %v1487
        %1627 = vmatmul.bf16.gmra.mxu0 %v1547
        %v1628 = vpop.f32.mrf.mxu0
        %v1629 = vadd.f32 %v1359, %v1628
        %v1630 = vpop.f32.mrf.mxu0
        %v1631 = vadd.f32 %v1359, %v1630
        %1632 = vdwg.mxu0
        %1633 = vmatpush.bf16.msra.mxu0 0
        %1634 = vmatpush.bf16.msra.mxu0 0
        %1635 = vmatpush.bf16.msra.mxu0 0
        %1636 = vmatpush.bf16.msra.mxu0 0
        %1637 = vmatpush.bf16.msra.mxu0 0
        %1638 = vmatpush.bf16.msra.mxu0 0
        %1639 = vmatpush.bf16.msra.mxu0 %v1504
        %1640 = vmatpush.bf16.msra.mxu0 %v1488
        %1641 = vmatmul.bf16.gmra.mxu0 %v1547
        %v1642 = vpop.f32.mrf.mxu0
        %v1643 = vadd.f32 %v1360, %v1642
        %v1644 = vpop.f32.mrf.mxu0
        %v1645 = vadd.f32 %v1360, %v1644
        %1646 = vdwg.mxu0
        %1647 = vmatpush.bf16.msra.mxu0 0
        %1648 = vmatpush.bf16.msra.mxu0 0
        %1649 = vmatpush.bf16.msra.mxu0 0
        %1650 = vmatpush.bf16.msra.mxu0 0
        %1651 = vmatpush.bf16.msra.mxu0 0
        %1652 = vmatpush.bf16.msra.mxu0 0
        %1653 = vmatpush.bf16.msra.mxu0 %v1505
        %1654 = vmatpush.bf16.msra.mxu0 %v1489
        %1655 = vmatmul.bf16.gmra.mxu0 %v1547
        %v1656 = vpop.f32.mrf.mxu0
        %v1657 = vadd.f32 %v1361, %v1656
        %v1658 = vpop.f32.mrf.mxu0
        %v1659 = vadd.f32 %v1361, %v1658
        %1660 = vdwg.mxu0
        %1661 = vmatpush.bf16.msra.mxu0 0
        %1662 = vmatpush.bf16.msra.mxu0 0
        %1663 = vmatpush.bf16.msra.mxu0 0
        %1664 = vmatpush.bf16.msra.mxu0 0
        %1665 = vmatpush.bf16.msra.mxu0 0
        %1666 = vmatpush.bf16.msra.mxu0 0
        %1667 = vmatpush.bf16.msra.mxu0 %v1506
        %1668 = vmatpush.bf16.msra.mxu0 %v1490
        %1669 = vmatmul.bf16.gmra.mxu0 %v1547
        %v1670 = vpop.f32.mrf.mxu0
        %v1671 = vadd.f32 %v1362, %v1670
        %v1672 = vpop.f32.mrf.mxu0
        %v1673 = vadd.f32 %v1362, %v1672
        %1674 = vdwg.mxu0
        %1675 = vmatpush.bf16.msra.mxu0 0
        %1676 = vmatpush.bf16.msra.mxu0 0
        %1677 = vmatpush.bf16.msra.mxu0 0
        %1678 = vmatpush.bf16.msra.mxu0 0
        %1679 = vmatpush.bf16.msra.mxu0 0
        %1680 = vmatpush.bf16.msra.mxu0 0
        %1681 = vmatpush.bf16.msra.mxu0 %v1507
        %1682 = vmatpush.bf16.msra.mxu0 %v1491
        %1683 = vmatmul.bf16.gmra.mxu0 %v1547
        %v1684 = vpop.f32.mrf.mxu0
        %v1685 = vadd.f32 %v1363, %v1684
        %v1686 = vpop.f32.mrf.mxu0
        %v1687 = vadd.f32 %v1363, %v1686
        %1688 = vdwg.mxu0
        %1689 = vmatpush.bf16.msra.mxu0 0
        %1690 = vmatpush.bf16.msra.mxu0 0
        %1691 = vmatpush.bf16.msra.mxu0 0
        %1692 = vmatpush.bf16.msra.mxu0 0
        %1693 = vmatpush.bf16.msra.mxu0 0
        %1694 = vmatpush.bf16.msra.mxu0 0
        %1695 = vmatpush.bf16.msra.mxu0 %v1508
        %1696 = vmatpush.bf16.msra.mxu0 %v1492
        %1697 = vmatmul.bf16.gmra.mxu0 %v1547
        %v1698 = vpop.f32.mrf.mxu0
        %v1699 = vadd.f32 %v1364, %v1698
        %v1700 = vpop.f32.mrf.mxu0
        %v1701 = vadd.f32 %v1364, %v1700
        %1702 = vdwg.mxu0
        %1703 = vmatpush.bf16.msra.mxu0 0
        %1704 = vmatpush.bf16.msra.mxu0 0
        %1705 = vmatpush.bf16.msra.mxu0 0
        %1706 = vmatpush.bf16.msra.mxu0 0
        %1707 = vmatpush.bf16.msra.mxu0 0
        %1708 = vmatpush.bf16.msra.mxu0 0
        %1709 = vmatpush.bf16.msra.mxu0 %v1509
        %1710 = vmatpush.bf16.msra.mxu0 %v1493
        %1711 = vmatmul.bf16.gmra.mxu0 %v1547
        %v1712 = vpop.f32.mrf.mxu0
        %v1713 = vadd.f32 %v1365, %v1712
        %v1714 = vpop.f32.mrf.mxu0
        %v1715 = vadd.f32 %v1365, %v1714
        %1716 = vdwg.mxu0
        %1717 = vmatpush.bf16.msra.mxu0 0
        %1718 = vmatpush.bf16.msra.mxu0 0
        %1719 = vmatpush.bf16.msra.mxu0 0
        %1720 = vmatpush.bf16.msra.mxu0 0
        %1721 = vmatpush.bf16.msra.mxu0 0
        %1722 = vmatpush.bf16.msra.mxu0 0
        %1723 = vmatpush.bf16.msra.mxu0 %v1510
        %1724 = vmatpush.bf16.msra.mxu0 %v1494
        %1725 = vmatmul.bf16.gmra.mxu0 %v1547
        %v1726 = vpop.f32.mrf.mxu0
        %v1727 = vadd.f32 %v1366, %v1726
        %v1728 = vpop.f32.mrf.mxu0
        %v1729 = vadd.f32 %v1366, %v1728
        %1730 = vdwg.mxu0
        %1731 = vmatpush.bf16.msra.mxu0 0
        %1732 = vmatpush.bf16.msra.mxu0 0
        %1733 = vmatpush.bf16.msra.mxu0 0
        %1734 = vmatpush.bf16.msra.mxu0 0
        %1735 = vmatpush.bf16.msra.mxu0 0
        %1736 = vmatpush.bf16.msra.mxu0 0
        %1737 = vmatpush.bf16.msra.mxu0 %v1511
        %1738 = vmatpush.bf16.msra.mxu0 %v1495
        %1739 = vmatmul.bf16.gmra.mxu0 %v1547
        %v1740 = vpop.f32.mrf.mxu0
        %v1741 = vadd.f32 %v1367, %v1740
        %v1742 = vpop.f32.mrf.mxu0
        %v1743 = vadd.f32 %v1367, %v1742
        %1744 = vdwg.mxu0
        %1745 = vmatpush.bf16.msra.mxu0 0
        %1746 = vmatpush.bf16.msra.mxu0 0
        %1747 = vmatpush.bf16.msra.mxu0 0
        %1748 = vmatpush.bf16.msra.mxu0 0
        %1749 = vmatpush.bf16.msra.mxu0 0
        %1750 = vmatpush.bf16.msra.mxu0 0
        %1751 = vmatpush.bf16.msra.mxu0 %v1512
        %1752 = vmatpush.bf16.msra.mxu0 %v1496
        %1753 = vmatmul.bf16.gmra.mxu0 %v1547
        %v1754 = vpop.f32.mrf.mxu0
        %v1755 = vadd.f32 %v1368, %v1754
        %v1756 = vpop.f32.mrf.mxu0
        %v1757 = vadd.f32 %v1368, %v1756
        %1758 = vdwg.mxu0
        %1759 = vmatpush.bf16.msra.mxu0 0
        %1760 = vmatpush.bf16.msra.mxu0 0
        %1761 = vmatpush.bf16.msra.mxu0 0
        %1762 = vmatpush.bf16.msra.mxu0 0
        %1763 = vmatpush.bf16.msra.mxu0 0
        %1764 = vmatpush.bf16.msra.mxu0 0
        %1765 = vmatpush.bf16.msra.mxu0 %v1513
        %1766 = vmatpush.bf16.msra.mxu0 %v1497
        %1767 = vmatmul.bf16.gmra.mxu0 %v1547
        %v1768 = vpop.f32.mrf.mxu0
        %v1769 = vadd.f32 %v1369, %v1768
        %v1770 = vpop.f32.mrf.mxu0
        %v1771 = vadd.f32 %v1369, %v1770
        %1772 = vdwg.mxu0
        %v1773 = vmax.f32 %v1559, 0.0
        %v1774 = vmax.f32 %v1573, 0.0
        %v1775 = vmax.f32 %v1587, 0.0
        %v1776 = vmax.f32 %v1601, 0.0
        %v1777 = vmax.f32 %v1615, 0.0
        %v1778 = vmax.f32 %v1629, 0.0
        %v1779 = vmax.f32 %v1643, 0.0
        %v1780 = vmax.f32 %v1657, 0.0
        %v1781 = vmax.f32 %v1671, 0.0
        %v1782 = vmax.f32 %v1685, 0.0
        %v1783 = vmax.f32 %v1699, 0.0
        %v1784 = vmax.f32 %v1713, 0.0
        %v1785 = vmax.f32 %v1727, 0.0
        %v1786 = vmax.f32 %v1741, 0.0
        %v1787 = vmax.f32 %v1755, 0.0
        %v1788 = vmax.f32 %v1769, 0.0
        %v1789 = vmax.f32 %v1561, 0.0
        %v1790 = vmax.f32 %v1575, 0.0
        %v1791 = vmax.f32 %v1589, 0.0
        %v1792 = vmax.f32 %v1603, 0.0
        %v1793 = vmax.f32 %v1617, 0.0
        %v1794 = vmax.f32 %v1631, 0.0
        %v1795 = vmax.f32 %v1645, 0.0
        %v1796 = vmax.f32 %v1659, 0.0
        %v1797 = vmax.f32 %v1673, 0.0
        %v1798 = vmax.f32 %v1687, 0.0
        %v1799 = vmax.f32 %v1701, 0.0
        %v1800 = vmax.f32 %v1715, 0.0
        %v1801 = vmax.f32 %v1729, 0.0
        %v1802 = vmax.f32 %v1743, 0.0
        %v1803 = vmax.f32 %v1757, 0.0
        %v1804 = vmax.f32 %v1771, 0.0
        %v1805 = vpack.c.bf16 %v1789, %v1773
        %v1806 = vpack.c.bf16 %v1790, %v1774
        %v1807 = vpack.c.bf16 %v1791, %v1775
        %v1808 = vpack.c.bf16 %v1792, %v1776
        %v1809 = vpack.c.bf16 %v1793, %v1777
        %v1810 = vpack.c.bf16 %v1794, %v1778
        %v1811 = vpack.c.bf16 %v1795, %v1779
        %v1812 = vpack.c.bf16 %v1796, %v1780
        %v1813 = vpack.c.bf16 %v1797, %v1781
        %v1814 = vpack.c.bf16 %v1798, %v1782
        %v1815 = vpack.c.bf16 %v1799, %v1783
        %v1816 = vpack.c.bf16 %v1800, %v1784
        %v1817 = vpack.c.bf16 %v1801, %v1785
        %v1818 = vpack.c.bf16 %v1802, %v1786
        %v1819 = vpack.c.bf16 %v1803, %v1787
        %v1820 = vpack.c.bf16 %v1804, %v1788
        %v1821 = vld [vmem:[%s822] sm:$0xf]
        %v1822 = vld [vmem:[%s822 + $0x4] sm:$0xf]
        %v1823 = vld [vmem:[%s822 + $0x8] sm:$0xf]
        %v1824 = vld [vmem:[%s822 + $0xc] sm:$0xf]
        %v1825 = vld [vmem:[%s822 + $0x10] sm:$0xf]
        %v1826 = vld [vmem:[%s822 + $0x14] sm:$0xf]
        %v1827 = vld [vmem:[%s822 + $0x18] sm:$0xf]
        %v1828 = vld [vmem:[%s822 + $0x1c] sm:$0xf]
        %v1829 = vld [vmem:[%s822 + $0x20] sm:$0xf]
        %v1830 = vld [vmem:[%s822 + $0x24] sm:$0xf]
        %v1831 = vld [vmem:[%s822 + $0x28] sm:$0xf]
        %v1832 = vld [vmem:[%s822 + $0x2c] sm:$0xf]
        %v1833 = vld [vmem:[%s822 + $0x30] sm:$0xf]
        %v1834 = vld [vmem:[%s822 + $0x34] sm:$0xf]
        %v1835 = vld [vmem:[%s822 + $0x38] sm:$0xf]
        %v1836 = vld [vmem:[%s822 + $0x3c] sm:$0xf]
        %v1837 = vld [vmem:[%s822 + $0x40] sm:$0xf]
        %v1838 = vld [vmem:[%s822 + $0x44] sm:$0xf]
        %v1839 = vld [vmem:[%s822 + $0x48] sm:$0xf]
        %v1840 = vld [vmem:[%s822 + $0x4c] sm:$0xf]
        %v1841 = vld [vmem:[%s822 + $0x50] sm:$0xf]
        %v1842 = vld [vmem:[%s822 + $0x54] sm:$0xf]
        %v1843 = vld [vmem:[%s822 + $0x58] sm:$0xf]
        %v1844 = vld [vmem:[%s822 + $0x5c] sm:$0xf]
        %v1845 = vld [vmem:[%s822 + $0x60] sm:$0xf]
        %v1846 = vld [vmem:[%s822 + $0x64] sm:$0xf]
        %v1847 = vld [vmem:[%s822 + $0x68] sm:$0xf]
        %v1848 = vld [vmem:[%s822 + $0x6c] sm:$0xf]
        %v1849 = vld [vmem:[%s822 + $0x70] sm:$0xf]
        %v1850 = vld [vmem:[%s822 + $0x74] sm:$0xf]
        %v1851 = vld [vmem:[%s822 + $0x78] sm:$0xf]
        %v1852 = vld [vmem:[%s822 + $0x7c] sm:$0xf]
        %v1853 = vld [vmem:[%s822 + $0x80] sm:$0xf]
        %v1854 = vld [vmem:[%s822 + $0x84] sm:$0xf]
        %v1855 = vld [vmem:[%s822 + $0x88] sm:$0xf]
        %v1856 = vld [vmem:[%s822 + $0x8c] sm:$0xf]
        %v1857 = vld [vmem:[%s822 + $0x90] sm:$0xf]
        %v1858 = vld [vmem:[%s822 + $0x94] sm:$0xf]
        %v1859 = vld [vmem:[%s822 + $0x98] sm:$0xf]
        %v1860 = vld [vmem:[%s822 + $0x9c] sm:$0xf]
        %v1861 = vld [vmem:[%s822 + $0xa0] sm:$0xf]
        %v1862 = vld [vmem:[%s822 + $0xa4] sm:$0xf]
        %v1863 = vld [vmem:[%s822 + $0xa8] sm:$0xf]
        %v1864 = vld [vmem:[%s822 + $0xac] sm:$0xf]
        %v1865 = vld [vmem:[%s822 + $0xb0] sm:$0xf]
        %v1866 = vld [vmem:[%s822 + $0xb4] sm:$0xf]
        %v1867 = vld [vmem:[%s822 + $0xb8] sm:$0xf]
        %v1868 = vld [vmem:[%s822 + $0xbc] sm:$0xf]
        %v1869 = vld [vmem:[%s822 + $0xc0] sm:$0xf]
        %v1870 = vld [vmem:[%s822 + $0xc4] sm:$0xf]
        %v1871 = vld [vmem:[%s822 + $0xc8] sm:$0xf]
        %v1872 = vld [vmem:[%s822 + $0xcc] sm:$0xf]
        %v1873 = vld [vmem:[%s822 + $0xd0] sm:$0xf]
        %v1874 = vld [vmem:[%s822 + $0xd4] sm:$0xf]
        %v1875 = vld [vmem:[%s822 + $0xd8] sm:$0xf]
        %v1876 = vld [vmem:[%s822 + $0xdc] sm:$0xf]
        %v1877 = vld [vmem:[%s822 + $0xe0] sm:$0xf]
        %v1878 = vld [vmem:[%s822 + $0xe4] sm:$0xf]
        %v1879 = vld [vmem:[%s822 + $0xe8] sm:$0xf]
        %v1880 = vld [vmem:[%s822 + $0xec] sm:$0xf]
        %v1881 = vld [vmem:[%s822 + $0xf0] sm:$0xf]
        %v1882 = vld [vmem:[%s822 + $0xf4] sm:$0xf]
        %v1883 = vld [vmem:[%s822 + $0xf8] sm:$0xf]
        %v1884 = vld [vmem:[%s822 + $0xfc] sm:$0xf]
        %v1885 = vld [vmem:[%s822 + $0x100] sm:$0xf]
        %v1886 = vld [vmem:[%s822 + $0x104] sm:$0xf]
        %v1887 = vld [vmem:[%s822 + $0x108] sm:$0xf]
        %v1888 = vld [vmem:[%s822 + $0x10c] sm:$0xf]
        %v1889 = vld [vmem:[%s822 + $0x110] sm:$0xf]
        %v1890 = vld [vmem:[%s822 + $0x114] sm:$0xf]
        %v1891 = vld [vmem:[%s822 + $0x118] sm:$0xf]
        %v1892 = vld [vmem:[%s822 + $0x11c] sm:$0xf]
        %v1893 = vld [vmem:[%s822 + $0x120] sm:$0xf]
        %v1894 = vld [vmem:[%s822 + $0x124] sm:$0xf]
        %v1895 = vld [vmem:[%s822 + $0x128] sm:$0xf]
        %v1896 = vld [vmem:[%s822 + $0x12c] sm:$0xf]
        %v1897 = vld [vmem:[%s822 + $0x130] sm:$0xf]
        %v1898 = vld [vmem:[%s822 + $0x134] sm:$0xf]
        %v1899 = vld [vmem:[%s822 + $0x138] sm:$0xf]
        %v1900 = vld [vmem:[%s822 + $0x13c] sm:$0xf]
        %v1901 = vld [vmem:[%s822 + $0x140] sm:$0xf]
        %v1902 = vld [vmem:[%s822 + $0x144] sm:$0xf]
        %v1903 = vld [vmem:[%s822 + $0x148] sm:$0xf]
        %v1904 = vld [vmem:[%s822 + $0x14c] sm:$0xf]
        %v1905 = vld [vmem:[%s822 + $0x150] sm:$0xf]
        %v1906 = vld [vmem:[%s822 + $0x154] sm:$0xf]
        %v1907 = vld [vmem:[%s822 + $0x158] sm:$0xf]
        %v1908 = vld [vmem:[%s822 + $0x15c] sm:$0xf]
        %v1909 = vld [vmem:[%s822 + $0x160] sm:$0xf]
        %v1910 = vld [vmem:[%s822 + $0x164] sm:$0xf]
        %v1911 = vld [vmem:[%s822 + $0x168] sm:$0xf]
        %v1912 = vld [vmem:[%s822 + $0x16c] sm:$0xf]
        %v1913 = vld [vmem:[%s822 + $0x170] sm:$0xf]
        %v1914 = vld [vmem:[%s822 + $0x174] sm:$0xf]
        %v1915 = vld [vmem:[%s822 + $0x178] sm:$0xf]
        %v1916 = vld [vmem:[%s822 + $0x17c] sm:$0xf]
        %v1917 = vld [vmem:[%s822 + $0x180] sm:$0xf]
        %v1918 = vld [vmem:[%s822 + $0x184] sm:$0xf]
        %v1919 = vld [vmem:[%s822 + $0x188] sm:$0xf]
        %v1920 = vld [vmem:[%s822 + $0x18c] sm:$0xf]
        %v1921 = vld [vmem:[%s822 + $0x190] sm:$0xf]
        %v1922 = vld [vmem:[%s822 + $0x194] sm:$0xf]
        %v1923 = vld [vmem:[%s822 + $0x198] sm:$0xf]
        %v1924 = vld [vmem:[%s822 + $0x19c] sm:$0xf]
        %v1925 = vld [vmem:[%s822 + $0x1a0] sm:$0xf]
        %v1926 = vld [vmem:[%s822 + $0x1a4] sm:$0xf]
        %v1927 = vld [vmem:[%s822 + $0x1a8] sm:$0xf]
        %v1928 = vld [vmem:[%s822 + $0x1ac] sm:$0xf]
        %v1929 = vld [vmem:[%s822 + $0x1b0] sm:$0xf]
        %v1930 = vld [vmem:[%s822 + $0x1b4] sm:$0xf]
        %v1931 = vld [vmem:[%s822 + $0x1b8] sm:$0xf]
        %v1932 = vld [vmem:[%s822 + $0x1bc] sm:$0xf]
        %v1933 = vld [vmem:[%s822 + $0x1c0] sm:$0xf]
        %v1934 = vld [vmem:[%s822 + $0x1c4] sm:$0xf]
        %v1935 = vld [vmem:[%s822 + $0x1c8] sm:$0xf]
        %v1936 = vld [vmem:[%s822 + $0x1cc] sm:$0xf]
        %v1937 = vld [vmem:[%s822 + $0x1d0] sm:$0xf]
        %v1938 = vld [vmem:[%s822 + $0x1d4] sm:$0xf]
        %v1939 = vld [vmem:[%s822 + $0x1d8] sm:$0xf]
        %v1940 = vld [vmem:[%s822 + $0x1dc] sm:$0xf]
        %v1941 = vld [vmem:[%s822 + $0x1e0] sm:$0xf]
        %v1942 = vld [vmem:[%s822 + $0x1e4] sm:$0xf]
        %v1943 = vld [vmem:[%s822 + $0x1e8] sm:$0xf]
        %v1944 = vld [vmem:[%s822 + $0x1ec] sm:$0xf]
        %v1945 = vld [vmem:[%s822 + $0x1f0] sm:$0xf]
        %v1946 = vld [vmem:[%s822 + $0x1f4] sm:$0xf]
        %v1947 = vld [vmem:[%s822 + $0x1f8] sm:$0xf]
        %v1948 = vld [vmem:[%s822 + $0x1fc] sm:$0xf]
        %v1949 = vld [vmem:[%s822 + $0x200] sm:$0xf]
        %v1950 = vld [vmem:[%s822 + $0x204] sm:$0xf]
        %v1951 = vld [vmem:[%s822 + $0x208] sm:$0xf]
        %v1952 = vld [vmem:[%s822 + $0x20c] sm:$0xf]
        %v1953 = vld [vmem:[%s822 + $0x210] sm:$0xf]
        %v1954 = vld [vmem:[%s822 + $0x214] sm:$0xf]
        %v1955 = vld [vmem:[%s822 + $0x218] sm:$0xf]
        %v1956 = vld [vmem:[%s822 + $0x21c] sm:$0xf]
        %v1957 = vld [vmem:[%s822 + $0x220] sm:$0xf]
        %v1958 = vld [vmem:[%s822 + $0x224] sm:$0xf]
        %v1959 = vld [vmem:[%s822 + $0x228] sm:$0xf]
        %v1960 = vld [vmem:[%s822 + $0x22c] sm:$0xf]
        %v1961 = vld [vmem:[%s822 + $0x230] sm:$0xf]
        %v1962 = vld [vmem:[%s822 + $0x234] sm:$0xf]
        %v1963 = vld [vmem:[%s822 + $0x238] sm:$0xf]
        %v1964 = vld [vmem:[%s822 + $0x23c] sm:$0xf]
        %v1965 = vld [vmem:[%s822 + $0x240] sm:$0xf]
        %v1966 = vld [vmem:[%s822 + $0x244] sm:$0xf]
        %v1967 = vld [vmem:[%s822 + $0x248] sm:$0xf]
        %v1968 = vld [vmem:[%s822 + $0x24c] sm:$0xf]
        %v1969 = vld [vmem:[%s822 + $0x250] sm:$0xf]
        %v1970 = vld [vmem:[%s822 + $0x254] sm:$0xf]
        %v1971 = vld [vmem:[%s822 + $0x258] sm:$0xf]
        %v1972 = vld [vmem:[%s822 + $0x25c] sm:$0xf]
        %v1973 = vld [vmem:[%s822 + $0x260] sm:$0xf]
        %v1974 = vld [vmem:[%s822 + $0x264] sm:$0xf]
        %v1975 = vld [vmem:[%s822 + $0x268] sm:$0xf]
        %v1976 = vld [vmem:[%s822 + $0x26c] sm:$0xf]
        %v1977 = vld [vmem:[%s822 + $0x270] sm:$0xf]
        %v1978 = vld [vmem:[%s822 + $0x274] sm:$0xf]
        %v1979 = vld [vmem:[%s822 + $0x278] sm:$0xf]
        %v1980 = vld [vmem:[%s822 + $0x27c] sm:$0xf]
        %v1981 = vld [vmem:[%s822 + $0x280] sm:$0xf]
        %v1982 = vld [vmem:[%s822 + $0x284] sm:$0xf]
        %v1983 = vld [vmem:[%s822 + $0x288] sm:$0xf]
        %v1984 = vld [vmem:[%s822 + $0x28c] sm:$0xf]
        %v1985 = vld [vmem:[%s822 + $0x290] sm:$0xf]
        %v1986 = vld [vmem:[%s822 + $0x294] sm:$0xf]
        %v1987 = vld [vmem:[%s822 + $0x298] sm:$0xf]
        %v1988 = vld [vmem:[%s822 + $0x29c] sm:$0xf]
        %v1989 = vld [vmem:[%s822 + $0x2a0] sm:$0xf]
        %v1990 = vld [vmem:[%s822 + $0x2a4] sm:$0xf]
        %v1991 = vld [vmem:[%s822 + $0x2a8] sm:$0xf]
        %v1992 = vld [vmem:[%s822 + $0x2ac] sm:$0xf]
        %v1993 = vld [vmem:[%s822 + $0x2b0] sm:$0xf]
        %v1994 = vld [vmem:[%s822 + $0x2b4] sm:$0xf]
        %v1995 = vld [vmem:[%s822 + $0x2b8] sm:$0xf]
        %v1996 = vld [vmem:[%s822 + $0x2bc] sm:$0xf]
        %v1997 = vld [vmem:[%s822 + $0x2c0] sm:$0xf]
        %v1998 = vld [vmem:[%s822 + $0x2c4] sm:$0xf]
        %v1999 = vld [vmem:[%s822 + $0x2c8] sm:$0xf]
        %v2000 = vld [vmem:[%s822 + $0x2cc] sm:$0xf]
        %v2001 = vld [vmem:[%s822 + $0x2d0] sm:$0xf]
        %v2002 = vld [vmem:[%s822 + $0x2d4] sm:$0xf]
        %v2003 = vld [vmem:[%s822 + $0x2d8] sm:$0xf]
        %v2004 = vld [vmem:[%s822 + $0x2dc] sm:$0xf]
        %v2005 = vld [vmem:[%s822 + $0x2e0] sm:$0xf]
        %v2006 = vld [vmem:[%s822 + $0x2e4] sm:$0xf]
        %v2007 = vld [vmem:[%s822 + $0x2e8] sm:$0xf]
        %v2008 = vld [vmem:[%s822 + $0x2ec] sm:$0xf]
        %v2009 = vld [vmem:[%s822 + $0x2f0] sm:$0xf]
        %v2010 = vld [vmem:[%s822 + $0x2f4] sm:$0xf]
        %v2011 = vld [vmem:[%s822 + $0x2f8] sm:$0xf]
        %v2012 = vld [vmem:[%s822 + $0x2fc] sm:$0xf]
        %v2013 = vld [vmem:[%s822 + $0x300] sm:$0xf]
        %v2014 = vld [vmem:[%s822 + $0x304] sm:$0xf]
        %v2015 = vld [vmem:[%s822 + $0x308] sm:$0xf]
        %v2016 = vld [vmem:[%s822 + $0x30c] sm:$0xf]
        %v2017 = vld [vmem:[%s822 + $0x310] sm:$0xf]
        %v2018 = vld [vmem:[%s822 + $0x314] sm:$0xf]
        %v2019 = vld [vmem:[%s822 + $0x318] sm:$0xf]
        %v2020 = vld [vmem:[%s822 + $0x31c] sm:$0xf]
        %v2021 = vld [vmem:[%s822 + $0x320] sm:$0xf]
        %v2022 = vld [vmem:[%s822 + $0x324] sm:$0xf]
        %v2023 = vld [vmem:[%s822 + $0x328] sm:$0xf]
        %v2024 = vld [vmem:[%s822 + $0x32c] sm:$0xf]
        %v2025 = vld [vmem:[%s822 + $0x330] sm:$0xf]
        %v2026 = vld [vmem:[%s822 + $0x334] sm:$0xf]
        %v2027 = vld [vmem:[%s822 + $0x338] sm:$0xf]
        %v2028 = vld [vmem:[%s822 + $0x33c] sm:$0xf]
        %v2029 = vld [vmem:[%s822 + $0x340] sm:$0xf]
        %v2030 = vld [vmem:[%s822 + $0x344] sm:$0xf]
        %v2031 = vld [vmem:[%s822 + $0x348] sm:$0xf]
        %v2032 = vld [vmem:[%s822 + $0x34c] sm:$0xf]
        %v2033 = vld [vmem:[%s822 + $0x350] sm:$0xf]
        %v2034 = vld [vmem:[%s822 + $0x354] sm:$0xf]
        %v2035 = vld [vmem:[%s822 + $0x358] sm:$0xf]
        %v2036 = vld [vmem:[%s822 + $0x35c] sm:$0xf]
        %v2037 = vld [vmem:[%s822 + $0x360] sm:$0xf]
        %v2038 = vld [vmem:[%s822 + $0x364] sm:$0xf]
        %v2039 = vld [vmem:[%s822 + $0x368] sm:$0xf]
        %v2040 = vld [vmem:[%s822 + $0x36c] sm:$0xf]
        %v2041 = vld [vmem:[%s822 + $0x370] sm:$0xf]
        %v2042 = vld [vmem:[%s822 + $0x374] sm:$0xf]
        %v2043 = vld [vmem:[%s822 + $0x378] sm:$0xf]
        %v2044 = vld [vmem:[%s822 + $0x37c] sm:$0xf]
        %v2045 = vld [vmem:[%s822 + $0x380] sm:$0xf]
        %v2046 = vld [vmem:[%s822 + $0x384] sm:$0xf]
        %v2047 = vld [vmem:[%s822 + $0x388] sm:$0xf]
        %v2048 = vld [vmem:[%s822 + $0x38c] sm:$0xf]
        %v2049 = vld [vmem:[%s822 + $0x390] sm:$0xf]
        %v2050 = vld [vmem:[%s822 + $0x394] sm:$0xf]
        %v2051 = vld [vmem:[%s822 + $0x398] sm:$0xf]
        %v2052 = vld [vmem:[%s822 + $0x39c] sm:$0xf]
        %v2053 = vld [vmem:[%s822 + $0x3a0] sm:$0xf]
        %v2054 = vld [vmem:[%s822 + $0x3a4] sm:$0xf]
        %v2055 = vld [vmem:[%s822 + $0x3a8] sm:$0xf]
        %v2056 = vld [vmem:[%s822 + $0x3ac] sm:$0xf]
        %v2057 = vld [vmem:[%s822 + $0x3b0] sm:$0xf]
        %v2058 = vld [vmem:[%s822 + $0x3b4] sm:$0xf]
        %v2059 = vld [vmem:[%s822 + $0x3b8] sm:$0xf]
        %v2060 = vld [vmem:[%s822 + $0x3bc] sm:$0xf]
        %v2061 = vld [vmem:[%s822 + $0x3c0] sm:$0xf]
        %v2062 = vld [vmem:[%s822 + $0x3c4] sm:$0xf]
        %v2063 = vld [vmem:[%s822 + $0x3c8] sm:$0xf]
        %v2064 = vld [vmem:[%s822 + $0x3cc] sm:$0xf]
        %v2065 = vld [vmem:[%s822 + $0x3d0] sm:$0xf]
        %v2066 = vld [vmem:[%s822 + $0x3d4] sm:$0xf]
        %v2067 = vld [vmem:[%s822 + $0x3d8] sm:$0xf]
        %v2068 = vld [vmem:[%s822 + $0x3dc] sm:$0xf]
        %v2069 = vld [vmem:[%s822 + $0x3e0] sm:$0xf]
        %v2070 = vld [vmem:[%s822 + $0x3e4] sm:$0xf]
        %v2071 = vld [vmem:[%s822 + $0x3e8] sm:$0xf]
        %v2072 = vld [vmem:[%s822 + $0x3ec] sm:$0xf]
        %v2073 = vld [vmem:[%s822 + $0x3f0] sm:$0xf]
        %v2074 = vld [vmem:[%s822 + $0x3f4] sm:$0xf]
        %v2075 = vld [vmem:[%s822 + $0x3f8] sm:$0xf]
        %v2076 = vld [vmem:[%s822 + $0x3fc] sm:$0xf]
        %v2077 = vld [vmem:[%s825] sm:$0x1]
        %v2079 = vperm.slane %v2077, 0
        %v2337 = vunpack.c.l.b16 %v1821
        %v2338 = vunpack.c.l.b16 %v1822
        %v2339 = vunpack.c.l.b16 %v1823
        %v2340 = vunpack.c.l.b16 %v1824
        %v2341 = vunpack.c.l.b16 %v1825
        %v2342 = vunpack.c.l.b16 %v1826
        %v2343 = vunpack.c.l.b16 %v1827
        %v2344 = vunpack.c.l.b16 %v1828
        %v2345 = vunpack.c.l.b16 %v1829
        %v2346 = vunpack.c.l.b16 %v1830
        %v2347 = vunpack.c.l.b16 %v1831
        %v2348 = vunpack.c.l.b16 %v1832
        %v2349 = vunpack.c.l.b16 %v1833
        %v2350 = vunpack.c.l.b16 %v1834
        %v2351 = vunpack.c.l.b16 %v1835
        %v2352 = vunpack.c.l.b16 %v1836
        %v2353 = vunpack.c.l.b16 %v1837
        %v2354 = vunpack.c.l.b16 %v1838
        %v2355 = vunpack.c.l.b16 %v1839
        %v2356 = vunpack.c.l.b16 %v1840
        %v2357 = vunpack.c.l.b16 %v1841
        %v2358 = vunpack.c.l.b16 %v1842
        %v2359 = vunpack.c.l.b16 %v1843
        %v2360 = vunpack.c.l.b16 %v1844
        %v2361 = vunpack.c.l.b16 %v1845
        %v2362 = vunpack.c.l.b16 %v1846
        %v2363 = vunpack.c.l.b16 %v1847
        %v2364 = vunpack.c.l.b16 %v1848
        %v2365 = vunpack.c.l.b16 %v1849
        %v2366 = vunpack.c.l.b16 %v1850
        %v2367 = vunpack.c.l.b16 %v1851
        %v2368 = vunpack.c.l.b16 %v1852
        %v2369 = vunpack.c.l.b16 %v1853
        %v2370 = vunpack.c.l.b16 %v1854
        %v2371 = vunpack.c.l.b16 %v1855
        %v2372 = vunpack.c.l.b16 %v1856
        %v2373 = vunpack.c.l.b16 %v1857
        %v2374 = vunpack.c.l.b16 %v1858
        %v2375 = vunpack.c.l.b16 %v1859
        %v2376 = vunpack.c.l.b16 %v1860
        %v2377 = vunpack.c.l.b16 %v1861
        %v2378 = vunpack.c.l.b16 %v1862
        %v2379 = vunpack.c.l.b16 %v1863
        %v2380 = vunpack.c.l.b16 %v1864
        %v2381 = vunpack.c.l.b16 %v1865
        %v2382 = vunpack.c.l.b16 %v1866
        %v2383 = vunpack.c.l.b16 %v1867
        %v2384 = vunpack.c.l.b16 %v1868
        %v2385 = vunpack.c.l.b16 %v1869
        %v2386 = vunpack.c.l.b16 %v1870
        %v2387 = vunpack.c.l.b16 %v1871
        %v2388 = vunpack.c.l.b16 %v1872
        %v2389 = vunpack.c.l.b16 %v1873
        %v2390 = vunpack.c.l.b16 %v1874
        %v2391 = vunpack.c.l.b16 %v1875
        %v2392 = vunpack.c.l.b16 %v1876
        %v2393 = vunpack.c.l.b16 %v1877
        %v2394 = vunpack.c.l.b16 %v1878
        %v2395 = vunpack.c.l.b16 %v1879
        %v2396 = vunpack.c.l.b16 %v1880
        %v2397 = vunpack.c.l.b16 %v1881
        %v2398 = vunpack.c.l.b16 %v1882
        %v2399 = vunpack.c.l.b16 %v1883
        %v2400 = vunpack.c.l.b16 %v1884
        %v2401 = vunpack.c.l.b16 %v1885
        %v2402 = vunpack.c.l.b16 %v1886
        %v2403 = vunpack.c.l.b16 %v1887
        %v2404 = vunpack.c.l.b16 %v1888
        %v2405 = vunpack.c.l.b16 %v1889
        %v2406 = vunpack.c.l.b16 %v1890
        %v2407 = vunpack.c.l.b16 %v1891
        %v2408 = vunpack.c.l.b16 %v1892
        %v2409 = vunpack.c.l.b16 %v1893
        %v2410 = vunpack.c.l.b16 %v1894
        %v2411 = vunpack.c.l.b16 %v1895
        %v2412 = vunpack.c.l.b16 %v1896
        %v2413 = vunpack.c.l.b16 %v1897
        %v2414 = vunpack.c.l.b16 %v1898
        %v2415 = vunpack.c.l.b16 %v1899
        %v2416 = vunpack.c.l.b16 %v1900
        %v2417 = vunpack.c.l.b16 %v1901
        %v2418 = vunpack.c.l.b16 %v1902
        %v2419 = vunpack.c.l.b16 %v1903
        %v2420 = vunpack.c.l.b16 %v1904
        %v2421 = vunpack.c.l.b16 %v1905
        %v2422 = vunpack.c.l.b16 %v1906
        %v2423 = vunpack.c.l.b16 %v1907
        %v2424 = vunpack.c.l.b16 %v1908
        %v2425 = vunpack.c.l.b16 %v1909
        %v2426 = vunpack.c.l.b16 %v1910
        %v2427 = vunpack.c.l.b16 %v1911
        %v2428 = vunpack.c.l.b16 %v1912
        %v2429 = vunpack.c.l.b16 %v1913
        %v2430 = vunpack.c.l.b16 %v1914
        %v2431 = vunpack.c.l.b16 %v1915
        %v2432 = vunpack.c.l.b16 %v1916
        %v2433 = vunpack.c.l.b16 %v1917
        %v2434 = vunpack.c.l.b16 %v1918
        %v2435 = vunpack.c.l.b16 %v1919
        %v2436 = vunpack.c.l.b16 %v1920
        %v2437 = vunpack.c.l.b16 %v1921
        %v2438 = vunpack.c.l.b16 %v1922
        %v2439 = vunpack.c.l.b16 %v1923
        %v2440 = vunpack.c.l.b16 %v1924
        %v2441 = vunpack.c.l.b16 %v1925
        %v2442 = vunpack.c.l.b16 %v1926
        %v2443 = vunpack.c.l.b16 %v1927
        %v2444 = vunpack.c.l.b16 %v1928
        %v2445 = vunpack.c.l.b16 %v1929
        %v2446 = vunpack.c.l.b16 %v1930
        %v2447 = vunpack.c.l.b16 %v1931
        %v2448 = vunpack.c.l.b16 %v1932
        %v2449 = vunpack.c.l.b16 %v1933
        %v2450 = vunpack.c.l.b16 %v1934
        %v2451 = vunpack.c.l.b16 %v1935
        %v2452 = vunpack.c.l.b16 %v1936
        %v2453 = vunpack.c.l.b16 %v1937
        %v2454 = vunpack.c.l.b16 %v1938
        %v2455 = vunpack.c.l.b16 %v1939
        %v2456 = vunpack.c.l.b16 %v1940
        %v2457 = vunpack.c.l.b16 %v1941
        %v2458 = vunpack.c.l.b16 %v1942
        %v2459 = vunpack.c.l.b16 %v1943
        %v2460 = vunpack.c.l.b16 %v1944
        %v2461 = vunpack.c.l.b16 %v1945
        %v2462 = vunpack.c.l.b16 %v1946
        %v2463 = vunpack.c.l.b16 %v1947
        %v2464 = vunpack.c.l.b16 %v1948
        %v2465 = vunpack.c.l.b16 %v1949
        %v2466 = vunpack.c.l.b16 %v1950
        %v2467 = vunpack.c.l.b16 %v1951
        %v2468 = vunpack.c.l.b16 %v1952
        %v2469 = vunpack.c.l.b16 %v1953
        %v2470 = vunpack.c.l.b16 %v1954
        %v2471 = vunpack.c.l.b16 %v1955
        %v2472 = vunpack.c.l.b16 %v1956
        %v2473 = vunpack.c.l.b16 %v1957
        %v2474 = vunpack.c.l.b16 %v1958
        %v2475 = vunpack.c.l.b16 %v1959
        %v2476 = vunpack.c.l.b16 %v1960
        %v2477 = vunpack.c.l.b16 %v1961
        %v2478 = vunpack.c.l.b16 %v1962
        %v2479 = vunpack.c.l.b16 %v1963
        %v2480 = vunpack.c.l.b16 %v1964
        %v2481 = vunpack.c.l.b16 %v1965
        %v2482 = vunpack.c.l.b16 %v1966
        %v2483 = vunpack.c.l.b16 %v1967
        %v2484 = vunpack.c.l.b16 %v1968
        %v2485 = vunpack.c.l.b16 %v1969
        %v2486 = vunpack.c.l.b16 %v1970
        %v2487 = vunpack.c.l.b16 %v1971
        %v2488 = vunpack.c.l.b16 %v1972
        %v2489 = vunpack.c.l.b16 %v1973
        %v2490 = vunpack.c.l.b16 %v1974
        %v2491 = vunpack.c.l.b16 %v1975
        %v2492 = vunpack.c.l.b16 %v1976
        %v2493 = vunpack.c.l.b16 %v1977
        %v2494 = vunpack.c.l.b16 %v1978
        %v2495 = vunpack.c.l.b16 %v1979
        %v2496 = vunpack.c.l.b16 %v1980
        %v2497 = vunpack.c.l.b16 %v1981
        %v2498 = vunpack.c.l.b16 %v1982
        %v2499 = vunpack.c.l.b16 %v1983
        %v2500 = vunpack.c.l.b16 %v1984
        %v2501 = vunpack.c.l.b16 %v1985
        %v2502 = vunpack.c.l.b16 %v1986
        %v2503 = vunpack.c.l.b16 %v1987
        %v2504 = vunpack.c.l.b16 %v1988
        %v2505 = vunpack.c.l.b16 %v1989
        %v2506 = vunpack.c.l.b16 %v1990
        %v2507 = vunpack.c.l.b16 %v1991
        %v2508 = vunpack.c.l.b16 %v1992
        %v2509 = vunpack.c.l.b16 %v1993
        %v2510 = vunpack.c.l.b16 %v1994
        %v2511 = vunpack.c.l.b16 %v1995
        %v2512 = vunpack.c.l.b16 %v1996
        %v2513 = vunpack.c.l.b16 %v1997
        %v2514 = vunpack.c.l.b16 %v1998
        %v2515 = vunpack.c.l.b16 %v1999
        %v2516 = vunpack.c.l.b16 %v2000
        %v2517 = vunpack.c.l.b16 %v2001
        %v2518 = vunpack.c.l.b16 %v2002
        %v2519 = vunpack.c.l.b16 %v2003
        %v2520 = vunpack.c.l.b16 %v2004
        %v2521 = vunpack.c.l.b16 %v2005
        %v2522 = vunpack.c.l.b16 %v2006
        %v2523 = vunpack.c.l.b16 %v2007
        %v2524 = vunpack.c.l.b16 %v2008
        %v2525 = vunpack.c.l.b16 %v2009
        %v2526 = vunpack.c.l.b16 %v2010
        %v2527 = vunpack.c.l.b16 %v2011
        %v2528 = vunpack.c.l.b16 %v2012
        %v2529 = vunpack.c.l.b16 %v2013
        %v2530 = vunpack.c.l.b16 %v2014
        %v2531 = vunpack.c.l.b16 %v2015
        %v2532 = vunpack.c.l.b16 %v2016
        %v2533 = vunpack.c.l.b16 %v2017
        %v2534 = vunpack.c.l.b16 %v2018
        %v2535 = vunpack.c.l.b16 %v2019
        %v2536 = vunpack.c.l.b16 %v2020
        %v2537 = vunpack.c.l.b16 %v2021
        %v2538 = vunpack.c.l.b16 %v2022
        %v2539 = vunpack.c.l.b16 %v2023
        %v2540 = vunpack.c.l.b16 %v2024
        %v2541 = vunpack.c.l.b16 %v2025
        %v2542 = vunpack.c.l.b16 %v2026
        %v2543 = vunpack.c.l.b16 %v2027
        %v2544 = vunpack.c.l.b16 %v2028
        %v2545 = vunpack.c.l.b16 %v2029
        %v2546 = vunpack.c.l.b16 %v2030
        %v2547 = vunpack.c.l.b16 %v2031
        %v2548 = vunpack.c.l.b16 %v2032
        %v2549 = vunpack.c.l.b16 %v2033
        %v2550 = vunpack.c.l.b16 %v2034
        %v2551 = vunpack.c.l.b16 %v2035
        %v2552 = vunpack.c.l.b16 %v2036
        %v2553 = vunpack.c.l.b16 %v2037
        %v2554 = vunpack.c.l.b16 %v2038
        %v2555 = vunpack.c.l.b16 %v2039
        %v2556 = vunpack.c.l.b16 %v2040
        %v2557 = vunpack.c.l.b16 %v2041
        %v2558 = vunpack.c.l.b16 %v2042
        %v2559 = vunpack.c.l.b16 %v2043
        %v2560 = vunpack.c.l.b16 %v2044
        %v2561 = vunpack.c.l.b16 %v2045
        %v2562 = vunpack.c.l.b16 %v2046
        %v2563 = vunpack.c.l.b16 %v2047
        %v2564 = vunpack.c.l.b16 %v2048
        %v2565 = vunpack.c.l.b16 %v2049
        %v2566 = vunpack.c.l.b16 %v2050
        %v2567 = vunpack.c.l.b16 %v2051
        %v2568 = vunpack.c.l.b16 %v2052
        %v2569 = vunpack.c.l.b16 %v2053
        %v2570 = vunpack.c.l.b16 %v2054
        %v2571 = vunpack.c.l.b16 %v2055
        %v2572 = vunpack.c.l.b16 %v2056
        %v2573 = vunpack.c.l.b16 %v2057
        %v2574 = vunpack.c.l.b16 %v2058
        %v2575 = vunpack.c.l.b16 %v2059
        %v2576 = vunpack.c.l.b16 %v2060
        %v2577 = vunpack.c.l.b16 %v2061
        %v2578 = vunpack.c.l.b16 %v2062
        %v2579 = vunpack.c.l.b16 %v2063
        %v2580 = vunpack.c.l.b16 %v2064
        %v2581 = vunpack.c.l.b16 %v2065
        %v2582 = vunpack.c.l.b16 %v2066
        %v2583 = vunpack.c.l.b16 %v2067
        %v2584 = vunpack.c.l.b16 %v2068
        %v2585 = vunpack.c.l.b16 %v2069
        %v2586 = vunpack.c.l.b16 %v2070
        %v2587 = vunpack.c.l.b16 %v2071
        %v2588 = vunpack.c.l.b16 %v2072
        %v2589 = vunpack.c.l.b16 %v2073
        %v2590 = vunpack.c.l.b16 %v2074
        %v2591 = vunpack.c.l.b16 %v2075
        %v2592 = vunpack.c.l.b16 %v2076
        %v2593 = vpack.c.b16 %v2338, %v2337
        %v2594 = vpack.c.b16 %v2340, %v2339
        %v2595 = vpack.c.b16 %v2342, %v2341
        %v2596 = vpack.c.b16 %v2344, %v2343
        %v2597 = vpack.c.b16 %v2346, %v2345
        %v2598 = vpack.c.b16 %v2348, %v2347
        %v2599 = vpack.c.b16 %v2350, %v2349
        %v2600 = vpack.c.b16 %v2352, %v2351
        %v2601 = vpack.c.b16 %v2354, %v2353
        %v2602 = vpack.c.b16 %v2356, %v2355
        %v2603 = vpack.c.b16 %v2358, %v2357
        %v2604 = vpack.c.b16 %v2360, %v2359
        %v2605 = vpack.c.b16 %v2362, %v2361
        %v2606 = vpack.c.b16 %v2364, %v2363
        %v2607 = vpack.c.b16 %v2366, %v2365
        %v2608 = vpack.c.b16 %v2368, %v2367
        %v2609 = vpack.c.b16 %v2370, %v2369
        %v2610 = vpack.c.b16 %v2372, %v2371
        %v2611 = vpack.c.b16 %v2374, %v2373
        %v2612 = vpack.c.b16 %v2376, %v2375
        %v2613 = vpack.c.b16 %v2378, %v2377
        %v2614 = vpack.c.b16 %v2380, %v2379
        %v2615 = vpack.c.b16 %v2382, %v2381
        %v2616 = vpack.c.b16 %v2384, %v2383
        %v2617 = vpack.c.b16 %v2386, %v2385
        %v2618 = vpack.c.b16 %v2388, %v2387
        %v2619 = vpack.c.b16 %v2390, %v2389
        %v2620 = vpack.c.b16 %v2392, %v2391
        %v2621 = vpack.c.b16 %v2394, %v2393
        %v2622 = vpack.c.b16 %v2396, %v2395
        %v2623 = vpack.c.b16 %v2398, %v2397
        %v2624 = vpack.c.b16 %v2400, %v2399
        %v2625 = vpack.c.b16 %v2402, %v2401
        %v2626 = vpack.c.b16 %v2404, %v2403
        %v2627 = vpack.c.b16 %v2406, %v2405
        %v2628 = vpack.c.b16 %v2408, %v2407
        %v2629 = vpack.c.b16 %v2410, %v2409
        %v2630 = vpack.c.b16 %v2412, %v2411
        %v2631 = vpack.c.b16 %v2414, %v2413
        %v2632 = vpack.c.b16 %v2416, %v2415
        %v2633 = vpack.c.b16 %v2418, %v2417
        %v2634 = vpack.c.b16 %v2420, %v2419
        %v2635 = vpack.c.b16 %v2422, %v2421
        %v2636 = vpack.c.b16 %v2424, %v2423
        %v2637 = vpack.c.b16 %v2426, %v2425
        %v2638 = vpack.c.b16 %v2428, %v2427
        %v2639 = vpack.c.b16 %v2430, %v2429
        %v2640 = vpack.c.b16 %v2432, %v2431
        %v2641 = vpack.c.b16 %v2434, %v2433
        %v2642 = vpack.c.b16 %v2436, %v2435
        %v2643 = vpack.c.b16 %v2438, %v2437
        %v2644 = vpack.c.b16 %v2440, %v2439
        %v2645 = vpack.c.b16 %v2442, %v2441
        %v2646 = vpack.c.b16 %v2444, %v2443
        %v2647 = vpack.c.b16 %v2446, %v2445
        %v2648 = vpack.c.b16 %v2448, %v2447
        %v2649 = vpack.c.b16 %v2450, %v2449
        %v2650 = vpack.c.b16 %v2452, %v2451
        %v2651 = vpack.c.b16 %v2454, %v2453
        %v2652 = vpack.c.b16 %v2456, %v2455
        %v2653 = vpack.c.b16 %v2458, %v2457
        %v2654 = vpack.c.b16 %v2460, %v2459
        %v2655 = vpack.c.b16 %v2462, %v2461
        %v2656 = vpack.c.b16 %v2464, %v2463
        %v2657 = vpack.c.b16 %v2466, %v2465
        %v2658 = vpack.c.b16 %v2468, %v2467
        %v2659 = vpack.c.b16 %v2470, %v2469
        %v2660 = vpack.c.b16 %v2472, %v2471
        %v2661 = vpack.c.b16 %v2474, %v2473
        %v2662 = vpack.c.b16 %v2476, %v2475
        %v2663 = vpack.c.b16 %v2478, %v2477
        %v2664 = vpack.c.b16 %v2480, %v2479
        %v2665 = vpack.c.b16 %v2482, %v2481
        %v2666 = vpack.c.b16 %v2484, %v2483
        %v2667 = vpack.c.b16 %v2486, %v2485
        %v2668 = vpack.c.b16 %v2488, %v2487
        %v2669 = vpack.c.b16 %v2490, %v2489
        %v2670 = vpack.c.b16 %v2492, %v2491
        %v2671 = vpack.c.b16 %v2494, %v2493
        %v2672 = vpack.c.b16 %v2496, %v2495
        %v2673 = vpack.c.b16 %v2498, %v2497
        %v2674 = vpack.c.b16 %v2500, %v2499
        %v2675 = vpack.c.b16 %v2502, %v2501
        %v2676 = vpack.c.b16 %v2504, %v2503
        %v2677 = vpack.c.b16 %v2506, %v2505
        %v2678 = vpack.c.b16 %v2508, %v2507
        %v2679 = vpack.c.b16 %v2510, %v2509
        %v2680 = vpack.c.b16 %v2512, %v2511
        %v2681 = vpack.c.b16 %v2514, %v2513
        %v2682 = vpack.c.b16 %v2516, %v2515
        %v2683 = vpack.c.b16 %v2518, %v2517
        %v2684 = vpack.c.b16 %v2520, %v2519
        %v2685 = vpack.c.b16 %v2522, %v2521
        %v2686 = vpack.c.b16 %v2524, %v2523
        %v2687 = vpack.c.b16 %v2526, %v2525
        %v2688 = vpack.c.b16 %v2528, %v2527
        %v2689 = vpack.c.b16 %v2530, %v2529
        %v2690 = vpack.c.b16 %v2532, %v2531
        %v2691 = vpack.c.b16 %v2534, %v2533
        %v2692 = vpack.c.b16 %v2536, %v2535
        %v2693 = vpack.c.b16 %v2538, %v2537
        %v2694 = vpack.c.b16 %v2540, %v2539
        %v2695 = vpack.c.b16 %v2542, %v2541
        %v2696 = vpack.c.b16 %v2544, %v2543
        %v2697 = vpack.c.b16 %v2546, %v2545
        %v2698 = vpack.c.b16 %v2548, %v2547
        %v2699 = vpack.c.b16 %v2550, %v2549
        %v2700 = vpack.c.b16 %v2552, %v2551
        %v2701 = vpack.c.b16 %v2554, %v2553
        %v2702 = vpack.c.b16 %v2556, %v2555
        %v2703 = vpack.c.b16 %v2558, %v2557
        %v2704 = vpack.c.b16 %v2560, %v2559
        %v2705 = vpack.c.b16 %v2562, %v2561
        %v2706 = vpack.c.b16 %v2564, %v2563
        %v2707 = vpack.c.b16 %v2566, %v2565
        %v2708 = vpack.c.b16 %v2568, %v2567
        %v2709 = vpack.c.b16 %v2570, %v2569
        %v2710 = vpack.c.b16 %v2572, %v2571
        %v2711 = vpack.c.b16 %v2574, %v2573
        %v2712 = vpack.c.b16 %v2576, %v2575
        %v2713 = vpack.c.b16 %v2578, %v2577
        %v2714 = vpack.c.b16 %v2580, %v2579
        %v2715 = vpack.c.b16 %v2582, %v2581
        %v2716 = vpack.c.b16 %v2584, %v2583
        %v2717 = vpack.c.b16 %v2586, %v2585
        %v2718 = vpack.c.b16 %v2588, %v2587
        %v2719 = vpack.c.b16 %v2590, %v2589
        %v2720 = vpack.c.b16 %v2592, %v2591
        %2849 = vmatpush.bf16.msra.mxu0 %v2600
        %2850 = vmatpush.bf16.msra.mxu0 %v2599
        %2851 = vmatpush.bf16.msra.mxu0 %v2598
        %2852 = vmatpush.bf16.msra.mxu0 %v2597
        %2853 = vmatpush.bf16.msra.mxu0 %v2596
        %2854 = vmatpush.bf16.msra.mxu0 %v2595
        %2855 = vmatpush.bf16.msra.mxu0 %v2594
        %2856 = vmatpush.bf16.msra.mxu0 %v2593
        %2857 = vmatmul.bf16.gmra.mxu0 %v1805
        %v2858 = vpop.f32.mrf.mxu0
        %v2859 = vadd.f32 %v2079, %v2858
        %v2860 = vpop.f32.mrf.mxu0
        %v2861 = vadd.f32 %v2079, %v2860
        %2862 = vdwg.mxu0
        %2863 = vmatpush.bf16.msra.mxu0 %v2608
        %2864 = vmatpush.bf16.msra.mxu0 %v2607
        %2865 = vmatpush.bf16.msra.mxu0 %v2606
        %2866 = vmatpush.bf16.msra.mxu0 %v2605
        %2867 = vmatpush.bf16.msra.mxu0 %v2604
        %2868 = vmatpush.bf16.msra.mxu0 %v2603
        %2869 = vmatpush.bf16.msra.mxu0 %v2602
        %2870 = vmatpush.bf16.msra.mxu0 %v2601
        %2871 = vmatmul.bf16.gmra.mxu0 %v1806
        %v2872 = vpop.f32.mrf.mxu0
        %v2873 = vadd.f32 %v2859, %v2872
        %v2874 = vpop.f32.mrf.mxu0
        %v2875 = vadd.f32 %v2861, %v2874
        %2876 = vdwg.mxu0
        %2877 = vmatpush.bf16.msra.mxu0 %v2616
        %2878 = vmatpush.bf16.msra.mxu0 %v2615
        %2879 = vmatpush.bf16.msra.mxu0 %v2614
        %2880 = vmatpush.bf16.msra.mxu0 %v2613
        %2881 = vmatpush.bf16.msra.mxu0 %v2612
        %2882 = vmatpush.bf16.msra.mxu0 %v2611
        %2883 = vmatpush.bf16.msra.mxu0 %v2610
        %2884 = vmatpush.bf16.msra.mxu0 %v2609
        %2885 = vmatmul.bf16.gmra.mxu0 %v1807
        %v2886 = vpop.f32.mrf.mxu0
        %v2887 = vadd.f32 %v2873, %v2886
        %v2888 = vpop.f32.mrf.mxu0
        %v2889 = vadd.f32 %v2875, %v2888
        %2890 = vdwg.mxu0
        %2891 = vmatpush.bf16.msra.mxu0 %v2624
        %2892 = vmatpush.bf16.msra.mxu0 %v2623
        %2893 = vmatpush.bf16.msra.mxu0 %v2622
        %2894 = vmatpush.bf16.msra.mxu0 %v2621
        %2895 = vmatpush.bf16.msra.mxu0 %v2620
        %2896 = vmatpush.bf16.msra.mxu0 %v2619
        %2897 = vmatpush.bf16.msra.mxu0 %v2618
        %2898 = vmatpush.bf16.msra.mxu0 %v2617
        %2899 = vmatmul.bf16.gmra.mxu0 %v1808
        %v2900 = vpop.f32.mrf.mxu0
        %v2901 = vadd.f32 %v2887, %v2900
        %v2902 = vpop.f32.mrf.mxu0
        %v2903 = vadd.f32 %v2889, %v2902
        %2904 = vdwg.mxu0
        %2905 = vmatpush.bf16.msra.mxu0 %v2632
        %2906 = vmatpush.bf16.msra.mxu0 %v2631
        %2907 = vmatpush.bf16.msra.mxu0 %v2630
        %2908 = vmatpush.bf16.msra.mxu0 %v2629
        %2909 = vmatpush.bf16.msra.mxu0 %v2628
        %2910 = vmatpush.bf16.msra.mxu0 %v2627
        %2911 = vmatpush.bf16.msra.mxu0 %v2626
        %2912 = vmatpush.bf16.msra.mxu0 %v2625
        %2913 = vmatmul.bf16.gmra.mxu0 %v1809
        %v2914 = vpop.f32.mrf.mxu0
        %v2915 = vadd.f32 %v2901, %v2914
        %v2916 = vpop.f32.mrf.mxu0
        %v2917 = vadd.f32 %v2903, %v2916
        %2918 = vdwg.mxu0
        %2919 = vmatpush.bf16.msra.mxu0 %v2640
        %2920 = vmatpush.bf16.msra.mxu0 %v2639
        %2921 = vmatpush.bf16.msra.mxu0 %v2638
        %2922 = vmatpush.bf16.msra.mxu0 %v2637
        %2923 = vmatpush.bf16.msra.mxu0 %v2636
        %2924 = vmatpush.bf16.msra.mxu0 %v2635
        %2925 = vmatpush.bf16.msra.mxu0 %v2634
        %2926 = vmatpush.bf16.msra.mxu0 %v2633
        %2927 = vmatmul.bf16.gmra.mxu0 %v1810
        %v2928 = vpop.f32.mrf.mxu0
        %v2929 = vadd.f32 %v2915, %v2928
        %v2930 = vpop.f32.mrf.mxu0
        %v2931 = vadd.f32 %v2917, %v2930
        %2932 = vdwg.mxu0
        %2933 = vmatpush.bf16.msra.mxu0 %v2648
        %2934 = vmatpush.bf16.msra.mxu0 %v2647
        %2935 = vmatpush.bf16.msra.mxu0 %v2646
        %2936 = vmatpush.bf16.msra.mxu0 %v2645
        %2937 = vmatpush.bf16.msra.mxu0 %v2644
        %2938 = vmatpush.bf16.msra.mxu0 %v2643
        %2939 = vmatpush.bf16.msra.mxu0 %v2642
        %2940 = vmatpush.bf16.msra.mxu0 %v2641
        %2941 = vmatmul.bf16.gmra.mxu0 %v1811
        %v2942 = vpop.f32.mrf.mxu0
        %v2943 = vadd.f32 %v2929, %v2942
        %v2944 = vpop.f32.mrf.mxu0
        %v2945 = vadd.f32 %v2931, %v2944
        %2946 = vdwg.mxu0
        %2947 = vmatpush.bf16.msra.mxu0 %v2656
        %2948 = vmatpush.bf16.msra.mxu0 %v2655
        %2949 = vmatpush.bf16.msra.mxu0 %v2654
        %2950 = vmatpush.bf16.msra.mxu0 %v2653
        %2951 = vmatpush.bf16.msra.mxu0 %v2652
        %2952 = vmatpush.bf16.msra.mxu0 %v2651
        %2953 = vmatpush.bf16.msra.mxu0 %v2650
        %2954 = vmatpush.bf16.msra.mxu0 %v2649
        %2955 = vmatmul.bf16.gmra.mxu0 %v1812
        %v2956 = vpop.f32.mrf.mxu0
        %v2957 = vadd.f32 %v2943, %v2956
        %v2958 = vpop.f32.mrf.mxu0
        %v2959 = vadd.f32 %v2945, %v2958
        %2960 = vdwg.mxu0
        %2961 = vmatpush.bf16.msra.mxu0 %v2664
        %2962 = vmatpush.bf16.msra.mxu0 %v2663
        %2963 = vmatpush.bf16.msra.mxu0 %v2662
        %2964 = vmatpush.bf16.msra.mxu0 %v2661
        %2965 = vmatpush.bf16.msra.mxu0 %v2660
        %2966 = vmatpush.bf16.msra.mxu0 %v2659
        %2967 = vmatpush.bf16.msra.mxu0 %v2658
        %2968 = vmatpush.bf16.msra.mxu0 %v2657
        %2969 = vmatmul.bf16.gmra.mxu0 %v1813
        %v2970 = vpop.f32.mrf.mxu0
        %v2971 = vadd.f32 %v2957, %v2970
        %v2972 = vpop.f32.mrf.mxu0
        %v2973 = vadd.f32 %v2959, %v2972
        %2974 = vdwg.mxu0
        %2975 = vmatpush.bf16.msra.mxu0 %v2672
        %2976 = vmatpush.bf16.msra.mxu0 %v2671
        %2977 = vmatpush.bf16.msra.mxu0 %v2670
        %2978 = vmatpush.bf16.msra.mxu0 %v2669
        %2979 = vmatpush.bf16.msra.mxu0 %v2668
        %2980 = vmatpush.bf16.msra.mxu0 %v2667
        %2981 = vmatpush.bf16.msra.mxu0 %v2666
        %2982 = vmatpush.bf16.msra.mxu0 %v2665
        %2983 = vmatmul.bf16.gmra.mxu0 %v1814
        %v2984 = vpop.f32.mrf.mxu0
        %v2985 = vadd.f32 %v2971, %v2984
        %v2986 = vpop.f32.mrf.mxu0
        %v2987 = vadd.f32 %v2973, %v2986
        %2988 = vdwg.mxu0
        %2989 = vmatpush.bf16.msra.mxu0 %v2680
        %2990 = vmatpush.bf16.msra.mxu0 %v2679
        %2991 = vmatpush.bf16.msra.mxu0 %v2678
        %2992 = vmatpush.bf16.msra.mxu0 %v2677
        %2993 = vmatpush.bf16.msra.mxu0 %v2676
        %2994 = vmatpush.bf16.msra.mxu0 %v2675
        %2995 = vmatpush.bf16.msra.mxu0 %v2674
        %2996 = vmatpush.bf16.msra.mxu0 %v2673
        %2997 = vmatmul.bf16.gmra.mxu0 %v1815
        %v2998 = vpop.f32.mrf.mxu0
        %v2999 = vadd.f32 %v2985, %v2998
        %v3000 = vpop.f32.mrf.mxu0
        %v3001 = vadd.f32 %v2987, %v3000
        %3002 = vdwg.mxu0
        %3003 = vmatpush.bf16.msra.mxu0 %v2688
        %3004 = vmatpush.bf16.msra.mxu0 %v2687
        %3005 = vmatpush.bf16.msra.mxu0 %v2686
        %3006 = vmatpush.bf16.msra.mxu0 %v2685
        %3007 = vmatpush.bf16.msra.mxu0 %v2684
        %3008 = vmatpush.bf16.msra.mxu0 %v2683
        %3009 = vmatpush.bf16.msra.mxu0 %v2682
        %3010 = vmatpush.bf16.msra.mxu0 %v2681
        %3011 = vmatmul.bf16.gmra.mxu0 %v1816
        %v3012 = vpop.f32.mrf.mxu0
        %v3013 = vadd.f32 %v2999, %v3012
        %v3014 = vpop.f32.mrf.mxu0
        %v3015 = vadd.f32 %v3001, %v3014
        %3016 = vdwg.mxu0
        %3017 = vmatpush.bf16.msra.mxu0 %v2696
        %3018 = vmatpush.bf16.msra.mxu0 %v2695
        %3019 = vmatpush.bf16.msra.mxu0 %v2694
        %3020 = vmatpush.bf16.msra.mxu0 %v2693
        %3021 = vmatpush.bf16.msra.mxu0 %v2692
        %3022 = vmatpush.bf16.msra.mxu0 %v2691
        %3023 = vmatpush.bf16.msra.mxu0 %v2690
        %3024 = vmatpush.bf16.msra.mxu0 %v2689
        %3025 = vmatmul.bf16.gmra.mxu0 %v1817
        %v3026 = vpop.f32.mrf.mxu0
        %v3027 = vadd.f32 %v3013, %v3026
        %v3028 = vpop.f32.mrf.mxu0
        %v3029 = vadd.f32 %v3015, %v3028
        %3030 = vdwg.mxu0
        %3031 = vmatpush.bf16.msra.mxu0 %v2704
        %3032 = vmatpush.bf16.msra.mxu0 %v2703
        %3033 = vmatpush.bf16.msra.mxu0 %v2702
        %3034 = vmatpush.bf16.msra.mxu0 %v2701
        %3035 = vmatpush.bf16.msra.mxu0 %v2700
        %3036 = vmatpush.bf16.msra.mxu0 %v2699
        %3037 = vmatpush.bf16.msra.mxu0 %v2698
        %3038 = vmatpush.bf16.msra.mxu0 %v2697
        %3039 = vmatmul.bf16.gmra.mxu0 %v1818
        %v3040 = vpop.f32.mrf.mxu0
        %v3041 = vadd.f32 %v3027, %v3040
        %v3042 = vpop.f32.mrf.mxu0
        %v3043 = vadd.f32 %v3029, %v3042
        %3044 = vdwg.mxu0
        %3045 = vmatpush.bf16.msra.mxu0 %v2712
        %3046 = vmatpush.bf16.msra.mxu0 %v2711
        %3047 = vmatpush.bf16.msra.mxu0 %v2710
        %3048 = vmatpush.bf16.msra.mxu0 %v2709
        %3049 = vmatpush.bf16.msra.mxu0 %v2708
        %3050 = vmatpush.bf16.msra.mxu0 %v2707
        %3051 = vmatpush.bf16.msra.mxu0 %v2706
        %3052 = vmatpush.bf16.msra.mxu0 %v2705
        %3053 = vmatmul.bf16.gmra.mxu0 %v1819
        %v3054 = vpop.f32.mrf.mxu0
        %v3055 = vadd.f32 %v3041, %v3054
        %v3056 = vpop.f32.mrf.mxu0
        %v3057 = vadd.f32 %v3043, %v3056
        %3058 = vdwg.mxu0
        %3059 = vmatpush.bf16.msra.mxu0 %v2720
        %3060 = vmatpush.bf16.msra.mxu0 %v2719
        %3061 = vmatpush.bf16.msra.mxu0 %v2718
        %3062 = vmatpush.bf16.msra.mxu0 %v2717
        %3063 = vmatpush.bf16.msra.mxu0 %v2716
        %3064 = vmatpush.bf16.msra.mxu0 %v2715
        %3065 = vmatpush.bf16.msra.mxu0 %v2714
        %3066 = vmatpush.bf16.msra.mxu0 %v2713
        %3067 = vmatmul.bf16.gmra.mxu0 %v1820
        %v3068 = vpop.f32.mrf.mxu0
        %v3069 = vadd.f32 %v3055, %v3068
        %v3070 = vpop.f32.mrf.mxu0
        %v3071 = vadd.f32 %v3057, %v3070
        %3072 = vdwg.mxu0
        %v3073 = vadd.f32 %v1315, %v3069
        %v3074 = vadd.f32 %v1316, %v3071
        %v3075 = vld [vmem:[%s828] sm:$0x1]
        %v3076 = vld [vmem:[%s831] sm:$0x1]
        %v3077 = vsel %vm903, %v3073, 0.0
        %3078 = vadd.xlane.f32.xlu0 %v3077
        %v3079 = vpop.xlane.xlu0 %3078
        %v3080 = vsel %vm903, %v3074, 0.0
        %3081 = vadd.xlane.f32.xlu0 %v3080
        %v3082 = vpop.xlane.xlu0 %3081
        %v3083 = vmul.f32 %v3079, %v1268
        %v3084 = vmul.f32 %v3082, %v1268
        %v3085 = vsub.f32 %v3073, %v3083
        %v3086 = vsub.f32 %v3074, %v3084
        %v3087 = vmul.f32 %v3085, %v3085
        %v3088 = vmul.f32 %v3086, %v3086
        %v3089 = vsel %vm903, %v3087, 0.0
        %3090 = vadd.xlane.f32.xlu0 %v3089
        %v3091 = vpop.xlane.xlu0 %3090
        %v3092 = vsel %vm903, %v3088, 0.0
        %3093 = vadd.xlane.f32.xlu0 %v3092
        %v3094 = vpop.xlane.xlu0 %3093
        %v3095 = vmul.f32 %v3091, %v1268
        %v3096 = vmul.f32 %v3094, %v1268
        %v3097 = vadd.f32 %v3095, 1e-05
        %v3098 = vadd.f32 %v3096, 1e-05
        %v3099 = vrsqrt.pop %v3097
        %v3100 = vmul.f32 %v3099, %v3097
        %v3101 = vmul.f32 %v3100, %v3099
        %v3102 = vmul.f32 0.5, %v3101
        %v3103 = vsub.f32 1.5, %v3102
        %v3104 = vmul.f32 %v3099, %v3103
        %vm3105 = vweird.f32 %v3097
        %vm3106 = vweird.f32 %v3099
        %vm3107 = vmor %vm3105, %vm3106
        %v3108 = vsel %vm3107, %v3099, %v3104
        %v3109 = vrsqrt.pop %v3098
        %v3110 = vmul.f32 %v3109, %v3098
        %v3111 = vmul.f32 %v3110, %v3109
        %v3112 = vmul.f32 0.5, %v3111
        %v3113 = vsub.f32 1.5, %v3112
        %v3114 = vmul.f32 %v3109, %v3113
        %vm3115 = vweird.f32 %v3098
        %vm3116 = vweird.f32 %v3109
        %vm3117 = vmor %vm3115, %vm3116
        %v3118 = vsel %vm3117, %v3109, %v3114
        %v3119 = vmul.f32 %v3085, %v3108
        %v3120 = vmul.f32 %v3086, %v3118
        %v3122 = vperm.slane %v3075, 0
        %v3124 = vmul.f32 %v3119, %v3122
        %v3125 = vmul.f32 %v3120, %v3122
        %v3127 = vperm.slane %v3076, 0
        %v3129 = vadd.f32 %v3124, %v3127
        %v3130 = vadd.f32 %v3125, %v3127
        %3131 = vst.msk [vmem:[#allocation2] sm:$0xff] %vm903, %v3129
        %3132 = vst.msk [vmem:[#allocation2 + $0x8] sm:$0xff] %vm903, %v3130
        %p3133 = scmp.eq.s32.totalorder %s31, 1
        // Predicated region
        $region101: #{transformer_model_forward.3} parent=95 // pred_check
          %p3134 = pneg %p3133
        $region102: #{transformer_model_forward.3} parent=95 // pred_check_branch
          %3136 = sbr.rel (%p3134) target = $region104
        $region103: #{transformer_model_forward.3} parent=95 // pred_region
          %v3137 = vld [vmem:[#allocation2] sm:$0xff]
          %v3138 = vld [vmem:[#allocation2 + $0x8] sm:$0xff]
          %v3139 = vpack.c.bf16 %v3138, %v3137
          %v3140 = vld [vmem:[%s17] sm:$0xf]
          %v3141 = vld [vmem:[%s17 + $0x4] sm:$0xf]
          %v3142 = vld [vmem:[%s17 + $0x8] sm:$0xf]
          %v3143 = vld [vmem:[%s17 + $0xc] sm:$0xf]
          %v3144 = vld [vmem:[%s18] sm:$0x1]
          %v3146 = vperm.slane %v3144, 0
          %v3152 = vunpack.c.l.b16 %v3140
          %v3153 = vunpack.c.l.b16 %v3141
          %v3154 = vunpack.c.l.b16 %v3142
          %v3155 = vunpack.c.l.b16 %v3143
          %v3156 = vpack.c.b16 %v3153, %v3152
          %v3157 = vpack.c.b16 %v3155, %v3154
          %v3161 = vsel %vm903, %v3139, 0
          %3163 = vmatpush.bf16.msra.mxu0 0
          %3164 = vmatpush.bf16.msra.mxu0 0
          %3165 = vmatpush.bf16.msra.mxu0 0
          %3166 = vmatpush.bf16.msra.mxu0 0
          %3167 = vmatpush.bf16.msra.mxu0 0
          %3168 = vmatpush.bf16.msra.mxu0 0
          %3169 = vmatpush.bf16.msra.mxu0 %v3157
          %3170 = vmatpush.bf16.msra.mxu0 %v3156
          %3171 = vmatmul.bf16.gmra.mxu0 %v3161
          %v3172 = vpop.f32.mrf.mxu0
          %v3173 = vadd.f32 %v3146, %v3172
          %v3174 = vpop.f32.mrf.mxu0
          %v3175 = vadd.f32 %v3146, %v3174
          %3176 = vdwg.mxu0
          %vm3177 = vcmask 64512
          %v3178 = vsel %vm3177, %v3173, -inf
          %v3179 = vrot.slane %v3178, 4
          %v3180 = vmax.f32 %v3178, %v3179
          %v3181 = vrot.slane %v3180, 2
          %v3182 = vmax.f32 %v3180, %v3181
          %v3183 = vrot.slane %v3182, 1
          %v3184 = vmax.f32 %v3182, %v3183
          %v3185 = vsel %vm3177, %v3175, -inf
          %v3186 = vrot.slane %v3185, 4
          %v3187 = vmax.f32 %v3185, %v3186
          %v3188 = vrot.slane %v3187, 2
          %v3189 = vmax.f32 %v3187, %v3188
          %v3190 = vrot.slane %v3189, 1
          %v3191 = vmax.f32 %v3189, %v3190
          %vm3192 = vcmask 1040384
          %v3193 = vsel %vm3192, %v3184, %v3191
          %vm3194 = vcmask 58368
          %3195 = vst.msk [vmem:[#allocation3] sm:$0x3] %vm3194, %v3193
        $region104: #{transformer_model_forward.3} parent=95 // pred_fallthru
          _
        // Predicated region
        $region105: #{transformer_model_forward.3} parent=95 // pred_check
          %p3196 = pneg %p523
        $region106: #{transformer_model_forward.3} parent=95 // pred_check_branch
          %3198 = sbr.rel (%p3196) target = $region108
        $region107: #{transformer_model_forward.3} parent=95 // pred_region
          %3200 = vsyncadd [#allocation4], 0
          %s3202 = sshll.u32 [#allocation3], 4
          %s3203 = int_to_ptr.vmem [resolvable:$true] %s3202
          %s3204 = sshll.u32 %s19, 4
          %s3205 = int_to_ptr.hbm [resolvable:$true] %s3204
          %3207 = dma.vmem_to_hbm [thread:$0]  %s3203, 32, %s3205, [#allocation4]
        $region108: #{transformer_model_forward.3} parent=95 // pred_fallthru
          _
        // Predicated region
        $region109: #{transformer_model_forward.3} parent=95 // pred_check
          %p3208 = pneg %p523
        $region110: #{transformer_model_forward.3} parent=95 // pred_check_branch
          %3210 = sbr.rel (%p3208) target = $region112
        $region111: #{transformer_model_forward.3} parent=95 // pred_region
          %3212 = dma.done [#allocation4], 32
        $region112: #{transformer_model_forward.3} parent=95 // pred_fallthru
          _
      $region96: #{transformer_model_forward.3} parent=5 // pred_fallthru
        _
      %p3213 = scmp.le.s32.totalorder 2, %s26
      // Predicated region
      $region113: #{transformer_model_forward.3} parent=5 // pred_check
        %p3214 = pneg %p3213
      $region114: #{transformer_model_forward.3} parent=5 // pred_check_branch
        %3216 = sbr.rel (%p3214) target = $region116
      $region115: #{transformer_model_forward.3} parent=5 // pred_region
        %s3217 = ssub.s32 %s26, 2
      $region116: #{transformer_model_forward.3} parent=5 // pred_fallthru
        _
    $region6: #{transformer_model_forward.3} parent=1 // loop_footer
      %s30 = sadd.s32 1, %s26
    $region7: #{transformer_model_forward.3} parent=1 // loop_footer_branch
      %25 = sbr.rel target = $region3
    $region8: #{transformer_model_forward.3} parent=1 // loop_exit
      _
    %3218 = vsyncpa [#allocation4], 1
    %s3219 = scalar_lea.sflag [#allocation4], 1
    %3220 = vsyncpa %s3219, 1

</llo_original>
